<compile_context>
chip_gen: v7x
topology: tpu7x:2x2x1
jax: 0.10.0
libtpu: 0.0.40
codegen_flags: <defaults>
</compile_context>

<pallas_src>
import math

import jax
import jax.numpy as jnp
from jax.experimental import pallas as pl
from jax.experimental.pallas import tpu as pltpu


NL_PAD = 128          # label dim padded to full lane width (lane-dense stores)
NEG = -1e30           # finite "-inf" for padded CRF lanes (exp(NEG) == 0)
CRF_ST = 8            # CRF time-chunk (sublane-aligned)


# ----------------------------------------------------------------------------
# Device-dependent tiling choices (VMEM limit / batch block size).
# ----------------------------------------------------------------------------
def _device_tuning(B):
    vmem_cap = None
    try:
        vmem_cap = int(pltpu.get_tpu_info().vmem_capacity_bytes)
    except Exception:
        vmem_cap = None
    kind = ""
    try:
        kind = jax.devices()[0].device_kind.lower()
    except Exception:
        pass

    if vmem_cap is not None:
        vmem = min(100 * 1024 * 1024, int(vmem_cap * 0.8))
    elif "v7" in kind:
        vmem = 52 * 1024 * 1024          # v7x: only 64 MiB physical VMEM
    else:
        vmem = 96 * 1024 * 1024          # v5e / v6e: 128 MiB physical VMEM

    small_vmem = ("v7" in kind) or (vmem_cap is not None
                                    and vmem_cap <= 64 * 1024 * 1024)
    bt_cap = 4 if small_vmem else 8
    bt = 1
    for c in range(1, min(B, bt_cap) + 1):
        if B % c == 0:
            bt = c
    return bt, vmem


# ----------------------------------------------------------------------------
# Encoder + fc kernel (transformer hot path), Bt sequences per grid step.
# ----------------------------------------------------------------------------
def make_encoder_call(B, S, H, NH, L, F, Bt, vmem_limit):
    DH = H // NH
    NLP = NL_PAD
    BS = Bt * S

    def layer_norm(x, g, b):
        mu = jnp.mean(x, axis=-1, keepdims=True)
        var = jnp.mean((x - mu) ** 2, axis=-1, keepdims=True)
        return (x - mu) * jax.lax.rsqrt(var + 1e-5) * g + b

    def kernel(x_ref, amask_ref,
               embg_ref, embb_ref,
               wqkv_ref, bqkv_ref,
               wao_ref, bao_ref,
               ln1g_ref, ln1b_ref,
               wff1_ref, bff1_ref,
               wff2_ref, bff2_ref,
               ln2g_ref, ln2b_ref,
               wfc_ref, bfc_ref,
               out_ref, x_scr):
        l = pl.program_id(1)

        @pl.when(l == 0)
        def _():
            xin = x_ref[...].reshape(BS, H)
            x_scr[...] = layer_norm(xin, embg_ref[...], embb_ref[...])

        x = x_scr[...]                                        # (BS, H) f32
        x_bf = x.astype(jnp.bfloat16)

        # ---- self-attention: bf16 MXU matmuls, f32 softmax / LayerNorm ----
        # (1/sqrt(DH) already folded into the Q columns of w_qkv/b_qkv)
        qkv = (jnp.dot(x_bf, wqkv_ref[0],
                       preferred_element_type=jnp.float32) + bqkv_ref[0])

        ctx_rows = []
        for bi in range(Bt):                                  # static batch loop
            r0 = bi * S
            q_b = qkv[r0:r0 + S, 0:H].astype(jnp.bfloat16)
            k_b = qkv[r0:r0 + S, H:2 * H].astype(jnp.bfloat16)
            v_b = qkv[r0:r0 + S, 2 * H:3 * H].astype(jnp.bfloat16)
            madd = jnp.broadcast_to(amask_ref[bi], (S, S))    # additive mask
            heads = []
            for h in range(NH):                               # static head loop
                sl = slice(h * DH, (h + 1) * DH)
                s = jax.lax.dot_general(
                    q_b[:, sl], k_b[:, sl], (((1,), (1,)), ((), ())),
                    preferred_element_type=jnp.float32) + madd
                s = s - jnp.max(s, axis=-1, keepdims=True)
                p = jnp.exp(s)
                p = p * pl.reciprocal(jnp.sum(p, axis=-1, keepdims=True),
                                      approx=True)
                heads.append(jnp.dot(p.astype(jnp.bfloat16), v_b[:, sl],
                                     preferred_element_type=jnp.float32))
            ctx_rows.append(jnp.concatenate(heads, axis=-1))  # (S, H) f32
        ctx = jnp.concatenate(ctx_rows, axis=0).astype(jnp.bfloat16)  # (BS, H)

        # fused output projection: single K = H matmul (full MXU depth)
        attn = (jnp.dot(ctx, wao_ref[0],
                        preferred_element_type=jnp.float32) + bao_ref[0])
        x = layer_norm(x + attn, ln1g_ref[0], ln1b_ref[0])

        # ---- FFN ----
        hmid = (jnp.dot(x.astype(jnp.bfloat16), wff1_ref[0],
                        preferred_element_type=jnp.float32) + bff1_ref[0])
        # TODO(synk): HF RoBERTa uses exact erf-GELU; tanh approximation here.
        hmid = jax.nn.gelu(hmid, approximate=True)
        ffn = (jnp.dot(hmid.astype(jnp.bfloat16), wff2_ref[0],
                       preferred_element_type=jnp.float32) + bff2_ref[0])
        x = layer_norm(x + ffn, ln2g_ref[0], ln2b_ref[0])
        x_scr[...] = x

        @pl.when(l == L - 1)
        def _():
            # lane-dense emission write (NLP = 128)
            em = (jnp.dot(x.astype(jnp.bfloat16), wfc_ref[...],
                          preferred_element_type=jnp.float32) + bfc_ref[...])
            out_ref[...] = em.reshape(Bt, S, NLP)

    def const2(shape):
        return pl.BlockSpec(shape, lambda b, l: (0, 0))

    def per_layer(shape):           # (L, d1, d2) -> block (1, d1, d2) at layer l
        return pl.BlockSpec((1,) + tuple(shape[1:]), lambda b, l: (l, 0, 0))

    in_specs = [
        pl.BlockSpec((Bt, S, H), lambda b, l: (b, 0, 0)),     # embeddings
        pl.BlockSpec((Bt, 1, S), lambda b, l: (b, 0, 0)),     # additive mask
        const2((1, H)), const2((1, H)),                       # emb LayerNorm
        per_layer((L, H, 3 * H)), per_layer((L, 1, 3 * H)),   # QKV
        per_layer((L, H, H)), per_layer((L, 1, H)),           # attn out proj
        per_layer((L, 1, H)), per_layer((L, 1, H)),           # LN1
        per_layer((L, H, F)), per_layer((L, 1, F)),           # FFN in
        per_layer((L, F, H)), per_layer((L, 1, H)),           # FFN out
        per_layer((L, 1, H)), per_layer((L, 1, H)),           # LN2
        const2((H, NLP)), const2((1, NLP)),                   # fc (padded)
    ]
    out_specs = pl.BlockSpec((Bt, S, NLP), lambda b, l: (b, 0, 0))

    flops = int(2 * B * L * (S * H * 3 * H + 2 * S * S * H + S * H * H
                             + 2 * S * H * F) + 2 * B * S * H * NLP)
    transcendentals = int(B * L * (NH * S * S + S * F))
    bytes_accessed = int(
        (B // Bt) * 2 * L * (4 * H * H + 2 * H * F)           # streamed weights
        + 2 * H * NLP + 4 * (L * (6 * H + F) + 2 * H + NLP)   # fc / biases / LN
        + 4 * B * S * (H + 1 + NLP))                          # activations

    return pl.pallas_call(
        kernel,
        grid=(B // Bt, L),
        in_specs=in_specs,
        out_specs=out_specs,
        out_shape=jax.ShapeDtypeStruct((B, S, NLP), jnp.float32),
        scratch_shapes=[pltpu.VMEM((BS, H), jnp.float32)],
        compiler_params=pltpu.CompilerParams(
            dimension_semantics=("parallel", "arbitrary"),
            vmem_limit_bytes=vmem_limit),
        cost_estimate=pl.CostEstimate(flops=flops,
                                      transcendentals=transcendentals,
                                      bytes_accessed=bytes_accessed),
    )


# ----------------------------------------------------------------------------
# CRF partition function log Z (denominator) kernel, batch-vectorized.
# Time-chunked streaming grid; exp-domain MXU recursion.
# Inputs: emissions (B, S, NLP) batch-major (direct encoder output),
#         mask (S, B, 1) time-major, start/end (1, NLP) padded with NEG,
#         exp(trans) (NLP, NLP) with padded lanes == 0.
# Output: log Z per batch element, shape (B, 1).
# ----------------------------------------------------------------------------
def make_crf_logz_call(B, S, ST=CRF_ST):
    NLP = NL_PAD
    assert S % ST == 0
    n_chunks = S // ST

    def kernel(em_ref, mask_ref, start_ref, end_ref, expt_ref, out_ref,
               alpha_scr):
        c = pl.program_id(0)
        expt = expt_ref[...]                               # (NLP, NLP) f32

        def recurse(alpha, em_t):
            amax = jnp.max(alpha, axis=-1, keepdims=True)  # (B, 1)
            ea = jnp.exp(alpha - amax)                     # (B, NLP)
            summ = jnp.dot(ea, expt, preferred_element_type=jnp.float32)
            return em_t + amax + jnp.log(summ)             # padded lanes -> -inf

        def masked_step(em_t, m_t):
            alpha = alpha_scr[...]
            alpha_scr[...] = jnp.where(m_t > 0.0, recurse(alpha, em_t), alpha)

        for tt in range(ST):                               # static 8-step unroll
            em_t = em_ref[:, tt, :]                        # (B, NLP)
            m_t = mask_ref[tt]                             # (B, 1)
            if tt == 0:
                @pl.when(c == 0)
                def _():
                    # torchcrf requires mask[:, 0] to be all ones
                    alpha_scr[...] = start_ref[...] + em_t

                @pl.when(c > 0)
                def _():
                    masked_step(em_t, m_t)
            else:
                masked_step(em_t, m_t)

        @pl.when(c == n_chunks - 1)
        def _():
            fin = alpha_scr[...] + end_ref[...]            # (B, NLP)
            fmax = jnp.max(fin, axis=-1, keepdims=True)
            out_ref[...] = fmax + jnp.log(
                jnp.sum(jnp.exp(fin - fmax), axis=-1, keepdims=True))

    flops = int(2 * B * S * NLP * NLP + 6 * B * S * NLP)
    transcendentals = int(2 * B * S * NLP)
    bytes_accessed = int(4 * (B * S * NLP + S * B + NLP * NLP + 2 * NLP + B))

    return pl.pallas_call(
        kernel,
        grid=(n_chunks,),
        in_specs=[
            pl.BlockSpec((B, ST, NLP), lambda c: (0, c, 0)),
            pl.BlockSpec((ST, B, 1), lambda c: (c, 0, 0)),
            pl.BlockSpec((1, NLP), lambda c: (0, 0)),
            pl.BlockSpec((1, NLP), lambda c: (0, 0)),
            pl.BlockSpec((NLP, NLP), lambda c: (0, 0)),
        ],
        out_specs=pl.BlockSpec((B, 1), lambda c: (0, 0)),
        out_shape=jax.ShapeDtypeStruct((B, 1), jnp.float32),
        scratch_shapes=[pltpu.VMEM((B, NLP), jnp.float32)],
        compiler_params=pltpu.CompilerParams(
            dimension_semantics=("arbitrary",)),
        cost_estimate=pl.CostEstimate(flops=flops,
                                      transcendentals=transcendentals,
                                      bytes_accessed=bytes_accessed),
    )


# ----------------------------------------------------------------------------
# Parameter init (deterministic, synthetic "roberta-base"-shaped mini model)
# ----------------------------------------------------------------------------
def init_params(key, vocab, max_pos, type_vocab, H, L, F, NL):
    ks = jax.random.split(key, 12)

    def w(k, shape, std=0.02):
        return (jax.random.normal(k, shape) * std).astype(jnp.float32)

    f32 = jnp.float32
    return {
        "word_emb": w(ks[0], (vocab, H)),
        "pos_emb": w(ks[1], (max_pos, H)),
        "type_emb": w(ks[2], (type_vocab, H)),
        "emb_ln_g": jnp.ones((1, H), f32),
        "emb_ln_b": jnp.zeros((1, H), f32),
        "w_qkv": w(ks[3], (L, H, 3 * H)),
        "b_qkv": jnp.zeros((L, 1, 3 * H), f32),
        "w_ao": w(ks[4], (L, H, H)),
        "b_ao": jnp.zeros((L, 1, H), f32),
        "ln1_g": jnp.ones((L, 1, H), f32),
        "ln1_b": jnp.zeros((L, 1, H), f32),
        "w_ff1": w(ks[5], (L, H, F)),
        "b_ff1": jnp.zeros((L, 1, F), f32),
        "w_ff2": w(ks[6], (L, F, H)),
        "b_ff2": jnp.zeros((L, 1, H), f32),
        "ln2_g": jnp.ones((L, 1, H), f32),
        "ln2_b": jnp.zeros((L, 1, H), f32),
        "w_fc": w(ks[7], (H, NL)),
        "b_fc": jnp.zeros((1, NL), f32),
        # CRF params (torchcrf init: uniform(-0.1, 0.1))
        "crf_start": jax.random.uniform(ks[8], (1, NL), f32, -0.1, 0.1),
        "crf_end": jax.random.uniform(ks[9], (1, NL), f32, -0.1, 0.1),
        "crf_trans": jax.random.uniform(ks[10], (NL, NL), f32, -0.1, 0.1),
    }


# ----------------------------------------------------------------------------
# One-time weight preparation: bf16 casts, Q-scale folding, padded fc,
# padded / exponentiated CRF tensors.  Done OUTSIDE the per-call forward.
# ----------------------------------------------------------------------------
def prepare_params(params, num_heads):
    H = params["w_qkv"].shape[1]
    NL = params["w_fc"].shape[1]
    NLP = NL_PAD
    DH = H // num_heads
    scale = 1.0 / math.sqrt(DH)
    bf16 = jnp.bfloat16
    f32 = jnp.float32

    # fold 1/sqrt(DH) into the Q columns of the QKV projection
    w_qkv = params["w_qkv"].at[:, :, :H].multiply(scale)
    b_qkv = params["b_qkv"].at[:, :, :H].multiply(scale)

    w_fc = jnp.zeros((H, NLP), f32).at[:, :NL].set(params["w_fc"])
    b_fc = jnp.zeros((1, NLP), f32).at[:, :NL].set(params["b_fc"])

    start_p = jnp.full((1, NLP), NEG, f32).at[:, :NL].set(params["crf_start"])
    end_p = jnp.full((1, NLP), NEG, f32).at[:, :NL].set(params["crf_end"])
    trans_p = jnp.full((NLP, NLP), NEG, f32).at[:NL, :NL].set(params["crf_trans"])
    exp_trans = jnp.exp(trans_p)     # padded lanes: exp(-1e30) == 0 exactly

    prep = {
        "num_heads": num_heads,
        "num_labels": NL,
        "word_emb": params["word_emb"],
        "pos_emb": params["pos_emb"],
        "type_emb": params["type_emb"],
        "emb_ln_g": params["emb_ln_g"], "emb_ln_b": params["emb_ln_b"],
        "w_qkv": w_qkv.astype(bf16), "b_qkv": b_qkv,
        "w_ao": params["w_ao"].astype(bf16), "b_ao": params["b_ao"],
        "ln1_g": params["ln1_g"], "ln1_b": params["ln1_b"],
        "w_ff1": params["w_ff1"].astype(bf16), "b_ff1": params["b_ff1"],
        "w_ff2": params["w_ff2"].astype(bf16), "b_ff2": params["b_ff2"],
        "ln2_g": params["ln2_g"], "ln2_b": params["ln2_b"],
        "w_fc": w_fc.astype(bf16), "b_fc": b_fc,
        "crf_start_p": start_p, "crf_end_p": end_p, "crf_exp_trans": exp_trans,
        # unpadded CRF params for the gold-path numerator (plain-JAX gathers)
        "crf_start": params["crf_start"],
        "crf_end": params["crf_end"],
        "crf_trans": params["crf_trans"],
    }
    return prep


# ----------------------------------------------------------------------------
# Forward pass (mirrors RobertaCRF.forward)
# ----------------------------------------------------------------------------
def roberta_crf_forward(prep, input_ids, token_type_ids, attention_mask,
                        labels=None):
    B, S = input_ids.shape
    NH = prep["num_heads"]
    NL = prep["num_labels"]
    L, H, _ = prep["w_qkv"].shape
    F = prep["w_ff1"].shape[2]
    NLP = NL_PAD

    # --- embeddings (glue: gathers) ---
    mask_i = attention_mask.astype(jnp.int32)
    # RoBERTa position ids: padding_idx=1, positions = cumsum(mask)*mask + 1
    pos_ids = jnp.cumsum(mask_i, axis=1) * mask_i + 1
    x_emb = (prep["word_emb"][input_ids]
             + prep["pos_emb"][pos_ids]
             + prep["type_emb"][token_type_ids]).astype(jnp.float32)

    mask_f = mask_i.astype(jnp.float32)
    mask_add = (1.0 - mask_f)[:, None, :] * -1e9                # (B, 1, S)

    Bt, vmem_limit = _device_tuning(B)
    encoder = make_encoder_call(B, S, H, NH, L, F, Bt, vmem_limit)
    emissions_p = encoder(
        x_emb, mask_add,
        prep["emb_ln_g"], prep["emb_ln_b"],
        prep["w_qkv"], prep["b_qkv"],
        prep["w_ao"], prep["b_ao"],
        prep["ln1_g"], prep["ln1_b"],
        prep["w_ff1"], prep["b_ff1"],
        prep["w_ff2"], prep["b_ff2"],
        prep["ln2_g"], prep["ln2_b"],
        prep["w_fc"], prep["b_fc"],
    )                                                           # (B, S, 128)
    logits = emissions_p[..., :NL]
    # nn.Dropout in eval mode == identity (TODO(synk): train-mode dropout not modeled)

    if labels is not None:
        labels = labels[:, :S]

        # --- denominator log Z via Pallas kernel (time-chunked streaming) ---
        S_pad = ((S + CRF_ST - 1) // CRF_ST) * CRF_ST
        em_crf, mask_crf = emissions_p, mask_f
        if S_pad != S:
            em_crf = jnp.pad(em_crf, ((0, 0), (0, S_pad - S), (0, 0)))
            mask_crf = jnp.pad(mask_crf, ((0, 0), (0, S_pad - S)))
        mask_t = jnp.transpose(mask_crf, (1, 0))[:, :, None]    # (S_pad, B, 1)

        crf_logz = make_crf_logz_call(B, S_pad, CRF_ST)
        log_z = crf_logz(em_crf, mask_t, prep["crf_start_p"],
                         prep["crf_end_p"], prep["crf_exp_trans"])[:, 0]  # (B,)

        # --- gold-path numerator: plain-JAX gathers (no one-hot tensors) ---
        em_gold = jnp.take_along_axis(logits, labels[..., None], axis=-1)[..., 0]
        tr_gold = prep["crf_trans"][labels[:, :-1], labels[:, 1:]]   # (B, S-1)
        score = prep["crf_start"][0, labels[:, 0]] + em_gold[:, 0]
        score = score + jnp.sum((tr_gold + em_gold[:, 1:]) * mask_f[:, 1:],
                                axis=1)
        seq_len = jnp.sum(mask_f, axis=1).astype(jnp.int32)
        last_tag = jnp.take_along_axis(labels, (seq_len - 1)[:, None],
                                       axis=1)[:, 0]
        score = score + prep["crf_end"][0, last_tag]

        loss = jnp.mean(log_z - score)        # -mean CRF log-likelihood
        return {"loss": loss, "logits": logits,
                "hidden_states": None, "attentions": None}
    else:
        # TODO(synk): CRF Viterbi decode (variable-length lists + pad_sequence)
        # not implemented as a Pallas kernel; per-position argmax returned.
        preds = jnp.argmax(logits, axis=-1)
        return {"logits": logits, "predictions": preds,
                "hidden_states": None, "attentions": None}


# ----------------------------------------------------------------------------
if __name__ == "__main__":
    B, S, H, NH, L, F, NL = 2, 8, 32, 4, 2, 64, 5
    VOCAB, MAXPOS, TYPEV = 50, S + 4, 2

    key = jax.random.PRNGKey(0)
    k_params, k_data = jax.random.split(key)
    params = init_params(k_params, VOCAB, MAXPOS, TYPEV, H, L, F, NL)
    prep = prepare_params(params, num_heads=NH)

    k1, k2 = jax.random.split(k_data)
    input_ids = jax.random.randint(k1, (B, S), 0, VOCAB, dtype=jnp.int32)
    token_type_ids = jnp.zeros((B, S), jnp.int32)
    attention_mask = jnp.array([[1, 1, 1, 1, 1, 1, 1, 1],
                                [1, 1, 1, 1, 1, 0, 0, 0]], jnp.int32)
    labels = jax.random.randint(k2, (B, S), 0, NL, dtype=jnp.int32)

    out = roberta_crf_forward(prep, input_ids, token_type_ids,
                              attention_mask, labels=labels)
    jax.block_until_ready(out["loss"])
    jax.block_until_ready(out["logits"])

    # also exercise the no-labels branch
    out2 = roberta_crf_forward(prep, input_ids, token_type_ids,
                               attention_mask, labels=None)
    jax.block_until_ready(out2["predictions"])

    print("KERNEL_OK")
</pallas_src>

<mosaic_0001>
module attributes {stable_mosaic.version = 11 : i64} {
  func.func @kernel(%arg0: i32, %arg1: i32, %arg2: memref<2x8x32xf32, #tpu.memory_space<vmem>>, %arg3: memref<2x1x8xf32, #tpu.memory_space<vmem>>, %arg4: memref<1x32xf32, #tpu.memory_space<vmem>>, %arg5: memref<1x32xf32, #tpu.memory_space<vmem>>, %arg6: memref<1x32x96xbf16, #tpu.memory_space<vmem>>, %arg7: memref<1x1x96xf32, #tpu.memory_space<vmem>>, %arg8: memref<1x32x32xbf16, #tpu.memory_space<vmem>>, %arg9: memref<1x1x32xf32, #tpu.memory_space<vmem>>, %arg10: memref<1x1x32xf32, #tpu.memory_space<vmem>>, %arg11: memref<1x1x32xf32, #tpu.memory_space<vmem>>, %arg12: memref<1x32x64xbf16, #tpu.memory_space<vmem>>, %arg13: memref<1x1x64xf32, #tpu.memory_space<vmem>>, %arg14: memref<1x64x32xbf16, #tpu.memory_space<vmem>>, %arg15: memref<1x1x32xf32, #tpu.memory_space<vmem>>, %arg16: memref<1x1x32xf32, #tpu.memory_space<vmem>>, %arg17: memref<1x1x32xf32, #tpu.memory_space<vmem>>, %arg18: memref<32x128xbf16, #tpu.memory_space<vmem>>, %arg19: memref<1x128xf32, #tpu.memory_space<vmem>>, %arg20: memref<2x8x128xf32, #tpu.memory_space<vmem>>, %arg21: memref<16x32xf32, #tpu.memory_space<vmem>>) attributes {dimension_semantics = [#tpu.dimension_semantics<parallel>, #tpu.dimension_semantics<arbitrary>], iteration_bounds = array<i64: 1, 2>, scalar_prefetch = 0 : i64, scratch_operands = 1 : i64, tpu.core_type = #tpu.core_type<tc>, window_params = [{transform_indices = @transform_0, window_bounds = array<i64: 2, 8, 32>}, {transform_indices = @transform_1, window_bounds = array<i64: 2, 1, 8>}, {pipeline_mode = #tpu.pipeline_mode<synchronous>, transform_indices = @transform_2, window_bounds = array<i64: 1, 32>}, {pipeline_mode = #tpu.pipeline_mode<synchronous>, transform_indices = @transform_3, window_bounds = array<i64: 1, 32>}, {transform_indices = @transform_4, window_bounds = array<i64: 1, 32, 96>}, {transform_indices = @transform_5, window_bounds = array<i64: 1, 1, 96>}, {transform_indices = @transform_6, window_bounds = array<i64: 1, 32, 32>}, {transform_indices = @transform_7, window_bounds = array<i64: 1, 1, 32>}, {transform_indices = @transform_8, window_bounds = array<i64: 1, 1, 32>}, {transform_indices = @transform_9, window_bounds = array<i64: 1, 1, 32>}, {transform_indices = @transform_10, window_bounds = array<i64: 1, 32, 64>}, {transform_indices = @transform_11, window_bounds = array<i64: 1, 1, 64>}, {transform_indices = @transform_12, window_bounds = array<i64: 1, 64, 32>}, {transform_indices = @transform_13, window_bounds = array<i64: 1, 1, 32>}, {transform_indices = @transform_14, window_bounds = array<i64: 1, 1, 32>}, {transform_indices = @transform_15, window_bounds = array<i64: 1, 1, 32>}, {pipeline_mode = #tpu.pipeline_mode<synchronous>, transform_indices = @transform_16, window_bounds = array<i64: 32, 128>}, {pipeline_mode = #tpu.pipeline_mode<synchronous>, transform_indices = @transform_17, window_bounds = array<i64: 1, 128>}, {transform_indices = @transform_18, window_bounds = array<i64: 2, 8, 128>}]} {
    %c0_i32 = arith.constant 0 : i32
    %0 = arith.cmpi eq, %arg1, %c0_i32 : i32
    %1 = arith.extui %0 : i1 to i32
    %c0_i32_0 = arith.constant 0 : i32
    %2 = arith.cmpi ne, %1, %c0_i32_0 : i32
    scf.if %2 {
      %c0_95 = arith.constant 0 : index
      %c0_96 = arith.constant 0 : index
      %c0_97 = arith.constant 0 : index
      %266 = vector.load %arg2[%c0_95, %c0_96, %c0_97] : memref<2x8x32xf32, #tpu.memory_space<vmem>>, vector<2x8x32xf32>
      %267 = vector.shape_cast %266 : vector<2x8x32xf32> to vector<16x32xf32>
      %c0_98 = arith.constant 0 : index
      %c0_99 = arith.constant 0 : index
      %268 = vector.load %arg4[%c0_98, %c0_99] : memref<1x32xf32, #tpu.memory_space<vmem>>, vector<1x32xf32>
      %c0_100 = arith.constant 0 : index
      %c0_101 = arith.constant 0 : index
      %269 = vector.load %arg5[%c0_100, %c0_101] : memref<1x32xf32, #tpu.memory_space<vmem>>, vector<1x32xf32>
      %cst_102 = arith.constant dense<0.000000e+00> : vector<16xf32>
      %270 = vector.multi_reduction <add>, %267, %cst_102 [1] : vector<16x32xf32> to vector<16xf32>
      %271 = vector.shape_cast %270 : vector<16xf32> to vector<16x1xf32>
      %cst_103 = arith.constant 3.200000e+01 : f32
      %272 = vector.broadcast %cst_103 : f32 to vector<16x1xf32>
      %273 = arith.divf %271, %272 : vector<16x1xf32>
      %274 = vector.broadcast %273 : vector<16x1xf32> to vector<16x32xf32>
      %275 = arith.subf %267, %274 : vector<16x32xf32>
      %276 = arith.mulf %275, %275 : vector<16x32xf32>
      %cst_104 = arith.constant dense<0.000000e+00> : vector<16xf32>
      %277 = vector.multi_reduction <add>, %276, %cst_104 [1] : vector<16x32xf32> to vector<16xf32>
      %278 = vector.shape_cast %277 : vector<16xf32> to vector<16x1xf32>
      %cst_105 = arith.constant 3.200000e+01 : f32
      %279 = vector.broadcast %cst_105 : f32 to vector<16x1xf32>
      %280 = arith.divf %278, %279 : vector<16x1xf32>
      %281 = vector.broadcast %273 : vector<16x1xf32> to vector<16x32xf32>
      %282 = arith.subf %267, %281 : vector<16x32xf32>
      %cst_106 = arith.constant 9.99999974E-6 : f32
      %283 = vector.broadcast %cst_106 : f32 to vector<16x1xf32>
      %284 = arith.addf %280, %283 : vector<16x1xf32>
      %285 = math.rsqrt %284 : vector<16x1xf32>
      %286 = vector.broadcast %285 : vector<16x1xf32> to vector<16x32xf32>
      %287 = arith.mulf %282, %286 : vector<16x32xf32>
      %288 = vector.broadcast %268 : vector<1x32xf32> to vector<16x32xf32>
      %289 = arith.mulf %287, %288 : vector<16x32xf32>
      %290 = vector.broadcast %269 : vector<1x32xf32> to vector<16x32xf32>
      %291 = arith.addf %289, %290 : vector<16x32xf32>
      %c0_107 = arith.constant 0 : index
      %c0_108 = arith.constant 0 : index
      %292 = vector.load %arg21[%c0_107, %c0_108] : memref<16x32xf32, #tpu.memory_space<vmem>>, vector<16x32xf32>
      tpu.vector_store %arg21[%c0_107, %c0_108], %291 {strides = array<i32>} : memref<16x32xf32, #tpu.memory_space<vmem>>, vector<16x32xf32>,
    } else {
    }
    %c0 = arith.constant 0 : index
    %c0_1 = arith.constant 0 : index
    %3 = vector.load %arg21[%c0, %c0_1] : memref<16x32xf32, #tpu.memory_space<vmem>>, vector<16x32xf32>
    %4 = arith.truncf %3 : vector<16x32xf32> to vector<16x32xbf16>
    %c0_2 = arith.constant 0 : index
    %c0_3 = arith.constant 0 : index
    %c0_4 = arith.constant 0 : index
    %5 = vector.load %arg6[%c0_2, %c0_3, %c0_4] : memref<1x32x96xbf16, #tpu.memory_space<vmem>>, vector<1x32x96xbf16>
    %6 = vector.shape_cast %5 : vector<1x32x96xbf16> to vector<32x96xbf16>
    %cst = arith.constant dense<0.000000e+00> : vector<16x96xf32>
    %7 = tpu.matmul %4, %6, %cst {dimension_numbers = #tpu.dot_dimension_numbers<[1], [0], [0], [1], [0, 0, 1, 1], [], []>} : vector<16x32xbf16>, vector<32x96xbf16>, vector<16x96xf32> -> vector<16x96xf32>
    %c0_5 = arith.constant 0 : index
    %c0_6 = arith.constant 0 : index
    %c0_7 = arith.constant 0 : index
    %8 = vector.load %arg7[%c0_5, %c0_6, %c0_7] : memref<1x1x96xf32, #tpu.memory_space<vmem>>, vector<1x1x96xf32>
    %9 = vector.shape_cast %8 : vector<1x1x96xf32> to vector<1x96xf32>
    %10 = vector.broadcast %9 : vector<1x96xf32> to vector<16x96xf32>
    %11 = arith.addf %7, %10 : vector<16x96xf32>
    %12 = vector.extract_strided_slice %11 {offsets = [0, 0], sizes = [8, 32], strides = [1, 1]} : vector<16x96xf32> to vector<8x32xf32>
    %13 = arith.truncf %12 : vector<8x32xf32> to vector<8x32xbf16>
    %14 = vector.extract_strided_slice %11 {offsets = [0, 32], sizes = [8, 32], strides = [1, 1]} : vector<16x96xf32> to vector<8x32xf32>
    %15 = arith.truncf %14 : vector<8x32xf32> to vector<8x32xbf16>
    %16 = vector.extract_strided_slice %11 {offsets = [0, 64], sizes = [8, 32], strides = [1, 1]} : vector<16x96xf32> to vector<8x32xf32>
    %17 = arith.truncf %16 : vector<8x32xf32> to vector<8x32xbf16>
    %c0_8 = arith.constant 0 : index
    %c0_9 = arith.constant 0 : index
    %c0_10 = arith.constant 0 : index
    %18 = vector.load %arg3[%c0_8, %c0_9, %c0_10] : memref<2x1x8xf32, #tpu.memory_space<vmem>>, vector<1x1x8xf32>
    %19 = vector.shape_cast %18 : vector<1x1x8xf32> to vector<1x8xf32>
    %20 = vector.shape_cast %19 : vector<1x8xf32> to vector<1x8xf32>
    %21 = vector.broadcast %20 : vector<1x8xf32> to vector<8x8xf32>
    %22 = vector.extract_strided_slice %13 {offsets = [0, 0], sizes = [8, 8], strides = [1, 1]} : vector<8x32xbf16> to vector<8x8xbf16>
    %23 = vector.extract_strided_slice %15 {offsets = [0, 0], sizes = [8, 8], strides = [1, 1]} : vector<8x32xbf16> to vector<8x8xbf16>
    %cst_11 = arith.constant dense<0.000000e+00> : vector<8x8xf32>
    %24 = tpu.matmul %22, %23, %cst_11 {dimension_numbers = #tpu.dot_dimension_numbers<[1], [1], [0], [0], [0, 0, 1, 0], [], []>} : vector<8x8xbf16>, vector<8x8xbf16>, vector<8x8xf32> -> vector<8x8xf32>
    %25 = arith.addf %24, %21 : vector<8x8xf32>
    %cst_12 = arith.constant dense<0xFF800000> : vector<8xf32>
    %26 = vector.multi_reduction <maximumf>, %25, %cst_12 [1] : vector<8x8xf32> to vector<8xf32>
    %27 = vector.shape_cast %26 : vector<8xf32> to vector<8x1xf32>
    %28 = vector.broadcast %27 : vector<8x1xf32> to vector<8x8xf32>
    %29 = arith.subf %25, %28 : vector<8x8xf32>
    %30 = math.exp %29 : vector<8x8xf32>
    %cst_13 = arith.constant dense<0.000000e+00> : vector<8xf32>
    %31 = vector.multi_reduction <add>, %30, %cst_13 [1] : vector<8x8xf32> to vector<8xf32>
    %32 = vector.shape_cast %31 : vector<8xf32> to vector<8x1xf32>
    %33 = tpu.reciprocal %32 {approx = true} : vector<8x1xf32> -> vector<8x1xf32>
    %34 = vector.broadcast %33 : vector<8x1xf32> to vector<8x8xf32>
    %35 = arith.mulf %30, %34 : vector<8x8xf32>
    %36 = arith.truncf %35 : vector<8x8xf32> to vector<8x8xbf16>
    %37 = vector.extract_strided_slice %17 {offsets = [0, 0], sizes = [8, 8], strides = [1, 1]} : vector<8x32xbf16> to vector<8x8xbf16>
    %cst_14 = arith.constant dense<0.000000e+00> : vector<8x8xf32>
    %38 = tpu.matmul %36, %37, %cst_14 {dimension_numbers = #tpu.dot_dimension_numbers<[1], [0], [0], [1], [0, 0, 1, 1], [], []>} : vector<8x8xbf16>, vector<8x8xbf16>, vector<8x8xf32> -> vector<8x8xf32>
    %39 = vector.extract_strided_slice %13 {offsets = [0, 8], sizes = [8, 8], strides = [1, 1]} : vector<8x32xbf16> to vector<8x8xbf16>
    %40 = vector.extract_strided_slice %15 {offsets = [0, 8], sizes = [8, 8], strides = [1, 1]} : vector<8x32xbf16> to vector<8x8xbf16>
    %cst_15 = arith.constant dense<0.000000e+00> : vector<8x8xf32>
    %41 = tpu.matmul %39, %40, %cst_15 {dimension_numbers = #tpu.dot_dimension_numbers<[1], [1], [0], [0], [0, 0, 1, 0], [], []>} : vector<8x8xbf16>, vector<8x8xbf16>, vector<8x8xf32> -> vector<8x8xf32>
    %42 = arith.addf %41, %21 : vector<8x8xf32>
    %cst_16 = arith.constant dense<0xFF800000> : vector<8xf32>
    %43 = vector.multi_reduction <maximumf>, %42, %cst_16 [1] : vector<8x8xf32> to vector<8xf32>
    %44 = vector.shape_cast %43 : vector<8xf32> to vector<8x1xf32>
    %45 = vector.broadcast %44 : vector<8x1xf32> to vector<8x8xf32>
    %46 = arith.subf %42, %45 : vector<8x8xf32>
    %47 = math.exp %46 : vector<8x8xf32>
    %cst_17 = arith.constant dense<0.000000e+00> : vector<8xf32>
    %48 = vector.multi_reduction <add>, %47, %cst_17 [1] : vector<8x8xf32> to vector<8xf32>
    %49 = vector.shape_cast %48 : vector<8xf32> to vector<8x1xf32>
    %50 = tpu.reciprocal %49 {approx = true} : vector<8x1xf32> -> vector<8x1xf32>
    %51 = vector.broadcast %50 : vector<8x1xf32> to vector<8x8xf32>
    %52 = arith.mulf %47, %51 : vector<8x8xf32>
    %53 = arith.truncf %52 : vector<8x8xf32> to vector<8x8xbf16>
    %54 = vector.extract_strided_slice %17 {offsets = [0, 8], sizes = [8, 8], strides = [1, 1]} : vector<8x32xbf16> to vector<8x8xbf16>
    %cst_18 = arith.constant dense<0.000000e+00> : vector<8x8xf32>
    %55 = tpu.matmul %53, %54, %cst_18 {dimension_numbers = #tpu.dot_dimension_numbers<[1], [0], [0], [1], [0, 0, 1, 1], [], []>} : vector<8x8xbf16>, vector<8x8xbf16>, vector<8x8xf32> -> vector<8x8xf32>
    %56 = vector.extract_strided_slice %13 {offsets = [0, 16], sizes = [8, 8], strides = [1, 1]} : vector<8x32xbf16> to vector<8x8xbf16>
    %57 = vector.extract_strided_slice %15 {offsets = [0, 16], sizes = [8, 8], strides = [1, 1]} : vector<8x32xbf16> to vector<8x8xbf16>
    %cst_19 = arith.constant dense<0.000000e+00> : vector<8x8xf32>
    %58 = tpu.matmul %56, %57, %cst_19 {dimension_numbers = #tpu.dot_dimension_numbers<[1], [1], [0], [0], [0, 0, 1, 0], [], []>} : vector<8x8xbf16>, vector<8x8xbf16>, vector<8x8xf32> -> vector<8x8xf32>
    %59 = arith.addf %58, %21 : vector<8x8xf32>
    %cst_20 = arith.constant dense<0xFF800000> : vector<8xf32>
    %60 = vector.multi_reduction <maximumf>, %59, %cst_20 [1] : vector<8x8xf32> to vector<8xf32>
    %61 = vector.shape_cast %60 : vector<8xf32> to vector<8x1xf32>
    %62 = vector.broadcast %61 : vector<8x1xf32> to vector<8x8xf32>
    %63 = arith.subf %59, %62 : vector<8x8xf32>
    %64 = math.exp %63 : vector<8x8xf32>
    %cst_21 = arith.constant dense<0.000000e+00> : vector<8xf32>
    %65 = vector.multi_reduction <add>, %64, %cst_21 [1] : vector<8x8xf32> to vector<8xf32>
    %66 = vector.shape_cast %65 : vector<8xf32> to vector<8x1xf32>
    %67 = tpu.reciprocal %66 {approx = true} : vector<8x1xf32> -> vector<8x1xf32>
    %68 = vector.broadcast %67 : vector<8x1xf32> to vector<8x8xf32>
    %69 = arith.mulf %64, %68 : vector<8x8xf32>
    %70 = arith.truncf %69 : vector<8x8xf32> to vector<8x8xbf16>
    %71 = vector.extract_strided_slice %17 {offsets = [0, 16], sizes = [8, 8], strides = [1, 1]} : vector<8x32xbf16> to vector<8x8xbf16>
    %cst_22 = arith.constant dense<0.000000e+00> : vector<8x8xf32>
    %72 = tpu.matmul %70, %71, %cst_22 {dimension_numbers = #tpu.dot_dimension_numbers<[1], [0], [0], [1], [0, 0, 1, 1], [], []>} : vector<8x8xbf16>, vector<8x8xbf16>, vector<8x8xf32> -> vector<8x8xf32>
    %73 = vector.extract_strided_slice %13 {offsets = [0, 24], sizes = [8, 8], strides = [1, 1]} : vector<8x32xbf16> to vector<8x8xbf16>
    %74 = vector.extract_strided_slice %15 {offsets = [0, 24], sizes = [8, 8], strides = [1, 1]} : vector<8x32xbf16> to vector<8x8xbf16>
    %cst_23 = arith.constant dense<0.000000e+00> : vector<8x8xf32>
    %75 = tpu.matmul %73, %74, %cst_23 {dimension_numbers = #tpu.dot_dimension_numbers<[1], [1], [0], [0], [0, 0, 1, 0], [], []>} : vector<8x8xbf16>, vector<8x8xbf16>, vector<8x8xf32> -> vector<8x8xf32>
    %76 = arith.addf %75, %21 : vector<8x8xf32>
    %cst_24 = arith.constant dense<0xFF800000> : vector<8xf32>
    %77 = vector.multi_reduction <maximumf>, %76, %cst_24 [1] : vector<8x8xf32> to vector<8xf32>
    %78 = vector.shape_cast %77 : vector<8xf32> to vector<8x1xf32>
    %79 = vector.broadcast %78 : vector<8x1xf32> to vector<8x8xf32>
    %80 = arith.subf %76, %79 : vector<8x8xf32>
    %81 = math.exp %80 : vector<8x8xf32>
    %cst_25 = arith.constant dense<0.000000e+00> : vector<8xf32>
    %82 = vector.multi_reduction <add>, %81, %cst_25 [1] : vector<8x8xf32> to vector<8xf32>
    %83 = vector.shape_cast %82 : vector<8xf32> to vector<8x1xf32>
    %84 = tpu.reciprocal %83 {approx = true} : vector<8x1xf32> -> vector<8x1xf32>
    %85 = vector.broadcast %84 : vector<8x1xf32> to vector<8x8xf32>
    %86 = arith.mulf %81, %85 : vector<8x8xf32>
    %87 = arith.truncf %86 : vector<8x8xf32> to vector<8x8xbf16>
    %88 = vector.extract_strided_slice %17 {offsets = [0, 24], sizes = [8, 8], strides = [1, 1]} : vector<8x32xbf16> to vector<8x8xbf16>
    %cst_26 = arith.constant dense<0.000000e+00> : vector<8x8xf32>
    %89 = tpu.matmul %87, %88, %cst_26 {dimension_numbers = #tpu.dot_dimension_numbers<[1], [0], [0], [1], [0, 0, 1, 1], [], []>} : vector<8x8xbf16>, vector<8x8xbf16>, vector<8x8xf32> -> vector<8x8xf32>
    %90 = tpu.concatenate %38, %55, %72, %89 in 1 : vector<8x8xf32>, vector<8x8xf32>, vector<8x8xf32>, vector<8x8xf32> -> vector<8x32xf32>
    %91 = vector.extract_strided_slice %11 {offsets = [8, 0], sizes = [8, 32], strides = [1, 1]} : vector<16x96xf32> to vector<8x32xf32>
    %92 = arith.truncf %91 : vector<8x32xf32> to vector<8x32xbf16>
    %93 = vector.extract_strided_slice %11 {offsets = [8, 32], sizes = [8, 32], strides = [1, 1]} : vector<16x96xf32> to vector<8x32xf32>
    %94 = arith.truncf %93 : vector<8x32xf32> to vector<8x32xbf16>
    %95 = vector.extract_strided_slice %11 {offsets = [8, 64], sizes = [8, 32], strides = [1, 1]} : vector<16x96xf32> to vector<8x32xf32>
    %96 = arith.truncf %95 : vector<8x32xf32> to vector<8x32xbf16>
    %c1 = arith.constant 1 : index
    %c0_27 = arith.constant 0 : index
    %c0_28 = arith.constant 0 : index
    %97 = vector.load %arg3[%c1, %c0_27, %c0_28] : memref<2x1x8xf32, #tpu.memory_space<vmem>>, vector<1x1x8xf32>
    %98 = vector.shape_cast %97 : vector<1x1x8xf32> to vector<1x8xf32>
    %99 = vector.shape_cast %98 : vector<1x8xf32> to vector<1x8xf32>
    %100 = vector.broadcast %99 : vector<1x8xf32> to vector<8x8xf32>
    %101 = vector.extract_strided_slice %92 {offsets = [0, 0], sizes = [8, 8], strides = [1, 1]} : vector<8x32xbf16> to vector<8x8xbf16>
    %102 = vector.extract_strided_slice %94 {offsets = [0, 0], sizes = [8, 8], strides = [1, 1]} : vector<8x32xbf16> to vector<8x8xbf16>
    %cst_29 = arith.constant dense<0.000000e+00> : vector<8x8xf32>
    %103 = tpu.matmul %101, %102, %cst_29 {dimension_numbers = #tpu.dot_dimension_numbers<[1], [1], [0], [0], [0, 0, 1, 0], [], []>} : vector<8x8xbf16>, vector<8x8xbf16>, vector<8x8xf32> -> vector<8x8xf32>
    %104 = arith.addf %103, %100 : vector<8x8xf32>
    %cst_30 = arith.constant dense<0xFF800000> : vector<8xf32>
    %105 = vector.multi_reduction <maximumf>, %104, %cst_30 [1] : vector<8x8xf32> to vector<8xf32>
    %106 = vector.shape_cast %105 : vector<8xf32> to vector<8x1xf32>
    %107 = vector.broadcast %106 : vector<8x1xf32> to vector<8x8xf32>
    %108 = arith.subf %104, %107 : vector<8x8xf32>
    %109 = math.exp %108 : vector<8x8xf32>
    %cst_31 = arith.constant dense<0.000000e+00> : vector<8xf32>
    %110 = vector.multi_reduction <add>, %109, %cst_31 [1] : vector<8x8xf32> to vector<8xf32>
    %111 = vector.shape_cast %110 : vector<8xf32> to vector<8x1xf32>
    %112 = tpu.reciprocal %111 {approx = true} : vector<8x1xf32> -> vector<8x1xf32>
    %113 = vector.broadcast %112 : vector<8x1xf32> to vector<8x8xf32>
    %114 = arith.mulf %109, %113 : vector<8x8xf32>
    %115 = arith.truncf %114 : vector<8x8xf32> to vector<8x8xbf16>
    %116 = vector.extract_strided_slice %96 {offsets = [0, 0], sizes = [8, 8], strides = [1, 1]} : vector<8x32xbf16> to vector<8x8xbf16>
    %cst_32 = arith.constant dense<0.000000e+00> : vector<8x8xf32>
    %117 = tpu.matmul %115, %116, %cst_32 {dimension_numbers = #tpu.dot_dimension_numbers<[1], [0], [0], [1], [0, 0, 1, 1], [], []>} : vector<8x8xbf16>, vector<8x8xbf16>, vector<8x8xf32> -> vector<8x8xf32>
    %118 = vector.extract_strided_slice %92 {offsets = [0, 8], sizes = [8, 8], strides = [1, 1]} : vector<8x32xbf16> to vector<8x8xbf16>
    %119 = vector.extract_strided_slice %94 {offsets = [0, 8], sizes = [8, 8], strides = [1, 1]} : vector<8x32xbf16> to vector<8x8xbf16>
    %cst_33 = arith.constant dense<0.000000e+00> : vector<8x8xf32>
    %120 = tpu.matmul %118, %119, %cst_33 {dimension_numbers = #tpu.dot_dimension_numbers<[1], [1], [0], [0], [0, 0, 1, 0], [], []>} : vector<8x8xbf16>, vector<8x8xbf16>, vector<8x8xf32> -> vector<8x8xf32>
    %121 = arith.addf %120, %100 : vector<8x8xf32>
    %cst_34 = arith.constant dense<0xFF800000> : vector<8xf32>
    %122 = vector.multi_reduction <maximumf>, %121, %cst_34 [1] : vector<8x8xf32> to vector<8xf32>
    %123 = vector.shape_cast %122 : vector<8xf32> to vector<8x1xf32>
    %124 = vector.broadcast %123 : vector<8x1xf32> to vector<8x8xf32>
    %125 = arith.subf %121, %124 : vector<8x8xf32>
    %126 = math.exp %125 : vector<8x8xf32>
    %cst_35 = arith.constant dense<0.000000e+00> : vector<8xf32>
    %127 = vector.multi_reduction <add>, %126, %cst_35 [1] : vector<8x8xf32> to vector<8xf32>
    %128 = vector.shape_cast %127 : vector<8xf32> to vector<8x1xf32>
    %129 = tpu.reciprocal %128 {approx = true} : vector<8x1xf32> -> vector<8x1xf32>
    %130 = vector.broadcast %129 : vector<8x1xf32> to vector<8x8xf32>
    %131 = arith.mulf %126, %130 : vector<8x8xf32>
    %132 = arith.truncf %131 : vector<8x8xf32> to vector<8x8xbf16>
    %133 = vector.extract_strided_slice %96 {offsets = [0, 8], sizes = [8, 8], strides = [1, 1]} : vector<8x32xbf16> to vector<8x8xbf16>
    %cst_36 = arith.constant dense<0.000000e+00> : vector<8x8xf32>
    %134 = tpu.matmul %132, %133, %cst_36 {dimension_numbers = #tpu.dot_dimension_numbers<[1], [0], [0], [1], [0, 0, 1, 1], [], []>} : vector<8x8xbf16>, vector<8x8xbf16>, vector<8x8xf32> -> vector<8x8xf32>
    %135 = vector.extract_strided_slice %92 {offsets = [0, 16], sizes = [8, 8], strides = [1, 1]} : vector<8x32xbf16> to vector<8x8xbf16>
    %136 = vector.extract_strided_slice %94 {offsets = [0, 16], sizes = [8, 8], strides = [1, 1]} : vector<8x32xbf16> to vector<8x8xbf16>
    %cst_37 = arith.constant dense<0.000000e+00> : vector<8x8xf32>
    %137 = tpu.matmul %135, %136, %cst_37 {dimension_numbers = #tpu.dot_dimension_numbers<[1], [1], [0], [0], [0, 0, 1, 0], [], []>} : vector<8x8xbf16>, vector<8x8xbf16>, vector<8x8xf32> -> vector<8x8xf32>
    %138 = arith.addf %137, %100 : vector<8x8xf32>
    %cst_38 = arith.constant dense<0xFF800000> : vector<8xf32>
    %139 = vector.multi_reduction <maximumf>, %138, %cst_38 [1] : vector<8x8xf32> to vector<8xf32>
    %140 = vector.shape_cast %139 : vector<8xf32> to vector<8x1xf32>
    %141 = vector.broadcast %140 : vector<8x1xf32> to vector<8x8xf32>
    %142 = arith.subf %138, %141 : vector<8x8xf32>
    %143 = math.exp %142 : vector<8x8xf32>
    %cst_39 = arith.constant dense<0.000000e+00> : vector<8xf32>
    %144 = vector.multi_reduction <add>, %143, %cst_39 [1] : vector<8x8xf32> to vector<8xf32>
    %145 = vector.shape_cast %144 : vector<8xf32> to vector<8x1xf32>
    %146 = tpu.reciprocal %145 {approx = true} : vector<8x1xf32> -> vector<8x1xf32>
    %147 = vector.broadcast %146 : vector<8x1xf32> to vector<8x8xf32>
    %148 = arith.mulf %143, %147 : vector<8x8xf32>
    %149 = arith.truncf %148 : vector<8x8xf32> to vector<8x8xbf16>
    %150 = vector.extract_strided_slice %96 {offsets = [0, 16], sizes = [8, 8], strides = [1, 1]} : vector<8x32xbf16> to vector<8x8xbf16>
    %cst_40 = arith.constant dense<0.000000e+00> : vector<8x8xf32>
    %151 = tpu.matmul %149, %150, %cst_40 {dimension_numbers = #tpu.dot_dimension_numbers<[1], [0], [0], [1], [0, 0, 1, 1], [], []>} : vector<8x8xbf16>, vector<8x8xbf16>, vector<8x8xf32> -> vector<8x8xf32>
    %152 = vector.extract_strided_slice %92 {offsets = [0, 24], sizes = [8, 8], strides = [1, 1]} : vector<8x32xbf16> to vector<8x8xbf16>
    %153 = vector.extract_strided_slice %94 {offsets = [0, 24], sizes = [8, 8], strides = [1, 1]} : vector<8x32xbf16> to vector<8x8xbf16>
    %cst_41 = arith.constant dense<0.000000e+00> : vector<8x8xf32>
    %154 = tpu.matmul %152, %153, %cst_41 {dimension_numbers = #tpu.dot_dimension_numbers<[1], [1], [0], [0], [0, 0, 1, 0], [], []>} : vector<8x8xbf16>, vector<8x8xbf16>, vector<8x8xf32> -> vector<8x8xf32>
    %155 = arith.addf %154, %100 : vector<8x8xf32>
    %cst_42 = arith.constant dense<0xFF800000> : vector<8xf32>
    %156 = vector.multi_reduction <maximumf>, %155, %cst_42 [1] : vector<8x8xf32> to vector<8xf32>
    %157 = vector.shape_cast %156 : vector<8xf32> to vector<8x1xf32>
    %158 = vector.broadcast %157 : vector<8x1xf32> to vector<8x8xf32>
    %159 = arith.subf %155, %158 : vector<8x8xf32>
    %160 = math.exp %159 : vector<8x8xf32>
    %cst_43 = arith.constant dense<0.000000e+00> : vector<8xf32>
    %161 = vector.multi_reduction <add>, %160, %cst_43 [1] : vector<8x8xf32> to vector<8xf32>
    %162 = vector.shape_cast %161 : vector<8xf32> to vector<8x1xf32>
    %163 = tpu.reciprocal %162 {approx = true} : vector<8x1xf32> -> vector<8x1xf32>
    %164 = vector.broadcast %163 : vector<8x1xf32> to vector<8x8xf32>
    %165 = arith.mulf %160, %164 : vector<8x8xf32>
    %166 = arith.truncf %165 : vector<8x8xf32> to vector<8x8xbf16>
    %167 = vector.extract_strided_slice %96 {offsets = [0, 24], sizes = [8, 8], strides = [1, 1]} : vector<8x32xbf16> to vector<8x8xbf16>
    %cst_44 = arith.constant dense<0.000000e+00> : vector<8x8xf32>
    %168 = tpu.matmul %166, %167, %cst_44 {dimension_numbers = #tpu.dot_dimension_numbers<[1], [0], [0], [1], [0, 0, 1, 1], [], []>} : vector<8x8xbf16>, vector<8x8xbf16>, vector<8x8xf32> -> vector<8x8xf32>
    %169 = tpu.concatenate %117, %134, %151, %168 in 1 : vector<8x8xf32>, vector<8x8xf32>, vector<8x8xf32>, vector<8x8xf32> -> vector<8x32xf32>
    %170 = tpu.concatenate %90, %169 in 0 : vector<8x32xf32>, vector<8x32xf32> -> vector<16x32xf32>
    %171 = arith.truncf %170 : vector<16x32xf32> to vector<16x32xbf16>
    %c0_45 = arith.constant 0 : index
    %c0_46 = arith.constant 0 : index
    %c0_47 = arith.constant 0 : index
    %172 = vector.load %arg8[%c0_45, %c0_46, %c0_47] : memref<1x32x32xbf16, #tpu.memory_space<vmem>>, vector<1x32x32xbf16>
    %173 = vector.shape_cast %172 : vector<1x32x32xbf16> to vector<32x32xbf16>
    %cst_48 = arith.constant dense<0.000000e+00> : vector<16x32xf32>
    %174 = tpu.matmul %171, %173, %cst_48 {dimension_numbers = #tpu.dot_dimension_numbers<[1], [0], [0], [1], [0, 0, 1, 1], [], []>} : vector<16x32xbf16>, vector<32x32xbf16>, vector<16x32xf32> -> vector<16x32xf32>
    %c0_49 = arith.constant 0 : index
    %c0_50 = arith.constant 0 : index
    %c0_51 = arith.constant 0 : index
    %175 = vector.load %arg9[%c0_49, %c0_50, %c0_51] : memref<1x1x32xf32, #tpu.memory_space<vmem>>, vector<1x1x32xf32>
    %176 = vector.shape_cast %175 : vector<1x1x32xf32> to vector<1x32xf32>
    %177 = vector.broadcast %176 : vector<1x32xf32> to vector<16x32xf32>
    %178 = arith.addf %174, %177 : vector<16x32xf32>
    %179 = arith.addf %3, %178 : vector<16x32xf32>
    %c0_52 = arith.constant 0 : index
    %c0_53 = arith.constant 0 : index
    %c0_54 = arith.constant 0 : index
    %180 = vector.load %arg10[%c0_52, %c0_53, %c0_54] : memref<1x1x32xf32, #tpu.memory_space<vmem>>, vector<1x1x32xf32>
    %181 = vector.shape_cast %180 : vector<1x1x32xf32> to vector<1x32xf32>
    %c0_55 = arith.constant 0 : index
    %c0_56 = arith.constant 0 : index
    %c0_57 = arith.constant 0 : index
    %182 = vector.load %arg11[%c0_55, %c0_56, %c0_57] : memref<1x1x32xf32, #tpu.memory_space<vmem>>, vector<1x1x32xf32>
    %183 = vector.shape_cast %182 : vector<1x1x32xf32> to vector<1x32xf32>
    %cst_58 = arith.constant dense<0.000000e+00> : vector<16xf32>
    %184 = vector.multi_reduction <add>, %179, %cst_58 [1] : vector<16x32xf32> to vector<16xf32>
    %185 = vector.shape_cast %184 : vector<16xf32> to vector<16x1xf32>
    %cst_59 = arith.constant 3.200000e+01 : f32
    %186 = vector.broadcast %cst_59 : f32 to vector<16x1xf32>
    %187 = arith.divf %185, %186 : vector<16x1xf32>
    %188 = vector.broadcast %187 : vector<16x1xf32> to vector<16x32xf32>
    %189 = arith.subf %179, %188 : vector<16x32xf32>
    %190 = arith.mulf %189, %189 : vector<16x32xf32>
    %cst_60 = arith.constant dense<0.000000e+00> : vector<16xf32>
    %191 = vector.multi_reduction <add>, %190, %cst_60 [1] : vector<16x32xf32> to vector<16xf32>
    %192 = vector.shape_cast %191 : vector<16xf32> to vector<16x1xf32>
    %cst_61 = arith.constant 3.200000e+01 : f32
    %193 = vector.broadcast %cst_61 : f32 to vector<16x1xf32>
    %194 = arith.divf %192, %193 : vector<16x1xf32>
    %195 = vector.broadcast %187 : vector<16x1xf32> to vector<16x32xf32>
    %196 = arith.subf %179, %195 : vector<16x32xf32>
    %cst_62 = arith.constant 9.99999974E-6 : f32
    %197 = vector.broadcast %cst_62 : f32 to vector<16x1xf32>
    %198 = arith.addf %194, %197 : vector<16x1xf32>
    %199 = math.rsqrt %198 : vector<16x1xf32>
    %200 = vector.broadcast %199 : vector<16x1xf32> to vector<16x32xf32>
    %201 = arith.mulf %196, %200 : vector<16x32xf32>
    %202 = vector.broadcast %181 : vector<1x32xf32> to vector<16x32xf32>
    %203 = arith.mulf %201, %202 : vector<16x32xf32>
    %204 = vector.broadcast %183 : vector<1x32xf32> to vector<16x32xf32>
    %205 = arith.addf %203, %204 : vector<16x32xf32>
    %206 = arith.truncf %205 : vector<16x32xf32> to vector<16x32xbf16>
    %c0_63 = arith.constant 0 : index
    %c0_64 = arith.constant 0 : index
    %c0_65 = arith.constant 0 : index
    %207 = vector.load %arg12[%c0_63, %c0_64, %c0_65] : memref<1x32x64xbf16, #tpu.memory_space<vmem>>, vector<1x32x64xbf16>
    %208 = vector.shape_cast %207 : vector<1x32x64xbf16> to vector<32x64xbf16>
    %cst_66 = arith.constant dense<0.000000e+00> : vector<16x64xf32>
    %209 = tpu.matmul %206, %208, %cst_66 {dimension_numbers = #tpu.dot_dimension_numbers<[1], [0], [0], [1], [0, 0, 1, 1], [], []>} : vector<16x32xbf16>, vector<32x64xbf16>, vector<16x64xf32> -> vector<16x64xf32>
    %c0_67 = arith.constant 0 : index
    %c0_68 = arith.constant 0 : index
    %c0_69 = arith.constant 0 : index
    %210 = vector.load %arg13[%c0_67, %c0_68, %c0_69] : memref<1x1x64xf32, #tpu.memory_space<vmem>>, vector<1x1x64xf32>
    %211 = vector.shape_cast %210 : vector<1x1x64xf32> to vector<1x64xf32>
    %212 = vector.broadcast %211 : vector<1x64xf32> to vector<16x64xf32>
    %213 = arith.addf %209, %212 : vector<16x64xf32>
    %214 = arith.mulf %213, %213 : vector<16x64xf32>
    %215 = arith.mulf %213, %214 : vector<16x64xf32>
    %cst_70 = arith.constant 4.471500e-02 : f32
    %216 = vector.broadcast %cst_70 : f32 to vector<16x64xf32>
    %217 = arith.mulf %216, %215 : vector<16x64xf32>
    %218 = arith.addf %213, %217 : vector<16x64xf32>
    %cst_71 = arith.constant 0.797884583 : f32
    %219 = vector.broadcast %cst_71 : f32 to vector<16x64xf32>
    %220 = arith.mulf %219, %218 : vector<16x64xf32>
    %221 = math.tanh %220 : vector<16x64xf32>
    %cst_72 = arith.constant 1.000000e+00 : f32
    %222 = vector.broadcast %cst_72 : f32 to vector<16x64xf32>
    %223 = arith.addf %222, %221 : vector<16x64xf32>
    %cst_73 = arith.constant 5.000000e-01 : f32
    %224 = vector.broadcast %cst_73 : f32 to vector<16x64xf32>
    %225 = arith.mulf %224, %223 : vector<16x64xf32>
    %226 = arith.mulf %213, %225 : vector<16x64xf32>
    %227 = arith.truncf %226 : vector<16x64xf32> to vector<16x64xbf16>
    %c0_74 = arith.constant 0 : index
    %c0_75 = arith.constant 0 : index
    %c0_76 = arith.constant 0 : index
    %228 = vector.load %arg14[%c0_74, %c0_75, %c0_76] : memref<1x64x32xbf16, #tpu.memory_space<vmem>>, vector<1x64x32xbf16>
    %229 = vector.shape_cast %228 : vector<1x64x32xbf16> to vector<64x32xbf16>
    %cst_77 = arith.constant dense<0.000000e+00> : vector<16x32xf32>
    %230 = tpu.matmul %227, %229, %cst_77 {dimension_numbers = #tpu.dot_dimension_numbers<[1], [0], [0], [1], [0, 0, 1, 1], [], []>} : vector<16x64xbf16>, vector<64x32xbf16>, vector<16x32xf32> -> vector<16x32xf32>
    %c0_78 = arith.constant 0 : index
    %c0_79 = arith.constant 0 : index
    %c0_80 = arith.constant 0 : index
    %231 = vector.load %arg15[%c0_78, %c0_79, %c0_80] : memref<1x1x32xf32, #tpu.memory_space<vmem>>, vector<1x1x32xf32>
    %232 = vector.shape_cast %231 : vector<1x1x32xf32> to vector<1x32xf32>
    %233 = vector.broadcast %232 : vector<1x32xf32> to vector<16x32xf32>
    %234 = arith.addf %230, %233 : vector<16x32xf32>
    %235 = arith.addf %205, %234 : vector<16x32xf32>
    %c0_81 = arith.constant 0 : index
    %c0_82 = arith.constant 0 : index
    %c0_83 = arith.constant 0 : index
    %236 = vector.load %arg16[%c0_81, %c0_82, %c0_83] : memref<1x1x32xf32, #tpu.memory_space<vmem>>, vector<1x1x32xf32>
    %237 = vector.shape_cast %236 : vector<1x1x32xf32> to vector<1x32xf32>
    %c0_84 = arith.constant 0 : index
    %c0_85 = arith.constant 0 : index
    %c0_86 = arith.constant 0 : index
    %238 = vector.load %arg17[%c0_84, %c0_85, %c0_86] : memref<1x1x32xf32, #tpu.memory_space<vmem>>, vector<1x1x32xf32>
    %239 = vector.shape_cast %238 : vector<1x1x32xf32> to vector<1x32xf32>
    %cst_87 = arith.constant dense<0.000000e+00> : vector<16xf32>
    %240 = vector.multi_reduction <add>, %235, %cst_87 [1] : vector<16x32xf32> to vector<16xf32>
    %241 = vector.shape_cast %240 : vector<16xf32> to vector<16x1xf32>
    %cst_88 = arith.constant 3.200000e+01 : f32
    %242 = vector.broadcast %cst_88 : f32 to vector<16x1xf32>
    %243 = arith.divf %241, %242 : vector<16x1xf32>
    %244 = vector.broadcast %243 : vector<16x1xf32> to vector<16x32xf32>
    %245 = arith.subf %235, %244 : vector<16x32xf32>
    %246 = arith.mulf %245, %245 : vector<16x32xf32>
    %cst_89 = arith.constant dense<0.000000e+00> : vector<16xf32>
    %247 = vector.multi_reduction <add>, %246, %cst_89 [1] : vector<16x32xf32> to vector<16xf32>
    %248 = vector.shape_cast %247 : vector<16xf32> to vector<16x1xf32>
    %cst_90 = arith.constant 3.200000e+01 : f32
    %249 = vector.broadcast %cst_90 : f32 to vector<16x1xf32>
    %250 = arith.divf %248, %249 : vector<16x1xf32>
    %251 = vector.broadcast %243 : vector<16x1xf32> to vector<16x32xf32>
    %252 = arith.subf %235, %251 : vector<16x32xf32>
    %cst_91 = arith.constant 9.99999974E-6 : f32
    %253 = vector.broadcast %cst_91 : f32 to vector<16x1xf32>
    %254 = arith.addf %250, %253 : vector<16x1xf32>
    %255 = math.rsqrt %254 : vector<16x1xf32>
    %256 = vector.broadcast %255 : vector<16x1xf32> to vector<16x32xf32>
    %257 = arith.mulf %252, %256 : vector<16x32xf32>
    %258 = vector.broadcast %237 : vector<1x32xf32> to vector<16x32xf32>
    %259 = arith.mulf %257, %258 : vector<16x32xf32>
    %260 = vector.broadcast %239 : vector<1x32xf32> to vector<16x32xf32>
    %261 = arith.addf %259, %260 : vector<16x32xf32>
    %c0_92 = arith.constant 0 : index
    %c0_93 = arith.constant 0 : index
    %262 = vector.load %arg21[%c0_92, %c0_93] : memref<16x32xf32, #tpu.memory_space<vmem>>, vector<16x32xf32>
    tpu.vector_store %arg21[%c0_92, %c0_93], %261 {strides = array<i32>} : memref<16x32xf32, #tpu.memory_space<vmem>>, vector<16x32xf32>,
    %c1_i32 = arith.constant 1 : i32
    %263 = arith.cmpi eq, %arg1, %c1_i32 : i32
    %264 = arith.extui %263 : i1 to i32
    %c0_i32_94 = arith.constant 0 : i32
    %265 = arith.cmpi ne, %264, %c0_i32_94 : i32
    scf.if %265 {
      %266 = arith.truncf %261 : vector<16x32xf32> to vector<16x32xbf16>
      %c0_95 = arith.constant 0 : index
      %c0_96 = arith.constant 0 : index
      %267 = vector.load %arg18[%c0_95, %c0_96] : memref<32x128xbf16, #tpu.memory_space<vmem>>, vector<32x128xbf16>
      %cst_97 = arith.constant dense<0.000000e+00> : vector<16x128xf32>
      %268 = tpu.matmul %266, %267, %cst_97 {dimension_numbers = #tpu.dot_dimension_numbers<[1], [0], [0], [1], [0, 0, 1, 1], [], []>} : vector<16x32xbf16>, vector<32x128xbf16>, vector<16x128xf32> -> vector<16x128xf32>
      %c0_98 = arith.constant 0 : index
      %c0_99 = arith.constant 0 : index
      %269 = vector.load %arg19[%c0_98, %c0_99] : memref<1x128xf32, #tpu.memory_space<vmem>>, vector<1x128xf32>
      %270 = vector.broadcast %269 : vector<1x128xf32> to vector<16x128xf32>
      %271 = arith.addf %268, %270 : vector<16x128xf32>
      %272 = vector.shape_cast %271 : vector<16x128xf32> to vector<2x8x128xf32>
      %c0_100 = arith.constant 0 : index
      %c0_101 = arith.constant 0 : index
      %c0_102 = arith.constant 0 : index
      %273 = vector.load %arg20[%c0_100, %c0_101, %c0_102] : memref<2x8x128xf32, #tpu.memory_space<vmem>>, vector<2x8x128xf32>
      tpu.vector_store %arg20[%c0_100, %c0_101, %c0_102], %272 {strides = array<i32>} : memref<2x8x128xf32, #tpu.memory_space<vmem>>, vector<2x8x128xf32>,
    } else {
    }
    return
  }
  func.func @transform_0(%arg0: i32, %arg1: i32) -> (i32, i32, i32) {
    %c0_i32 = arith.constant 0 : i32
    %c0_i32_0 = arith.constant 0 : i32
    %c0_i32_1 = arith.constant 0 : i32
    return %arg0, %c0_i32, %c0_i32_0 : i32, i32, i32
  }
  func.func @transform_1(%arg0: i32, %arg1: i32) -> (i32, i32, i32) {
    %c0_i32 = arith.constant 0 : i32
    %c0_i32_0 = arith.constant 0 : i32
    %c0_i32_1 = arith.constant 0 : i32
    return %arg0, %c0_i32, %c0_i32_0 : i32, i32, i32
  }
  func.func @transform_2(%arg0: i32, %arg1: i32) -> (i32, i32) {
    %c0_i32 = arith.constant 0 : i32
    %c0_i32_0 = arith.constant 0 : i32
    %c0_i32_1 = arith.constant 0 : i32
    return %c0_i32, %c0_i32_0 : i32, i32
  }
  func.func @transform_3(%arg0: i32, %arg1: i32) -> (i32, i32) {
    %c0_i32 = arith.constant 0 : i32
    %c0_i32_0 = arith.constant 0 : i32
    %c0_i32_1 = arith.constant 0 : i32
    return %c0_i32, %c0_i32_0 : i32, i32
  }
  func.func @transform_4(%arg0: i32, %arg1: i32) -> (i32, i32, i32) {
    %c0_i32 = arith.constant 0 : i32
    %c0_i32_0 = arith.constant 0 : i32
    %c0_i32_1 = arith.constant 0 : i32
    return %arg1, %c0_i32, %c0_i32_0 : i32, i32, i32
  }
  func.func @transform_5(%arg0: i32, %arg1: i32) -> (i32, i32, i32) {
    %c0_i32 = arith.constant 0 : i32
    %c0_i32_0 = arith.constant 0 : i32
    %c0_i32_1 = arith.constant 0 : i32
    return %arg1, %c0_i32, %c0_i32_0 : i32, i32, i32
  }
  func.func @transform_6(%arg0: i32, %arg1: i32) -> (i32, i32, i32) {
    %c0_i32 = arith.constant 0 : i32
    %c0_i32_0 = arith.constant 0 : i32
    %c0_i32_1 = arith.constant 0 : i32
    return %arg1, %c0_i32, %c0_i32_0 : i32, i32, i32
  }
  func.func @transform_7(%arg0: i32, %arg1: i32) -> (i32, i32, i32) {
    %c0_i32 = arith.constant 0 : i32
    %c0_i32_0 = arith.constant 0 : i32
    %c0_i32_1 = arith.constant 0 : i32
    return %arg1, %c0_i32, %c0_i32_0 : i32, i32, i32
  }
  func.func @transform_8(%arg0: i32, %arg1: i32) -> (i32, i32, i32) {
    %c0_i32 = arith.constant 0 : i32
    %c0_i32_0 = arith.constant 0 : i32
    %c0_i32_1 = arith.constant 0 : i32
    return %arg1, %c0_i32, %c0_i32_0 : i32, i32, i32
  }
  func.func @transform_9(%arg0: i32, %arg1: i32) -> (i32, i32, i32) {
    %c0_i32 = arith.constant 0 : i32
    %c0_i32_0 = arith.constant 0 : i32
    %c0_i32_1 = arith.constant 0 : i32
    return %arg1, %c0_i32, %c0_i32_0 : i32, i32, i32
  }
  func.func @transform_10(%arg0: i32, %arg1: i32) -> (i32, i32, i32) {
    %c0_i32 = arith.constant 0 : i32
    %c0_i32_0 = arith.constant 0 : i32
    %c0_i32_1 = arith.constant 0 : i32
    return %arg1, %c0_i32, %c0_i32_0 : i32, i32, i32
  }
  func.func @transform_11(%arg0: i32, %arg1: i32) -> (i32, i32, i32) {
    %c0_i32 = arith.constant 0 : i32
    %c0_i32_0 = arith.constant 0 : i32
    %c0_i32_1 = arith.constant 0 : i32
    return %arg1, %c0_i32, %c0_i32_0 : i32, i32, i32
  }
  func.func @transform_12(%arg0: i32, %arg1: i32) -> (i32, i32, i32) {
    %c0_i32 = arith.constant 0 : i32
    %c0_i32_0 = arith.constant 0 : i32
    %c0_i32_1 = arith.constant 0 : i32
    return %arg1, %c0_i32, %c0_i32_0 : i32, i32, i32
  }
  func.func @transform_13(%arg0: i32, %arg1: i32) -> (i32, i32, i32) {
    %c0_i32 = arith.constant 0 : i32
    %c0_i32_0 = arith.constant 0 : i32
    %c0_i32_1 = arith.constant 0 : i32
    return %arg1, %c0_i32, %c0_i32_0 : i32, i32, i32
  }
  func.func @transform_14(%arg0: i32, %arg1: i32) -> (i32, i32, i32) {
    %c0_i32 = arith.constant 0 : i32
    %c0_i32_0 = arith.constant 0 : i32
    %c0_i32_1 = arith.constant 0 : i32
    return %arg1, %c0_i32, %c0_i32_0 : i32, i32, i32
  }
  func.func @transform_15(%arg0: i32, %arg1: i32) -> (i32, i32, i32) {
    %c0_i32 = arith.constant 0 : i32
    %c0_i32_0 = arith.constant 0 : i32
    %c0_i32_1 = arith.constant 0 : i32
    return %arg1, %c0_i32, %c0_i32_0 : i32, i32, i32
  }
  func.func @transform_16(%arg0: i32, %arg1: i32) -> (i32, i32) {
    %c0_i32 = arith.constant 0 : i32
    %c0_i32_0 = arith.constant 0 : i32
    %c0_i32_1 = arith.constant 0 : i32
    return %c0_i32, %c0_i32_0 : i32, i32
  }
  func.func @transform_17(%arg0: i32, %arg1: i32) -> (i32, i32) {
    %c0_i32 = arith.constant 0 : i32
    %c0_i32_0 = arith.constant 0 : i32
    %c0_i32_1 = arith.constant 0 : i32
    return %c0_i32, %c0_i32_0 : i32, i32
  }
  func.func @transform_18(%arg0: i32, %arg1: i32) -> (i32, i32, i32) {
    %c0_i32 = arith.constant 0 : i32
    %c0_i32_0 = arith.constant 0 : i32
    %c0_i32_1 = arith.constant 0 : i32
    return %arg0, %c0_i32, %c0_i32_0 : i32, i32, i32
  }
}

</mosaic_0001>

<llo_original>
// kernel: tpu_custom_call.1
$region0: #{tpu_custom_call.1}
  #allocation0 [shape = 'u32[]', space=smem, size = 0x4, offset = 0x4, fixed_abs, tag = 'smem constant byte address 0x4 - core index']
  #allocation1 [shape = 'u32[144,128]{1,0:T(1,128)}', space=vmem, size = 0x12000, scoped, tag = 'internal scratch']
  #allocation2 [shape = 'f32[16,32]{1,0:T(8,128)}', space=vmem, size = 0x2000, scoped, tag = 'scratch operand']
  %s0 = inlined_call_operand.hbm [shape: f32[2,8,32], index: 0, kind: input, shape index: {}]
  %s1 = inlined_call_operand.hbm [shape: f32[2,1,8], index: 1, kind: input, shape index: {}]
  %s2 = inlined_call_operand.hbm [shape: f32[1,32], index: 2, kind: input, shape index: {}]
  %s3 = inlined_call_operand.hbm [shape: f32[1,32], index: 3, kind: input, shape index: {}]
  %s4 = inlined_call_operand.hbm [shape: bf16[2,32,96], index: 4, kind: input, shape index: {}]
  %s5 = inlined_call_operand.hbm [shape: f32[2,1,96], index: 5, kind: input, shape index: {}]
  %s6 = inlined_call_operand.hbm [shape: bf16[2,32,32], index: 6, kind: input, shape index: {}]
  %s7 = inlined_call_operand.hbm [shape: f32[2,1,32], index: 7, kind: input, shape index: {}]
  %s8 = inlined_call_operand.hbm [shape: f32[2,1,32], index: 8, kind: input, shape index: {}]
  %s9 = inlined_call_operand.hbm [shape: f32[2,1,32], index: 9, kind: input, shape index: {}]
  %s10 = inlined_call_operand.hbm [shape: bf16[2,32,64], index: 10, kind: input, shape index: {}]
  %s11 = inlined_call_operand.hbm [shape: f32[2,1,64], index: 11, kind: input, shape index: {}]
  %s12 = inlined_call_operand.hbm [shape: bf16[2,64,32], index: 12, kind: input, shape index: {}]
  %s13 = inlined_call_operand.hbm [shape: f32[2,1,32], index: 13, kind: input, shape index: {}]
  %s14 = inlined_call_operand.hbm [shape: f32[2,1,32], index: 14, kind: input, shape index: {}]
  %s15 = inlined_call_operand.hbm [shape: f32[2,1,32], index: 15, kind: input, shape index: {}]
  %s16 = inlined_call_operand.hbm [shape: bf16[32,128], index: 16, kind: input, shape index: {}]
  %s17 = inlined_call_operand.hbm [shape: f32[1,128], index: 17, kind: input, shape index: {}]
  %s18 = inlined_call_operand.hbm [shape: f32[2,8,128], index: 18, kind: output, shape index: {}]
  %s19 = sld [smem:[#allocation0]]
  $region185: #{tpu_custom_call.1} parent=0
    _
  %s21 = ssub.s32 1, %s19
  %s22 = scalar_select 0, %s21, %s19
  $region1: #{tpu_custom_call.1} parent=0
    #allocation3 [shape = 'u8[8192]{0}', space=vmem, size = 0x2000, scoped, tag = 'input window, operand 0, single buffered']
    #allocation4 [shape = 's32[2]{0}', space=sflag, size = 0x8, scoped, tag = 'scoped memory for tpu_custom_call.1']
    #allocation5 [shape = 's32[2]{0}', space=sflag, size = 0x8, scoped, tag = 'scoped memory for tpu_custom_call.1']
    #allocation6 [shape = 'u8[1024]{0}', space=vmem, size = 0x400, scoped, tag = 'input window, operand 1, single buffered']
    #allocation7 [shape = 's32[1]{0}', space=sflag, size = 0x4, scoped, tag = 'scoped memory for tpu_custom_call.1']
    #allocation8 [shape = 'u8[512]{0}', space=vmem, size = 0x400, scoped, tag = 'input window, operand 2, single buffered']
    #allocation9 [shape = 'u8[512]{0}', space=vmem, size = 0x400, scoped, tag = 'input window, operand 3, single buffered']
    #allocation10 [shape = 's32[1]{0}', space=sflag, size = 0x4, scoped, tag = 'scoped memory for tpu_custom_call.1']
    #allocation11 [shape = 'u8[16384]{0}', space=vmem, size = 0x4000, scoped, tag = 'input window, operand 4']
    #allocation12 [shape = 'u8[1024]{0}', space=vmem, size = 0x400, scoped, tag = 'input window, operand 5']
    #allocation13 [shape = 'u8[16384]{0}', space=vmem, size = 0x4000, scoped, tag = 'input window, operand 6']
    #allocation14 [shape = 'u8[1024]{0}', space=vmem, size = 0x400, scoped, tag = 'input window, operand 7']
    #allocation15 [shape = 'u8[1024]{0}', space=vmem, size = 0x400, scoped, tag = 'input window, operand 8']
    #allocation16 [shape = 'u8[1024]{0}', space=vmem, size = 0x400, scoped, tag = 'input window, operand 9']
    #allocation17 [shape = 'u8[16384]{0}', space=vmem, size = 0x4000, scoped, tag = 'input window, operand 10']
    #allocation18 [shape = 'u8[1024]{0}', space=vmem, size = 0x400, scoped, tag = 'input window, operand 11']
    #allocation19 [shape = 'u8[32768]{0}', space=vmem, size = 0x8000, scoped, tag = 'input window, operand 12']
    #allocation20 [shape = 'u8[1024]{0}', space=vmem, size = 0x400, scoped, tag = 'input window, operand 13']
    #allocation21 [shape = 'u8[1024]{0}', space=vmem, size = 0x400, scoped, tag = 'input window, operand 14']
    #allocation22 [shape = 'u8[1024]{0}', space=vmem, size = 0x400, scoped, tag = 'input window, operand 15']
    #allocation23 [shape = 'u8[8192]{0}', space=vmem, size = 0x2000, scoped, tag = 'input window, operand 16, single buffered']
    #allocation24 [shape = 'u8[512]{0}', space=vmem, size = 0x400, scoped, tag = 'input window, operand 17, single buffered']
    #allocation25 [shape = 'u8[8192]{0}', space=vmem, size = 0x2000, scoped, tag = 'output window, operand 0, single buffered']
    %23 = vsyncpa [#allocation4], 0
    %24 = vsyncpa [#allocation7], 0
    %25 = vsyncpa [#allocation10], 0
    %26 = vsyncpa [#allocation5], 0
    loop: start=0, step=1, limit=4
    $region2: #{tpu_custom_call.1} parent=1 // loop_pre_header
      _
    $region3: #{tpu_custom_call.1} parent=1 // loop_header
      %s28 = sphi 0, %s32
      %p29 = scmp.ge.s32.totalorder %s28, 4
      %s35 = sphi 0, %s47
      %s36 = sphi 0, %s43
      %s37 = sphi 0, %s35
      %s38 = sphi 0, %s36
      %s39 = sphi 0, %s37
      %s40 = sphi 0, %s38
      %s50 = sphi 0, %s52
      %s53 = sphi 0, %s50
      %s54 = sphi 0, %s53
      %s70 = sphi 0, %s54
      %s76 = sphi 0, %s78
      %s79 = sphi 0, %s76
      %s80 = sphi 0, %s79
      %s96 = sphi 0, %s80
      %s100 = sphi 0, %s100
      %s102 = sphi 0, %s100
      %s103 = sphi 0, %s102
      %s117 = sphi 0, %s103
      %s121 = sphi 0, %s121
      %s123 = sphi 0, %s121
      %s124 = sphi 0, %s123
      %s138 = sphi 0, %s124
      %s144 = sphi 0, %s146
      %s147 = sphi 0, %s144
      %s148 = sphi 0, %s147
      %s164 = sphi 0, %s148
      %s170 = sphi 0, %s172
      %s173 = sphi 0, %s170
      %s174 = sphi 0, %s173
      %s190 = sphi 0, %s174
      %s196 = sphi 0, %s198
      %s199 = sphi 0, %s196
      %s200 = sphi 0, %s199
      %s216 = sphi 0, %s200
      %s222 = sphi 0, %s224
      %s225 = sphi 0, %s222
      %s226 = sphi 0, %s225
      %s242 = sphi 0, %s226
      %s248 = sphi 0, %s250
      %s251 = sphi 0, %s248
      %s252 = sphi 0, %s251
      %s268 = sphi 0, %s252
      %s274 = sphi 0, %s276
      %s277 = sphi 0, %s274
      %s278 = sphi 0, %s277
      %s294 = sphi 0, %s278
      %s300 = sphi 0, %s302
      %s303 = sphi 0, %s300
      %s304 = sphi 0, %s303
      %s320 = sphi 0, %s304
      %s326 = sphi 0, %s328
      %s329 = sphi 0, %s326
      %s330 = sphi 0, %s329
      %s346 = sphi 0, %s330
      %s352 = sphi 0, %s354
      %s355 = sphi 0, %s352
      %s356 = sphi 0, %s355
      %s372 = sphi 0, %s356
      %s378 = sphi 0, %s380
      %s381 = sphi 0, %s378
      %s382 = sphi 0, %s381
      %s398 = sphi 0, %s382
      %s404 = sphi 0, %s406
      %s407 = sphi 0, %s404
      %s408 = sphi 0, %s407
      %s424 = sphi 0, %s408
      %s430 = sphi 0, %s432
      %s433 = sphi 0, %s430
      %s434 = sphi 0, %s433
      %s450 = sphi 0, %s434
      %s454 = sphi 0, %s454
      %s456 = sphi 0, %s454
      %s457 = sphi 0, %s456
      %s471 = sphi 0, %s457
      %s475 = sphi 0, %s475
      %s477 = sphi 0, %s475
      %s478 = sphi 0, %s477
      %s492 = sphi 0, %s478
      %s498 = sphi 0, %s500
      %s501 = sphi 0, %s498
      %s502 = sphi 0, %s501
      %s518 = sphi 0, %s502
    $region4: #{tpu_custom_call.1} parent=1 // loop_header_branch
      %31 = sbr.rel (%p29) target = $region8
    $region5: #{tpu_custom_call.1} parent=1 // loop_body
      %s33 = ssub.s32 %s28, 1
      %s34 = ssub.s32 %s28, 2
      %s41 = sadd.s32 1, %s36
      %p42 = scmp.ge.s32.totalorder %s41, 2
      %s43 = scalar_select %p42, 0, %s41
      %s44 = sadd.s32 1, %s35
      %s45 = scalar_select %p42, %s44, %s35
      %p46 = scmp.ge.s32.totalorder %s45, 1
      %s47 = scalar_select %p46, 0, %s45
      %s48 = ssub.s32 %s35, %s47
      %p49 = scmp.eq.s32.totalorder %s48, 0
      %s51 = sadd.s32 %s50, 1
      %s52 = scalar_select %p49, %s50, %s51
      %p55 = pneg %p49
      %p56 = scmp.eq.s32.totalorder %s28, 1
      %p57 = por %p55, %p56
      %p58 = scmp.ne.s32.totalorder %s50, %s53
      %p59 = scmp.eq.s32.totalorder %s28, 0
      %p60 = por %p58, %p59
      %p61 = scmp.ne.s32.totalorder %s50, %s53
      %p62 = scmp.eq.s32.totalorder %s33, 1
      %p63 = por %p61, %p62
      %p64 = scmp.ne.s32.totalorder %s53, %s54
      %p65 = scmp.eq.s32.totalorder %s33, 0
      %p66 = por %p64, %p65
      %p67 = scmp.ne.s32.totalorder %s53, %s54
      %p68 = scmp.eq.s32.totalorder %s34, 1
      %p69 = por %p67, %p68
      %p71 = scmp.ne.s32.totalorder %s54, %s70
      %p72 = scmp.eq.s32.totalorder %s34, 0
      %p73 = por %p71, %p72
      %s74 = ssub.s32 %s35, %s47
      %p75 = scmp.eq.s32.totalorder %s74, 0
      %s77 = sadd.s32 %s76, 1
      %s78 = scalar_select %p75, %s76, %s77
      %p81 = pneg %p75
      %p82 = scmp.eq.s32.totalorder %s28, 1
      %p83 = por %p81, %p82
      %p84 = scmp.ne.s32.totalorder %s76, %s79
      %p85 = scmp.eq.s32.totalorder %s28, 0
      %p86 = por %p84, %p85
      %p87 = scmp.ne.s32.totalorder %s76, %s79
      %p88 = scmp.eq.s32.totalorder %s33, 1
      %p89 = por %p87, %p88
      %p90 = scmp.ne.s32.totalorder %s79, %s80
      %p91 = scmp.eq.s32.totalorder %s33, 0
      %p92 = por %p90, %p91
      %p93 = scmp.ne.s32.totalorder %s79, %s80
      %p94 = scmp.eq.s32.totalorder %s34, 1
      %p95 = por %p93, %p94
      %p97 = scmp.ne.s32.totalorder %s80, %s96
      %p98 = scmp.eq.s32.totalorder %s34, 0
      %p99 = por %p97, %p98
      %s101 = sadd.s32 %s100, 1
      %p104 = scmp.eq.s32.totalorder %s28, 1
      %p105 = scmp.ne.s32.totalorder %s100, %s102
      %p106 = scmp.eq.s32.totalorder %s28, 0
      %p107 = por %p105, %p106
      %p108 = scmp.ne.s32.totalorder %s100, %s102
      %p109 = scmp.eq.s32.totalorder %s33, 1
      %p110 = por %p108, %p109
      %p111 = scmp.ne.s32.totalorder %s102, %s103
      %p112 = scmp.eq.s32.totalorder %s33, 0
      %p113 = por %p111, %p112
      %p114 = scmp.ne.s32.totalorder %s102, %s103
      %p115 = scmp.eq.s32.totalorder %s34, 1
      %p116 = por %p114, %p115
      %p118 = scmp.ne.s32.totalorder %s103, %s117
      %p119 = scmp.eq.s32.totalorder %s34, 0
      %p120 = por %p118, %p119
      %s122 = sadd.s32 %s121, 1
      %p125 = scmp.eq.s32.totalorder %s28, 1
      %p126 = scmp.ne.s32.totalorder %s121, %s123
      %p127 = scmp.eq.s32.totalorder %s28, 0
      %p128 = por %p126, %p127
      %p129 = scmp.ne.s32.totalorder %s121, %s123
      %p130 = scmp.eq.s32.totalorder %s33, 1
      %p131 = por %p129, %p130
      %p132 = scmp.ne.s32.totalorder %s123, %s124
      %p133 = scmp.eq.s32.totalorder %s33, 0
      %p134 = por %p132, %p133
      %p135 = scmp.ne.s32.totalorder %s123, %s124
      %p136 = scmp.eq.s32.totalorder %s34, 1
      %p137 = por %p135, %p136
      %p139 = scmp.ne.s32.totalorder %s124, %s138
      %p140 = scmp.eq.s32.totalorder %s34, 0
      %p141 = por %p139, %p140
      %s142 = ssub.s32 %s36, %s43
      %p143 = scmp.eq.s32.totalorder %s142, 0
      %s145 = sadd.s32 %s144, 1
      %s146 = scalar_select %p143, %s144, %s145
      %p149 = pneg %p143
      %p150 = scmp.eq.s32.totalorder %s28, 1
      %p151 = por %p149, %p150
      %p152 = scmp.ne.s32.totalorder %s144, %s147
      %p153 = scmp.eq.s32.totalorder %s28, 0
      %p154 = por %p152, %p153
      %p155 = scmp.ne.s32.totalorder %s144, %s147
      %p156 = scmp.eq.s32.totalorder %s33, 1
      %p157 = por %p155, %p156
      %p158 = scmp.ne.s32.totalorder %s147, %s148
      %p159 = scmp.eq.s32.totalorder %s33, 0
      %p160 = por %p158, %p159
      %p161 = scmp.ne.s32.totalorder %s147, %s148
      %p162 = scmp.eq.s32.totalorder %s34, 1
      %p163 = por %p161, %p162
      %p165 = scmp.ne.s32.totalorder %s148, %s164
      %p166 = scmp.eq.s32.totalorder %s34, 0
      %p167 = por %p165, %p166
      %s168 = ssub.s32 %s36, %s43
      %p169 = scmp.eq.s32.totalorder %s168, 0
      %s171 = sadd.s32 %s170, 1
      %s172 = scalar_select %p169, %s170, %s171
      %p175 = pneg %p169
      %p176 = scmp.eq.s32.totalorder %s28, 1
      %p177 = por %p175, %p176
      %p178 = scmp.ne.s32.totalorder %s170, %s173
      %p179 = scmp.eq.s32.totalorder %s28, 0
      %p180 = por %p178, %p179
      %p181 = scmp.ne.s32.totalorder %s170, %s173
      %p182 = scmp.eq.s32.totalorder %s33, 1
      %p183 = por %p181, %p182
      %p184 = scmp.ne.s32.totalorder %s173, %s174
      %p185 = scmp.eq.s32.totalorder %s33, 0
      %p186 = por %p184, %p185
      %p187 = scmp.ne.s32.totalorder %s173, %s174
      %p188 = scmp.eq.s32.totalorder %s34, 1
      %p189 = por %p187, %p188
      %p191 = scmp.ne.s32.totalorder %s174, %s190
      %p192 = scmp.eq.s32.totalorder %s34, 0
      %p193 = por %p191, %p192
      %s194 = ssub.s32 %s36, %s43
      %p195 = scmp.eq.s32.totalorder %s194, 0
      %s197 = sadd.s32 %s196, 1
      %s198 = scalar_select %p195, %s196, %s197
      %p201 = pneg %p195
      %p202 = scmp.eq.s32.totalorder %s28, 1
      %p203 = por %p201, %p202
      %p204 = scmp.ne.s32.totalorder %s196, %s199
      %p205 = scmp.eq.s32.totalorder %s28, 0
      %p206 = por %p204, %p205
      %p207 = scmp.ne.s32.totalorder %s196, %s199
      %p208 = scmp.eq.s32.totalorder %s33, 1
      %p209 = por %p207, %p208
      %p210 = scmp.ne.s32.totalorder %s199, %s200
      %p211 = scmp.eq.s32.totalorder %s33, 0
      %p212 = por %p210, %p211
      %p213 = scmp.ne.s32.totalorder %s199, %s200
      %p214 = scmp.eq.s32.totalorder %s34, 1
      %p215 = por %p213, %p214
      %p217 = scmp.ne.s32.totalorder %s200, %s216
      %p218 = scmp.eq.s32.totalorder %s34, 0
      %p219 = por %p217, %p218
      %s220 = ssub.s32 %s36, %s43
      %p221 = scmp.eq.s32.totalorder %s220, 0
      %s223 = sadd.s32 %s222, 1
      %s224 = scalar_select %p221, %s222, %s223
      %p227 = pneg %p221
      %p228 = scmp.eq.s32.totalorder %s28, 1
      %p229 = por %p227, %p228
      %p230 = scmp.ne.s32.totalorder %s222, %s225
      %p231 = scmp.eq.s32.totalorder %s28, 0
      %p232 = por %p230, %p231
      %p233 = scmp.ne.s32.totalorder %s222, %s225
      %p234 = scmp.eq.s32.totalorder %s33, 1
      %p235 = por %p233, %p234
      %p236 = scmp.ne.s32.totalorder %s225, %s226
      %p237 = scmp.eq.s32.totalorder %s33, 0
      %p238 = por %p236, %p237
      %p239 = scmp.ne.s32.totalorder %s225, %s226
      %p240 = scmp.eq.s32.totalorder %s34, 1
      %p241 = por %p239, %p240
      %p243 = scmp.ne.s32.totalorder %s226, %s242
      %p244 = scmp.eq.s32.totalorder %s34, 0
      %p245 = por %p243, %p244
      %s246 = ssub.s32 %s36, %s43
      %p247 = scmp.eq.s32.totalorder %s246, 0
      %s249 = sadd.s32 %s248, 1
      %s250 = scalar_select %p247, %s248, %s249
      %p253 = pneg %p247
      %p254 = scmp.eq.s32.totalorder %s28, 1
      %p255 = por %p253, %p254
      %p256 = scmp.ne.s32.totalorder %s248, %s251
      %p257 = scmp.eq.s32.totalorder %s28, 0
      %p258 = por %p256, %p257
      %p259 = scmp.ne.s32.totalorder %s248, %s251
      %p260 = scmp.eq.s32.totalorder %s33, 1
      %p261 = por %p259, %p260
      %p262 = scmp.ne.s32.totalorder %s251, %s252
      %p263 = scmp.eq.s32.totalorder %s33, 0
      %p264 = por %p262, %p263
      %p265 = scmp.ne.s32.totalorder %s251, %s252
      %p266 = scmp.eq.s32.totalorder %s34, 1
      %p267 = por %p265, %p266
      %p269 = scmp.ne.s32.totalorder %s252, %s268
      %p270 = scmp.eq.s32.totalorder %s34, 0
      %p271 = por %p269, %p270
      %s272 = ssub.s32 %s36, %s43
      %p273 = scmp.eq.s32.totalorder %s272, 0
      %s275 = sadd.s32 %s274, 1
      %s276 = scalar_select %p273, %s274, %s275
      %p279 = pneg %p273
      %p280 = scmp.eq.s32.totalorder %s28, 1
      %p281 = por %p279, %p280
      %p282 = scmp.ne.s32.totalorder %s274, %s277
      %p283 = scmp.eq.s32.totalorder %s28, 0
      %p284 = por %p282, %p283
      %p285 = scmp.ne.s32.totalorder %s274, %s277
      %p286 = scmp.eq.s32.totalorder %s33, 1
      %p287 = por %p285, %p286
      %p288 = scmp.ne.s32.totalorder %s277, %s278
      %p289 = scmp.eq.s32.totalorder %s33, 0
      %p290 = por %p288, %p289
      %p291 = scmp.ne.s32.totalorder %s277, %s278
      %p292 = scmp.eq.s32.totalorder %s34, 1
      %p293 = por %p291, %p292
      %p295 = scmp.ne.s32.totalorder %s278, %s294
      %p296 = scmp.eq.s32.totalorder %s34, 0
      %p297 = por %p295, %p296
      %s298 = ssub.s32 %s36, %s43
      %p299 = scmp.eq.s32.totalorder %s298, 0
      %s301 = sadd.s32 %s300, 1
      %s302 = scalar_select %p299, %s300, %s301
      %p305 = pneg %p299
      %p306 = scmp.eq.s32.totalorder %s28, 1
      %p307 = por %p305, %p306
      %p308 = scmp.ne.s32.totalorder %s300, %s303
      %p309 = scmp.eq.s32.totalorder %s28, 0
      %p310 = por %p308, %p309
      %p311 = scmp.ne.s32.totalorder %s300, %s303
      %p312 = scmp.eq.s32.totalorder %s33, 1
      %p313 = por %p311, %p312
      %p314 = scmp.ne.s32.totalorder %s303, %s304
      %p315 = scmp.eq.s32.totalorder %s33, 0
      %p316 = por %p314, %p315
      %p317 = scmp.ne.s32.totalorder %s303, %s304
      %p318 = scmp.eq.s32.totalorder %s34, 1
      %p319 = por %p317, %p318
      %p321 = scmp.ne.s32.totalorder %s304, %s320
      %p322 = scmp.eq.s32.totalorder %s34, 0
      %p323 = por %p321, %p322
      %s324 = ssub.s32 %s36, %s43
      %p325 = scmp.eq.s32.totalorder %s324, 0
      %s327 = sadd.s32 %s326, 1
      %s328 = scalar_select %p325, %s326, %s327
      %p331 = pneg %p325
      %p332 = scmp.eq.s32.totalorder %s28, 1
      %p333 = por %p331, %p332
      %p334 = scmp.ne.s32.totalorder %s326, %s329
      %p335 = scmp.eq.s32.totalorder %s28, 0
      %p336 = por %p334, %p335
      %p337 = scmp.ne.s32.totalorder %s326, %s329
      %p338 = scmp.eq.s32.totalorder %s33, 1
      %p339 = por %p337, %p338
      %p340 = scmp.ne.s32.totalorder %s329, %s330
      %p341 = scmp.eq.s32.totalorder %s33, 0
      %p342 = por %p340, %p341
      %p343 = scmp.ne.s32.totalorder %s329, %s330
      %p344 = scmp.eq.s32.totalorder %s34, 1
      %p345 = por %p343, %p344
      %p347 = scmp.ne.s32.totalorder %s330, %s346
      %p348 = scmp.eq.s32.totalorder %s34, 0
      %p349 = por %p347, %p348
      %s350 = ssub.s32 %s36, %s43
      %p351 = scmp.eq.s32.totalorder %s350, 0
      %s353 = sadd.s32 %s352, 1
      %s354 = scalar_select %p351, %s352, %s353
      %p357 = pneg %p351
      %p358 = scmp.eq.s32.totalorder %s28, 1
      %p359 = por %p357, %p358
      %p360 = scmp.ne.s32.totalorder %s352, %s355
      %p361 = scmp.eq.s32.totalorder %s28, 0
      %p362 = por %p360, %p361
      %p363 = scmp.ne.s32.totalorder %s352, %s355
      %p364 = scmp.eq.s32.totalorder %s33, 1
      %p365 = por %p363, %p364
      %p366 = scmp.ne.s32.totalorder %s355, %s356
      %p367 = scmp.eq.s32.totalorder %s33, 0
      %p368 = por %p366, %p367
      %p369 = scmp.ne.s32.totalorder %s355, %s356
      %p370 = scmp.eq.s32.totalorder %s34, 1
      %p371 = por %p369, %p370
      %p373 = scmp.ne.s32.totalorder %s356, %s372
      %p374 = scmp.eq.s32.totalorder %s34, 0
      %p375 = por %p373, %p374
      %s376 = ssub.s32 %s36, %s43
      %p377 = scmp.eq.s32.totalorder %s376, 0
      %s379 = sadd.s32 %s378, 1
      %s380 = scalar_select %p377, %s378, %s379
      %p383 = pneg %p377
      %p384 = scmp.eq.s32.totalorder %s28, 1
      %p385 = por %p383, %p384
      %p386 = scmp.ne.s32.totalorder %s378, %s381
      %p387 = scmp.eq.s32.totalorder %s28, 0
      %p388 = por %p386, %p387
      %p389 = scmp.ne.s32.totalorder %s378, %s381
      %p390 = scmp.eq.s32.totalorder %s33, 1
      %p391 = por %p389, %p390
      %p392 = scmp.ne.s32.totalorder %s381, %s382
      %p393 = scmp.eq.s32.totalorder %s33, 0
      %p394 = por %p392, %p393
      %p395 = scmp.ne.s32.totalorder %s381, %s382
      %p396 = scmp.eq.s32.totalorder %s34, 1
      %p397 = por %p395, %p396
      %p399 = scmp.ne.s32.totalorder %s382, %s398
      %p400 = scmp.eq.s32.totalorder %s34, 0
      %p401 = por %p399, %p400
      %s402 = ssub.s32 %s36, %s43
      %p403 = scmp.eq.s32.totalorder %s402, 0
      %s405 = sadd.s32 %s404, 1
      %s406 = scalar_select %p403, %s404, %s405
      %p409 = pneg %p403
      %p410 = scmp.eq.s32.totalorder %s28, 1
      %p411 = por %p409, %p410
      %p412 = scmp.ne.s32.totalorder %s404, %s407
      %p413 = scmp.eq.s32.totalorder %s28, 0
      %p414 = por %p412, %p413
      %p415 = scmp.ne.s32.totalorder %s404, %s407
      %p416 = scmp.eq.s32.totalorder %s33, 1
      %p417 = por %p415, %p416
      %p418 = scmp.ne.s32.totalorder %s407, %s408
      %p419 = scmp.eq.s32.totalorder %s33, 0
      %p420 = por %p418, %p419
      %p421 = scmp.ne.s32.totalorder %s407, %s408
      %p422 = scmp.eq.s32.totalorder %s34, 1
      %p423 = por %p421, %p422
      %p425 = scmp.ne.s32.totalorder %s408, %s424
      %p426 = scmp.eq.s32.totalorder %s34, 0
      %p427 = por %p425, %p426
      %s428 = ssub.s32 %s36, %s43
      %p429 = scmp.eq.s32.totalorder %s428, 0
      %s431 = sadd.s32 %s430, 1
      %s432 = scalar_select %p429, %s430, %s431
      %p435 = pneg %p429
      %p436 = scmp.eq.s32.totalorder %s28, 1
      %p437 = por %p435, %p436
      %p438 = scmp.ne.s32.totalorder %s430, %s433
      %p439 = scmp.eq.s32.totalorder %s28, 0
      %p440 = por %p438, %p439
      %p441 = scmp.ne.s32.totalorder %s430, %s433
      %p442 = scmp.eq.s32.totalorder %s33, 1
      %p443 = por %p441, %p442
      %p444 = scmp.ne.s32.totalorder %s433, %s434
      %p445 = scmp.eq.s32.totalorder %s33, 0
      %p446 = por %p444, %p445
      %p447 = scmp.ne.s32.totalorder %s433, %s434
      %p448 = scmp.eq.s32.totalorder %s34, 1
      %p449 = por %p447, %p448
      %p451 = scmp.ne.s32.totalorder %s434, %s450
      %p452 = scmp.eq.s32.totalorder %s34, 0
      %p453 = por %p451, %p452
      %s455 = sadd.s32 %s454, 1
      %p458 = scmp.eq.s32.totalorder %s28, 1
      %p459 = scmp.ne.s32.totalorder %s454, %s456
      %p460 = scmp.eq.s32.totalorder %s28, 0
      %p461 = por %p459, %p460
      %p462 = scmp.ne.s32.totalorder %s454, %s456
      %p463 = scmp.eq.s32.totalorder %s33, 1
      %p464 = por %p462, %p463
      %p465 = scmp.ne.s32.totalorder %s456, %s457
      %p466 = scmp.eq.s32.totalorder %s33, 0
      %p467 = por %p465, %p466
      %p468 = scmp.ne.s32.totalorder %s456, %s457
      %p469 = scmp.eq.s32.totalorder %s34, 1
      %p470 = por %p468, %p469
      %p472 = scmp.ne.s32.totalorder %s457, %s471
      %p473 = scmp.eq.s32.totalorder %s34, 0
      %p474 = por %p472, %p473
      %s476 = sadd.s32 %s475, 1
      %p479 = scmp.eq.s32.totalorder %s28, 1
      %p480 = scmp.ne.s32.totalorder %s475, %s477
      %p481 = scmp.eq.s32.totalorder %s28, 0
      %p482 = por %p480, %p481
      %p483 = scmp.ne.s32.totalorder %s475, %s477
      %p484 = scmp.eq.s32.totalorder %s33, 1
      %p485 = por %p483, %p484
      %p486 = scmp.ne.s32.totalorder %s477, %s478
      %p487 = scmp.eq.s32.totalorder %s33, 0
      %p488 = por %p486, %p487
      %p489 = scmp.ne.s32.totalorder %s477, %s478
      %p490 = scmp.eq.s32.totalorder %s34, 1
      %p491 = por %p489, %p490
      %p493 = scmp.ne.s32.totalorder %s478, %s492
      %p494 = scmp.eq.s32.totalorder %s34, 0
      %p495 = por %p493, %p494
      %s496 = ssub.s32 %s35, %s47
      %p497 = scmp.eq.s32.totalorder %s496, 0
      %s499 = sadd.s32 %s498, 1
      %s500 = scalar_select %p497, %s498, %s499
      %p503 = pneg %p497
      %p504 = scmp.eq.s32.totalorder %s28, 1
      %p505 = por %p503, %p504
      %p506 = scmp.ne.s32.totalorder %s498, %s501
      %p507 = scmp.eq.s32.totalorder %s28, 0
      %p508 = por %p506, %p507
      %p509 = scmp.ne.s32.totalorder %s498, %s501
      %p510 = scmp.eq.s32.totalorder %s33, 1
      %p511 = por %p509, %p510
      %p512 = scmp.ne.s32.totalorder %s501, %s502
      %p513 = scmp.eq.s32.totalorder %s33, 0
      %p514 = por %p512, %p513
      %p515 = scmp.ne.s32.totalorder %s501, %s502
      %p516 = scmp.eq.s32.totalorder %s34, 1
      %p517 = por %p515, %p516
      %p519 = scmp.ne.s32.totalorder %s502, %s518
      %p520 = scmp.eq.s32.totalorder %s34, 0
      %p521 = por %p519, %p520
      %p522 = scmp.le.s32.totalorder 1, %s28
      %p523 = scmp.lt.s32.totalorder %s28, 3
      %p524 = pnand %p522, %p523
      %p525 = pneg %p524
      // Predicated region
      $region9: #{tpu_custom_call.1} parent=5 // pred_check
        _
      $region10: #{tpu_custom_call.1} parent=5 // pred_check_branch
        %527 = sbr.rel (%p524) target = $region12
      $region11: #{tpu_custom_call.1} parent=5 // pred_region
        %s528 = ssub.s32 %s28, 1
        // Predicated region
        $region13: #{tpu_custom_call.1} parent=11 // pred_check
          %p529 = pneg %p66
        $region14: #{tpu_custom_call.1} parent=11 // pred_check_branch
          %531 = sbr.rel (%p529) target = $region16
        $region15: #{tpu_custom_call.1} parent=11 // pred_region
          %s532 = smul.u32 2, %s37
          %s534 = ssub.s32 256, 256
          %535 = vsyncadd [#allocation4], %s534
          %s536 = smul.addr %s532, 128
          %s537 = scalar_lea.hbm %s0, %s536
          %s538 = sshll.u32 [#allocation3], 4
          %s539 = int_to_ptr.vmem [resolvable:$true] %s538
          %544 = dma.hbm_to_vmem [thread:$0]  %s537, 256, %s539, [#allocation4], 128, 128, 8
        $region16: #{tpu_custom_call.1} parent=11 // pred_fallthru
          _
        // Predicated region
        $region17: #{tpu_custom_call.1} parent=11 // pred_check
          %p545 = pneg %p92
        $region18: #{tpu_custom_call.1} parent=11 // pred_check_branch
          %547 = sbr.rel (%p545) target = $region20
        $region19: #{tpu_custom_call.1} parent=11 // pred_region
          %s548 = smul.u32 2, %s37
          %s550 = ssub.s32 32, 32
          %551 = vsyncadd [#allocation7], %s550
          %s552 = smul.addr %s548, 16
          %s553 = scalar_lea.hbm %s1, %s552
          %s554 = sshll.u32 [#allocation6], 4
          %s555 = int_to_ptr.vmem [resolvable:$true] %s554
          %560 = dma.hbm_to_vmem [thread:$0]  %s553, 32, %s555, [#allocation7], 16, 16, 1
        $region20: #{tpu_custom_call.1} parent=11 // pred_fallthru
          _
        // Predicated region
        $region21: #{tpu_custom_call.1} parent=11 // pred_check
          %p561 = pneg %p113
        $region22: #{tpu_custom_call.1} parent=11 // pred_check_branch
          %563 = sbr.rel (%p561) target = $region24
        $region23: #{tpu_custom_call.1} parent=11 // pred_region
          %s565 = ssub.s32 16, 16
          %566 = vsyncadd [#allocation7], %s565
          %s568 = sshll.u32 [#allocation8], 4
          %s569 = int_to_ptr.vmem [resolvable:$true] %s568
          %571 = dma.hbm_to_vmem [thread:$0]  %s2, 16, %s569, [#allocation7]
        $region24: #{tpu_custom_call.1} parent=11 // pred_fallthru
          _
        // Predicated region
        $region25: #{tpu_custom_call.1} parent=11 // pred_check
          %p572 = pneg %p134
        $region26: #{tpu_custom_call.1} parent=11 // pred_check_branch
          %574 = sbr.rel (%p572) target = $region28
        $region27: #{tpu_custom_call.1} parent=11 // pred_region
          %s576 = ssub.s32 16, 16
          %577 = vsyncadd [#allocation10], %s576
          %s579 = sshll.u32 [#allocation9], 4
          %s580 = int_to_ptr.vmem [resolvable:$true] %s579
          %582 = dma.hbm_to_vmem [thread:$0]  %s3, 16, %s580, [#allocation10]
        $region28: #{tpu_custom_call.1} parent=11 // pred_fallthru
          _
        // Predicated region
        $region29: #{tpu_custom_call.1} parent=11 // pred_check
          %p583 = pneg %p467
        $region30: #{tpu_custom_call.1} parent=11 // pred_check_branch
          %585 = sbr.rel (%p583) target = $region32
        $region31: #{tpu_custom_call.1} parent=11 // pred_region
          %s587 = ssub.s32 256, 256
          %588 = vsyncadd [#allocation7], %s587
          %s589 = sshll.u32 [#allocation23], 4
          %s590 = int_to_ptr.vmem [resolvable:$true] %s589
          %595 = dma.hbm_to_vmem [thread:$0]  %s16, 256, %s590, [#allocation7], 64, 64, 4
        $region32: #{tpu_custom_call.1} parent=11 // pred_fallthru
          _
        // Predicated region
        $region33: #{tpu_custom_call.1} parent=11 // pred_check
          %p596 = pneg %p488
        $region34: #{tpu_custom_call.1} parent=11 // pred_check_branch
          %598 = sbr.rel (%p596) target = $region36
        $region35: #{tpu_custom_call.1} parent=11 // pred_region
          %s600 = ssub.s32 16, 16
          %601 = vsyncadd [#allocation10], %s600
          %s603 = sshll.u32 [#allocation24], 4
          %s604 = int_to_ptr.vmem [resolvable:$true] %s603
          %606 = dma.hbm_to_vmem [thread:$0]  %s17, 16, %s604, [#allocation10]
        $region36: #{tpu_custom_call.1} parent=11 // pred_fallthru
          _
      $region12: #{tpu_custom_call.1} parent=5 // pred_fallthru
        _
      %p607 = scmp.lt.s32.totalorder %s28, 2
      // Predicated region
      $region37: #{tpu_custom_call.1} parent=5 // pred_check
        %p608 = pneg %p607
      $region38: #{tpu_custom_call.1} parent=5 // pred_check_branch
        %610 = sbr.rel (%p608) target = $region40
      $region39: #{tpu_custom_call.1} parent=5 // pred_region
        // Predicated region
        $region41: #{tpu_custom_call.1} parent=39 // pred_check
          %p611 = pneg %p154
        $region42: #{tpu_custom_call.1} parent=39 // pred_check_branch
          %613 = sbr.rel (%p611) target = $region44
        $region43: #{tpu_custom_call.1} parent=39 // pred_region
          %s614 = sand.u32 %s28, 1
          %s615 = scalar_lea.sflag [#allocation4], %s614
          %s616 = sand.u32 %s144, 1
          %s617 = smul.addr %s616, 16
          %s618 = scalar_lea.vmem [#allocation11], %s617
          %s620 = ssub.s32 256, 256
          %621 = vsyncadd %s615, %s620
          %s622 = smul.addr %s36, 4
          %s623 = smul.addr %s622, 64
          %s624 = scalar_lea.hbm %s4, %s623
          %s625 = sshll.u32 %s618, 4
          %s626 = int_to_ptr.vmem [resolvable:$true] %s625
          %631 = dma.hbm_to_vmem [thread:$0]  %s624, 256, %s626, %s615, 64, 64, 4
        $region44: #{tpu_custom_call.1} parent=39 // pred_fallthru
          _
        // Predicated region
        $region45: #{tpu_custom_call.1} parent=39 // pred_check
          %p632 = pneg %p180
        $region46: #{tpu_custom_call.1} parent=39 // pred_check_branch
          %634 = sbr.rel (%p632) target = $region48
        $region47: #{tpu_custom_call.1} parent=39 // pred_region
          %s635 = sand.u32 %s28, 1
          %s636 = scalar_lea.sflag [#allocation4], %s635
          %s637 = sand.u32 %s170, 1
          %s638 = scalar_lea.vmem [#allocation12], %s637
          %s640 = ssub.s32 16, 16
          %641 = vsyncadd %s636, %s640
          %s642 = smul.addr %s36, 16
          %s643 = scalar_lea.hbm %s5, %s642
          %s645 = sshll.u32 %s638, 4
          %s646 = int_to_ptr.vmem [resolvable:$true] %s645
          %648 = dma.hbm_to_vmem [thread:$0]  %s643, 16, %s646, %s636
        $region48: #{tpu_custom_call.1} parent=39 // pred_fallthru
          _
        // Predicated region
        $region49: #{tpu_custom_call.1} parent=39 // pred_check
          %p649 = pneg %p206
        $region50: #{tpu_custom_call.1} parent=39 // pred_check_branch
          %651 = sbr.rel (%p649) target = $region52
        $region51: #{tpu_custom_call.1} parent=39 // pred_region
          %s652 = sand.u32 %s28, 1
          %s653 = scalar_lea.sflag [#allocation4], %s652
          %s654 = sand.u32 %s196, 1
          %s655 = smul.addr %s654, 16
          %s656 = scalar_lea.vmem [#allocation13], %s655
          %s658 = ssub.s32 256, 256
          %659 = vsyncadd %s653, %s658
          %s660 = smul.addr %s36, 4
          %s661 = smul.addr %s660, 64
          %s662 = scalar_lea.hbm %s6, %s661
          %s663 = sshll.u32 %s656, 4
          %s664 = int_to_ptr.vmem [resolvable:$true] %s663
          %669 = dma.hbm_to_vmem [thread:$0]  %s662, 256, %s664, %s653, 64, 64, 4
        $region52: #{tpu_custom_call.1} parent=39 // pred_fallthru
          _
        // Predicated region
        $region53: #{tpu_custom_call.1} parent=39 // pred_check
          %p670 = pneg %p232
        $region54: #{tpu_custom_call.1} parent=39 // pred_check_branch
          %672 = sbr.rel (%p670) target = $region56
        $region55: #{tpu_custom_call.1} parent=39 // pred_region
          %s673 = sand.u32 %s28, 1
          %s674 = scalar_lea.sflag [#allocation4], %s673
          %s675 = sand.u32 %s222, 1
          %s676 = scalar_lea.vmem [#allocation14], %s675
          %s678 = ssub.s32 16, 16
          %679 = vsyncadd %s674, %s678
          %s680 = smul.addr %s36, 16
          %s681 = scalar_lea.hbm %s7, %s680
          %s683 = sshll.u32 %s676, 4
          %s684 = int_to_ptr.vmem [resolvable:$true] %s683
          %686 = dma.hbm_to_vmem [thread:$0]  %s681, 16, %s684, %s674
        $region56: #{tpu_custom_call.1} parent=39 // pred_fallthru
          _
        // Predicated region
        $region57: #{tpu_custom_call.1} parent=39 // pred_check
          %p687 = pneg %p258
        $region58: #{tpu_custom_call.1} parent=39 // pred_check_branch
          %689 = sbr.rel (%p687) target = $region60
        $region59: #{tpu_custom_call.1} parent=39 // pred_region
          %s690 = sand.u32 %s28, 1
          %s691 = scalar_lea.sflag [#allocation4], %s690
          %s692 = sand.u32 %s248, 1
          %s693 = scalar_lea.vmem [#allocation15], %s692
          %s695 = ssub.s32 16, 16
          %696 = vsyncadd %s691, %s695
          %s697 = smul.addr %s36, 16
          %s698 = scalar_lea.hbm %s8, %s697
          %s700 = sshll.u32 %s693, 4
          %s701 = int_to_ptr.vmem [resolvable:$true] %s700
          %703 = dma.hbm_to_vmem [thread:$0]  %s698, 16, %s701, %s691
        $region60: #{tpu_custom_call.1} parent=39 // pred_fallthru
          _
        // Predicated region
        $region61: #{tpu_custom_call.1} parent=39 // pred_check
          %p704 = pneg %p284
        $region62: #{tpu_custom_call.1} parent=39 // pred_check_branch
          %706 = sbr.rel (%p704) target = $region64
        $region63: #{tpu_custom_call.1} parent=39 // pred_region
          %s707 = sand.u32 %s28, 1
          %s708 = scalar_lea.sflag [#allocation4], %s707
          %s709 = sand.u32 %s274, 1
          %s710 = scalar_lea.vmem [#allocation16], %s709
          %s712 = ssub.s32 16, 16
          %713 = vsyncadd %s708, %s712
          %s714 = smul.addr %s36, 16
          %s715 = scalar_lea.hbm %s9, %s714
          %s717 = sshll.u32 %s710, 4
          %s718 = int_to_ptr.vmem [resolvable:$true] %s717
          %720 = dma.hbm_to_vmem [thread:$0]  %s715, 16, %s718, %s708
        $region64: #{tpu_custom_call.1} parent=39 // pred_fallthru
          _
        // Predicated region
        $region65: #{tpu_custom_call.1} parent=39 // pred_check
          %p721 = pneg %p310
        $region66: #{tpu_custom_call.1} parent=39 // pred_check_branch
          %723 = sbr.rel (%p721) target = $region68
        $region67: #{tpu_custom_call.1} parent=39 // pred_region
          %s724 = sand.u32 %s28, 1
          %s725 = scalar_lea.sflag [#allocation4], %s724
          %s726 = sand.u32 %s300, 1
          %s727 = smul.addr %s726, 16
          %s728 = scalar_lea.vmem [#allocation17], %s727
          %s730 = ssub.s32 256, 256
          %731 = vsyncadd %s725, %s730
          %s732 = smul.addr %s36, 4
          %s733 = smul.addr %s732, 64
          %s734 = scalar_lea.hbm %s10, %s733
          %s735 = sshll.u32 %s728, 4
          %s736 = int_to_ptr.vmem [resolvable:$true] %s735
          %741 = dma.hbm_to_vmem [thread:$0]  %s734, 256, %s736, %s725, 64, 64, 4
        $region68: #{tpu_custom_call.1} parent=39 // pred_fallthru
          _
        // Predicated region
        $region69: #{tpu_custom_call.1} parent=39 // pred_check
          %p742 = pneg %p336
        $region70: #{tpu_custom_call.1} parent=39 // pred_check_branch
          %744 = sbr.rel (%p742) target = $region72
        $region71: #{tpu_custom_call.1} parent=39 // pred_region
          %s745 = sand.u32 %s28, 1
          %s746 = scalar_lea.sflag [#allocation4], %s745
          %s747 = sand.u32 %s326, 1
          %s748 = scalar_lea.vmem [#allocation18], %s747
          %s750 = ssub.s32 16, 16
          %751 = vsyncadd %s746, %s750
          %s752 = smul.addr %s36, 16
          %s753 = scalar_lea.hbm %s11, %s752
          %s755 = sshll.u32 %s748, 4
          %s756 = int_to_ptr.vmem [resolvable:$true] %s755
          %758 = dma.hbm_to_vmem [thread:$0]  %s753, 16, %s756, %s746
        $region72: #{tpu_custom_call.1} parent=39 // pred_fallthru
          _
        // Predicated region
        $region73: #{tpu_custom_call.1} parent=39 // pred_check
          %p759 = pneg %p362
        $region74: #{tpu_custom_call.1} parent=39 // pred_check_branch
          %761 = sbr.rel (%p759) target = $region76
        $region75: #{tpu_custom_call.1} parent=39 // pred_region
          %s762 = sand.u32 %s28, 1
          %s763 = scalar_lea.sflag [#allocation4], %s762
          %s764 = sand.u32 %s352, 1
          %s765 = smul.addr %s764, 32
          %s766 = scalar_lea.vmem [#allocation19], %s765
          %s768 = ssub.s32 512, 512
          %769 = vsyncadd %s763, %s768
          %s770 = smul.addr %s36, 8
          %s771 = smul.addr %s770, 64
          %s772 = scalar_lea.hbm %s12, %s771
          %s773 = sshll.u32 %s766, 4
          %s774 = int_to_ptr.vmem [resolvable:$true] %s773
          %779 = dma.hbm_to_vmem [thread:$0]  %s772, 512, %s774, %s763, 64, 64, 4
        $region76: #{tpu_custom_call.1} parent=39 // pred_fallthru
          _
        // Predicated region
        $region77: #{tpu_custom_call.1} parent=39 // pred_check
          %p780 = pneg %p388
        $region78: #{tpu_custom_call.1} parent=39 // pred_check_branch
          %782 = sbr.rel (%p780) target = $region80
        $region79: #{tpu_custom_call.1} parent=39 // pred_region
          %s783 = sand.u32 %s28, 1
          %s784 = scalar_lea.sflag [#allocation4], %s783
          %s785 = sand.u32 %s378, 1
          %s786 = scalar_lea.vmem [#allocation20], %s785
          %s788 = ssub.s32 16, 16
          %789 = vsyncadd %s784, %s788
          %s790 = smul.addr %s36, 16
          %s791 = scalar_lea.hbm %s13, %s790
          %s793 = sshll.u32 %s786, 4
          %s794 = int_to_ptr.vmem [resolvable:$true] %s793
          %796 = dma.hbm_to_vmem [thread:$0]  %s791, 16, %s794, %s784
        $region80: #{tpu_custom_call.1} parent=39 // pred_fallthru
          _
        // Predicated region
        $region81: #{tpu_custom_call.1} parent=39 // pred_check
          %p797 = pneg %p414
        $region82: #{tpu_custom_call.1} parent=39 // pred_check_branch
          %799 = sbr.rel (%p797) target = $region84
        $region83: #{tpu_custom_call.1} parent=39 // pred_region
          %s800 = sand.u32 %s28, 1
          %s801 = scalar_lea.sflag [#allocation4], %s800
          %s802 = sand.u32 %s404, 1
          %s803 = scalar_lea.vmem [#allocation21], %s802
          %s805 = ssub.s32 16, 16
          %806 = vsyncadd %s801, %s805
          %s807 = smul.addr %s36, 16
          %s808 = scalar_lea.hbm %s14, %s807
          %s810 = sshll.u32 %s803, 4
          %s811 = int_to_ptr.vmem [resolvable:$true] %s810
          %813 = dma.hbm_to_vmem [thread:$0]  %s808, 16, %s811, %s801
        $region84: #{tpu_custom_call.1} parent=39 // pred_fallthru
          _
        // Predicated region
        $region85: #{tpu_custom_call.1} parent=39 // pred_check
          %p814 = pneg %p440
        $region86: #{tpu_custom_call.1} parent=39 // pred_check_branch
          %816 = sbr.rel (%p814) target = $region88
        $region87: #{tpu_custom_call.1} parent=39 // pred_region
          %s817 = sand.u32 %s28, 1
          %s818 = scalar_lea.sflag [#allocation4], %s817
          %s819 = sand.u32 %s430, 1
          %s820 = scalar_lea.vmem [#allocation22], %s819
          %s822 = ssub.s32 16, 16
          %823 = vsyncadd %s818, %s822
          %s824 = smul.addr %s36, 16
          %s825 = scalar_lea.hbm %s15, %s824
          %s827 = sshll.u32 %s820, 4
          %s828 = int_to_ptr.vmem [resolvable:$true] %s827
          %830 = dma.hbm_to_vmem [thread:$0]  %s825, 16, %s828, %s818
        $region88: #{tpu_custom_call.1} parent=39 // pred_fallthru
          _
      $region40: #{tpu_custom_call.1} parent=5 // pred_fallthru
        _
      %p831 = scmp.le.s32.totalorder 1, %s28
      %p832 = scmp.lt.s32.totalorder %s28, 3
      %p833 = pnand %p831, %p832
      %p834 = pneg %p833
      // Predicated region
      $region89: #{tpu_custom_call.1} parent=5 // pred_check
        _
      $region90: #{tpu_custom_call.1} parent=5 // pred_check_branch
        %836 = sbr.rel (%p833) target = $region92
      $region91: #{tpu_custom_call.1} parent=5 // pred_region
        %s837 = ssub.s32 %s28, 1
        // Predicated region
        $region93: #{tpu_custom_call.1} parent=91 // pred_check
          %p838 = pneg %p66
        $region94: #{tpu_custom_call.1} parent=91 // pred_check_branch
          %840 = sbr.rel (%p838) target = $region96
        $region95: #{tpu_custom_call.1} parent=91 // pred_region
          %841 = dma.done [#allocation4], 256
        $region96: #{tpu_custom_call.1} parent=91 // pred_fallthru
          _
        // Predicated region
        $region97: #{tpu_custom_call.1} parent=91 // pred_check
          %p842 = pneg %p92
        $region98: #{tpu_custom_call.1} parent=91 // pred_check_branch
          %844 = sbr.rel (%p842) target = $region100
        $region99: #{tpu_custom_call.1} parent=91 // pred_region
          %845 = dma.done [#allocation7], 32
        $region100: #{tpu_custom_call.1} parent=91 // pred_fallthru
          _
        // Predicated region
        $region101: #{tpu_custom_call.1} parent=91 // pred_check
          %p846 = pneg %p113
        $region102: #{tpu_custom_call.1} parent=91 // pred_check_branch
          %848 = sbr.rel (%p846) target = $region104
        $region103: #{tpu_custom_call.1} parent=91 // pred_region
          %849 = dma.done [#allocation7], 16
        $region104: #{tpu_custom_call.1} parent=91 // pred_fallthru
          _
        // Predicated region
        $region105: #{tpu_custom_call.1} parent=91 // pred_check
          %p850 = pneg %p134
        $region106: #{tpu_custom_call.1} parent=91 // pred_check_branch
          %852 = sbr.rel (%p850) target = $region108
        $region107: #{tpu_custom_call.1} parent=91 // pred_region
          %853 = dma.done [#allocation10], 16
        $region108: #{tpu_custom_call.1} parent=91 // pred_fallthru
          _
        %s854 = sand.u32 %s33, 1
        %s855 = scalar_lea.sflag [#allocation4], %s854
        %s856 = sand.u32 %s147, 1
        %s857 = smul.addr %s856, 16
        %s858 = scalar_lea.vmem [#allocation11], %s857
        // Predicated region
        $region109: #{tpu_custom_call.1} parent=91 // pred_check
          %p859 = pneg %p160
        $region110: #{tpu_custom_call.1} parent=91 // pred_check_branch
          %861 = sbr.rel (%p859) target = $region112
        $region111: #{tpu_custom_call.1} parent=91 // pred_region
          %862 = dma.done %s855, 256
        $region112: #{tpu_custom_call.1} parent=91 // pred_fallthru
          _
        %s863 = sand.u32 %s33, 1
        %s864 = scalar_lea.sflag [#allocation4], %s863
        %s865 = sand.u32 %s173, 1
        %s866 = scalar_lea.vmem [#allocation12], %s865
        // Predicated region
        $region113: #{tpu_custom_call.1} parent=91 // pred_check
          %p867 = pneg %p186
        $region114: #{tpu_custom_call.1} parent=91 // pred_check_branch
          %869 = sbr.rel (%p867) target = $region116
        $region115: #{tpu_custom_call.1} parent=91 // pred_region
          %870 = dma.done %s864, 16
        $region116: #{tpu_custom_call.1} parent=91 // pred_fallthru
          _
        %s871 = sand.u32 %s33, 1
        %s872 = scalar_lea.sflag [#allocation4], %s871
        %s873 = sand.u32 %s199, 1
        %s874 = smul.addr %s873, 16
        %s875 = scalar_lea.vmem [#allocation13], %s874
        // Predicated region
        $region117: #{tpu_custom_call.1} parent=91 // pred_check
          %p876 = pneg %p212
        $region118: #{tpu_custom_call.1} parent=91 // pred_check_branch
          %878 = sbr.rel (%p876) target = $region120
        $region119: #{tpu_custom_call.1} parent=91 // pred_region
          %879 = dma.done %s872, 256
        $region120: #{tpu_custom_call.1} parent=91 // pred_fallthru
          _
        %s880 = sand.u32 %s33, 1
        %s881 = scalar_lea.sflag [#allocation4], %s880
        %s882 = sand.u32 %s225, 1
        %s883 = scalar_lea.vmem [#allocation14], %s882
        // Predicated region
        $region121: #{tpu_custom_call.1} parent=91 // pred_check
          %p884 = pneg %p238
        $region122: #{tpu_custom_call.1} parent=91 // pred_check_branch
          %886 = sbr.rel (%p884) target = $region124
        $region123: #{tpu_custom_call.1} parent=91 // pred_region
          %887 = dma.done %s881, 16
        $region124: #{tpu_custom_call.1} parent=91 // pred_fallthru
          _
        %s888 = sand.u32 %s33, 1
        %s889 = scalar_lea.sflag [#allocation4], %s888
        %s890 = sand.u32 %s251, 1
        %s891 = scalar_lea.vmem [#allocation15], %s890
        // Predicated region
        $region125: #{tpu_custom_call.1} parent=91 // pred_check
          %p892 = pneg %p264
        $region126: #{tpu_custom_call.1} parent=91 // pred_check_branch
          %894 = sbr.rel (%p892) target = $region128
        $region127: #{tpu_custom_call.1} parent=91 // pred_region
          %895 = dma.done %s889, 16
        $region128: #{tpu_custom_call.1} parent=91 // pred_fallthru
          _
        %s896 = sand.u32 %s33, 1
        %s897 = scalar_lea.sflag [#allocation4], %s896
        %s898 = sand.u32 %s277, 1
        %s899 = scalar_lea.vmem [#allocation16], %s898
        // Predicated region
        $region129: #{tpu_custom_call.1} parent=91 // pred_check
          %p900 = pneg %p290
        $region130: #{tpu_custom_call.1} parent=91 // pred_check_branch
          %902 = sbr.rel (%p900) target = $region132
        $region131: #{tpu_custom_call.1} parent=91 // pred_region
          %903 = dma.done %s897, 16
        $region132: #{tpu_custom_call.1} parent=91 // pred_fallthru
          _
        %s904 = sand.u32 %s33, 1
        %s905 = scalar_lea.sflag [#allocation4], %s904
        %s906 = sand.u32 %s303, 1
        %s907 = smul.addr %s906, 16
        %s908 = scalar_lea.vmem [#allocation17], %s907
        // Predicated region
        $region133: #{tpu_custom_call.1} parent=91 // pred_check
          %p909 = pneg %p316
        $region134: #{tpu_custom_call.1} parent=91 // pred_check_branch
          %911 = sbr.rel (%p909) target = $region136
        $region135: #{tpu_custom_call.1} parent=91 // pred_region
          %912 = dma.done %s905, 256
        $region136: #{tpu_custom_call.1} parent=91 // pred_fallthru
          _
        %s913 = sand.u32 %s33, 1
        %s914 = scalar_lea.sflag [#allocation4], %s913
        %s915 = sand.u32 %s329, 1
        %s916 = scalar_lea.vmem [#allocation18], %s915
        // Predicated region
        $region137: #{tpu_custom_call.1} parent=91 // pred_check
          %p917 = pneg %p342
        $region138: #{tpu_custom_call.1} parent=91 // pred_check_branch
          %919 = sbr.rel (%p917) target = $region140
        $region139: #{tpu_custom_call.1} parent=91 // pred_region
          %920 = dma.done %s914, 16
        $region140: #{tpu_custom_call.1} parent=91 // pred_fallthru
          _
        %s921 = sand.u32 %s33, 1
        %s922 = scalar_lea.sflag [#allocation4], %s921
        %s923 = sand.u32 %s355, 1
        %s924 = smul.addr %s923, 32
        %s925 = scalar_lea.vmem [#allocation19], %s924
        // Predicated region
        $region141: #{tpu_custom_call.1} parent=91 // pred_check
          %p926 = pneg %p368
        $region142: #{tpu_custom_call.1} parent=91 // pred_check_branch
          %928 = sbr.rel (%p926) target = $region144
        $region143: #{tpu_custom_call.1} parent=91 // pred_region
          %929 = dma.done %s922, 512
        $region144: #{tpu_custom_call.1} parent=91 // pred_fallthru
          _
        %s930 = sand.u32 %s33, 1
        %s931 = scalar_lea.sflag [#allocation4], %s930
        %s932 = sand.u32 %s381, 1
        %s933 = scalar_lea.vmem [#allocation20], %s932
        // Predicated region
        $region145: #{tpu_custom_call.1} parent=91 // pred_check
          %p934 = pneg %p394
        $region146: #{tpu_custom_call.1} parent=91 // pred_check_branch
          %936 = sbr.rel (%p934) target = $region148
        $region147: #{tpu_custom_call.1} parent=91 // pred_region
          %937 = dma.done %s931, 16
        $region148: #{tpu_custom_call.1} parent=91 // pred_fallthru
          _
        %s938 = sand.u32 %s33, 1
        %s939 = scalar_lea.sflag [#allocation4], %s938
        %s940 = sand.u32 %s407, 1
        %s941 = scalar_lea.vmem [#allocation21], %s940
        // Predicated region
        $region149: #{tpu_custom_call.1} parent=91 // pred_check
          %p942 = pneg %p420
        $region150: #{tpu_custom_call.1} parent=91 // pred_check_branch
          %944 = sbr.rel (%p942) target = $region152
        $region151: #{tpu_custom_call.1} parent=91 // pred_region
          %945 = dma.done %s939, 16
        $region152: #{tpu_custom_call.1} parent=91 // pred_fallthru
          _
        %s946 = sand.u32 %s33, 1
        %s947 = scalar_lea.sflag [#allocation4], %s946
        %s948 = sand.u32 %s433, 1
        %s949 = scalar_lea.vmem [#allocation22], %s948
        // Predicated region
        $region153: #{tpu_custom_call.1} parent=91 // pred_check
          %p950 = pneg %p446
        $region154: #{tpu_custom_call.1} parent=91 // pred_check_branch
          %952 = sbr.rel (%p950) target = $region156
        $region155: #{tpu_custom_call.1} parent=91 // pred_region
          %953 = dma.done %s947, 16
        $region156: #{tpu_custom_call.1} parent=91 // pred_fallthru
          _
        // Predicated region
        $region157: #{tpu_custom_call.1} parent=91 // pred_check
          %p954 = pneg %p467
        $region158: #{tpu_custom_call.1} parent=91 // pred_check_branch
          %956 = sbr.rel (%p954) target = $region160
        $region159: #{tpu_custom_call.1} parent=91 // pred_region
          %957 = dma.done [#allocation7], 256
        $region160: #{tpu_custom_call.1} parent=91 // pred_fallthru
          _
        // Predicated region
        $region161: #{tpu_custom_call.1} parent=91 // pred_check
          %p958 = pneg %p488
        $region162: #{tpu_custom_call.1} parent=91 // pred_check_branch
          %960 = sbr.rel (%p958) target = $region164
        $region163: #{tpu_custom_call.1} parent=91 // pred_region
          %961 = dma.done [#allocation10], 16
        $region164: #{tpu_custom_call.1} parent=91 // pred_fallthru
          _
        %p962 = pneg %p66
        %p963 = pneg %p63
        %p964 = pneg %p92
        %p965 = pneg %p89
        %p966 = pneg %p113
        %p967 = pneg %p110
        %p968 = pneg %p134
        %p969 = pneg %p131
        %s970 = sand.u32 %s33, 1
        %s971 = scalar_lea.sflag [#allocation4], %s970
        %s972 = sand.u32 %s147, 1
        %s973 = smul.addr %s972, 16
        %s974 = scalar_lea.vmem [#allocation11], %s973
        %p975 = pneg %p160
        %p976 = pneg %p157
        %s977 = sand.u32 %s33, 1
        %s978 = scalar_lea.sflag [#allocation4], %s977
        %s979 = sand.u32 %s173, 1
        %s980 = scalar_lea.vmem [#allocation12], %s979
        %p981 = pneg %p186
        %p982 = pneg %p183
        %s983 = sand.u32 %s33, 1
        %s984 = scalar_lea.sflag [#allocation4], %s983
        %s985 = sand.u32 %s199, 1
        %s986 = smul.addr %s985, 16
        %s987 = scalar_lea.vmem [#allocation13], %s986
        %p988 = pneg %p212
        %p989 = pneg %p209
        %s990 = sand.u32 %s33, 1
        %s991 = scalar_lea.sflag [#allocation4], %s990
        %s992 = sand.u32 %s225, 1
        %s993 = scalar_lea.vmem [#allocation14], %s992
        %p994 = pneg %p238
        %p995 = pneg %p235
        %s996 = sand.u32 %s33, 1
        %s997 = scalar_lea.sflag [#allocation4], %s996
        %s998 = sand.u32 %s251, 1
        %s999 = scalar_lea.vmem [#allocation15], %s998
        %p1000 = pneg %p264
        %p1001 = pneg %p261
        %s1002 = sand.u32 %s33, 1
        %s1003 = scalar_lea.sflag [#allocation4], %s1002
        %s1004 = sand.u32 %s277, 1
        %s1005 = scalar_lea.vmem [#allocation16], %s1004
        %p1006 = pneg %p290
        %p1007 = pneg %p287
        %s1008 = sand.u32 %s33, 1
        %s1009 = scalar_lea.sflag [#allocation4], %s1008
        %s1010 = sand.u32 %s303, 1
        %s1011 = smul.addr %s1010, 16
        %s1012 = scalar_lea.vmem [#allocation17], %s1011
        %p1013 = pneg %p316
        %p1014 = pneg %p313
        %s1015 = sand.u32 %s33, 1
        %s1016 = scalar_lea.sflag [#allocation4], %s1015
        %s1017 = sand.u32 %s329, 1
        %s1018 = scalar_lea.vmem [#allocation18], %s1017
        %p1019 = pneg %p342
        %p1020 = pneg %p339
        %s1021 = sand.u32 %s33, 1
        %s1022 = scalar_lea.sflag [#allocation4], %s1021
        %s1023 = sand.u32 %s355, 1
        %s1024 = smul.addr %s1023, 32
        %s1025 = scalar_lea.vmem [#allocation19], %s1024
        %p1026 = pneg %p368
        %p1027 = pneg %p365
        %s1028 = sand.u32 %s33, 1
        %s1029 = scalar_lea.sflag [#allocation4], %s1028
        %s1030 = sand.u32 %s381, 1
        %s1031 = scalar_lea.vmem [#allocation20], %s1030
        %p1032 = pneg %p394
        %p1033 = pneg %p391
        %s1034 = sand.u32 %s33, 1
        %s1035 = scalar_lea.sflag [#allocation4], %s1034
        %s1036 = sand.u32 %s407, 1
        %s1037 = scalar_lea.vmem [#allocation21], %s1036
        %p1038 = pneg %p420
        %p1039 = pneg %p417
        %s1040 = sand.u32 %s33, 1
        %s1041 = scalar_lea.sflag [#allocation4], %s1040
        %s1042 = sand.u32 %s433, 1
        %s1043 = scalar_lea.vmem [#allocation22], %s1042
        %p1044 = pneg %p446
        %p1045 = pneg %p443
        %p1046 = pneg %p467
        %p1047 = pneg %p464
        %p1048 = pneg %p488
        %p1049 = pneg %p485
        %p1050 = pneg %p514
        %p1051 = pneg %p511
        %s1052 = smul.u32 2, %s37
        %s1053 = smul.u32 2, %s37
        %s1054 = smul.u32 2, %s37
        %p1056 = scmp.eq.s32.totalorder %s38, 0
        // Predicated region
        $region165: #{tpu_custom_call.1} parent=91 // pred_check
          %p1057 = pneg %p1056
        $region166: #{tpu_custom_call.1} parent=91 // pred_check_branch
          %1059 = sbr.rel (%p1057) target = $region168
        $region167: #{tpu_custom_call.1} parent=91 // pred_region
          %v1060 = vld [vmem:[#allocation3] sm:$0xff]
          %v1061 = vld [vmem:[#allocation3 + $0x8] sm:$0xff]
          %v1062 = vld [vmem:[#allocation8] sm:$0x1]
          %v1063 = vld [vmem:[#allocation9] sm:$0x1]
          %vm1064 = vcmask 261120
          %v1065 = vsel %vm1064, %v1060, 0.0
          %1066 = vadd.xlane.f32.xlu0 %v1065
          %v1067 = vpop.xlane.xlu0 %1066
          %v1068 = vsel %vm1064, %v1061, 0.0
          %1069 = vadd.xlane.f32.xlu0 %v1068
          %v1070 = vpop.xlane.xlu0 %1069
          %v1071 = vrcp.pop 32.0
          %v1072 = vmul.f32 %v1067, %v1071
          %v1073 = vmul.f32 %v1070, %v1071
          %v1074 = vsub.f32 %v1060, %v1072
          %v1075 = vsub.f32 %v1061, %v1073
          %v1076 = vmul.f32 %v1074, %v1074
          %v1077 = vmul.f32 %v1075, %v1075
          %v1078 = vsel %vm1064, %v1076, 0.0
          %1079 = vadd.xlane.f32.xlu0 %v1078
          %v1080 = vpop.xlane.xlu0 %1079
          %v1081 = vsel %vm1064, %v1077, 0.0
          %1082 = vadd.xlane.f32.xlu0 %v1081
          %v1083 = vpop.xlane.xlu0 %1082
          %v1084 = vmul.f32 %v1080, %v1071
          %v1085 = vmul.f32 %v1083, %v1071
          %v1086 = vadd.f32 %v1084, 1e-05
          %v1087 = vadd.f32 %v1085, 1e-05
          %v1088 = vrsqrt.pop %v1086
          %v1089 = vrsqrt.pop %v1087
          %v1090 = vmul.f32 %v1074, %v1088
          %v1091 = vmul.f32 %v1075, %v1089
          %v1093 = vlaneseq
          %v1094 = vshrl.u32 %v1093, 7
          %v1095 = vsub.s32 0, %v1094
          %v1096 = vrot.slane %v1062, %v1095
          %v1098 = vmul.f32 %v1090, %v1096
          %v1099 = vmul.f32 %v1091, %v1096
          %v1101 = vlaneseq
          %v1102 = vshrl.u32 %v1101, 7
          %v1103 = vsub.s32 0, %v1102
          %v1104 = vrot.slane %v1063, %v1103
          %v1106 = vadd.f32 %v1098, %v1104
          %v1107 = vadd.f32 %v1099, %v1104
          %1108 = vst.msk [vmem:[#allocation2] sm:$0xff] %vm1064, %v1106
          %1109 = vst.msk [vmem:[#allocation2 + $0x8] sm:$0xff] %vm1064, %v1107
        $region168: #{tpu_custom_call.1} parent=91 // pred_fallthru
          _
        %v1110 = vld [vmem:[#allocation2] sm:$0xff]
        %v1111 = vld [vmem:[#allocation2 + $0x8] sm:$0xff]
        %v1112 = vpack.c.bf16 %v1111, %v1110
        %v1113 = vld [vmem:[%s858] sm:$0xf]
        %v1114 = vld [vmem:[%s858 + $0x4] sm:$0xf]
        %v1115 = vld [vmem:[%s858 + $0x8] sm:$0xf]
        %v1116 = vld [vmem:[%s858 + $0xc] sm:$0xf]
        %v1117 = vld [vmem:[%s866] sm:$0x1]
        %v1119 = vlaneseq
        %v1120 = vshrl.u32 %v1119, 7
        %v1121 = vsub.s32 0, %v1120
        %v1122 = vrot.slane %v1117, %v1121
        %v1128 = vunpack.c.l.b16 %v1113
        %v1129 = vunpack.c.l.b16 %v1114
        %v1130 = vunpack.c.l.b16 %v1115
        %v1131 = vunpack.c.l.b16 %v1116
        %v1132 = vpack.c.b16 %v1129, %v1128
        %v1133 = vpack.c.b16 %v1131, %v1130
        %vm1136 = vcmask 261120
        %v1138 = vsel %vm1136, %v1112, 0
        %1140 = vmatprep.subr.bf16.mxu0 0
        %1141 = vmatpush1.bf16.msra.mxu0 %v1132
        %1142 = vmatprep.subr.bf16.mxu0 0
        %1143 = vmatpush1.bf16.msra.mxu0 %v1133
        %1144 = vmatprep.subr.bf16.mxu0 0
        %1145 = vmatpush1.bf16.msra.mxu0 0
        %1146 = vmatprep.subr.bf16.mxu0 0
        %1147 = vmatpush1.bf16.msra.mxu0 0
        %1148 = vmatprep.subr.bf16.mxu0 0
        %1149 = vmatpush1.bf16.msra.mxu0 0
        %1150 = vmatprep.subr.bf16.mxu0 0
        %1151 = vmatpush1.bf16.msra.mxu0 0
        %1152 = vmatprep.subr.bf16.mxu0 0
        %1153 = vmatpush1.bf16.msra.mxu0 0
        %1154 = vmatprep.subr.bf16.mxu0 0
        %1155 = vmatpush1.bf16.msra.mxu0 0
        %1156 = vmatprep.subr.bf16.mxu0 0
        %1157 = vmatpush1.bf16.msra.mxu0 0
        %1158 = vmatprep.subr.bf16.mxu0 0
        %1159 = vmatpush1.bf16.msra.mxu0 0
        %1160 = vmatprep.subr.bf16.mxu0 0
        %1161 = vmatpush1.bf16.msra.mxu0 0
        %1162 = vmatprep.subr.bf16.mxu0 0
        %1163 = vmatpush1.bf16.msra.mxu0 0
        %1164 = vmatprep.subr.bf16.mxu0 0
        %1165 = vmatpush1.bf16.msra.mxu0 0
        %1166 = vmatprep.subr.bf16.mxu0 0
        %1167 = vmatpush1.bf16.msra.mxu0 0
        %1168 = vmatprep.subr.bf16.mxu0 0
        %1169 = vmatpush1.bf16.msra.mxu0 0
        %1170 = vmatprep.subr.bf16.mxu0 0
        %1171 = vmatpush1.bf16.msra.mxu0 0
        %1172 = vmatprep.mubr.bf16.mxu0 0
        %1173 = vmatmul.mubr.bf16.gmra.mrb[0].mxu0 %v1138
        %v1174 = vpop.f32.mrb[0].mxu0
        %v1175 = vadd.f32 %v1122, %v1174
        %v1176 = vpop.f32.mrb[0].mxu0
        %v1177 = vpop.f32.mrb[0].mxu0
        %v1178 = vadd.f32 %v1122, %v1177
        %v1179 = vpop.f32.mrb[0].mxu0
        %1180 = vdwg.mxu0
        %v1181 = vpack.c.bf16 %v1175, %v1175
        %v1182 = vld [vmem:[#allocation6] sm:$0x1]
        %v1184 = vlaneseq
        %v1185 = vshrl.u32 %v1184, 7
        %v1186 = vsub.s32 0, %v1185
        %v1187 = vrot.slane %v1182, %v1186
        %1190 = vrot.lane.b32.xlu0 %v1181, 96
        %v1191 = vpop.permute.xlu0 %1190
        %vm1192 = vcmask 64512
        %v1194 = vsel %vm1192, %v1181, 0
        %v1197 = vsel %vm1192, %v1191, 0
        %1199 = vmatprep.subr.bf16.mxu0 0
        %1200 = vmatpush1.bf16.xpose.msra.mxu0 %v1197
        %1201 = vmatprep.subr.bf16.mxu0 0
        %1202 = vmatpush1.bf16.xpose.msra.mxu0 0
        %1203 = vmatprep.subr.bf16.mxu0 0
        %1204 = vmatpush1.bf16.xpose.msra.mxu0 0
        %1205 = vmatprep.subr.bf16.mxu0 0
        %1206 = vmatpush1.bf16.xpose.msra.mxu0 0
        %1207 = vmatprep.subr.bf16.mxu0 0
        %1208 = vmatpush1.bf16.xpose.msra.mxu0 0
        %1209 = vmatprep.subr.bf16.mxu0 0
        %1210 = vmatpush1.bf16.xpose.msra.mxu0 0
        %1211 = vmatprep.subr.bf16.mxu0 0
        %1212 = vmatpush1.bf16.xpose.msra.mxu0 0
        %1213 = vmatprep.subr.bf16.mxu0 0
        %1214 = vmatpush1.bf16.xpose.msra.mxu0 0
        %1215 = vmatprep.subr.bf16.mxu0 0
        %1216 = vmatpush1.bf16.xpose.msra.mxu0 0
        %1217 = vmatprep.subr.bf16.mxu0 0
        %1218 = vmatpush1.bf16.xpose.msra.mxu0 0
        %1219 = vmatprep.subr.bf16.mxu0 0
        %1220 = vmatpush1.bf16.xpose.msra.mxu0 0
        %1221 = vmatprep.subr.bf16.mxu0 0
        %1222 = vmatpush1.bf16.xpose.msra.mxu0 0
        %1223 = vmatprep.subr.bf16.mxu0 0
        %1224 = vmatpush1.bf16.xpose.msra.mxu0 0
        %1225 = vmatprep.subr.bf16.mxu0 0
        %1226 = vmatpush1.bf16.xpose.msra.mxu0 0
        %1227 = vmatprep.subr.bf16.mxu0 0
        %1228 = vmatpush1.bf16.xpose.msra.mxu0 0
        %1229 = vmatprep.subr.bf16.mxu0 0
        %1230 = vmatpush1.bf16.xpose.msra.mxu0 0
        %1231 = vmatprep.mubr.bf16.mxu0 0
        %1232 = vmatmul.mubr.bf16.gmra.mrb[0].mxu0 %v1194
        %v1233 = vpop.f32.mrb[0].mxu0
        %v1234 = vadd.f32 %v1187, %v1233
        %v1235 = vpop.f32.mrb[0].mxu0
        %v1236 = vpop.f32.mrb[0].mxu0
        %v1237 = vpop.f32.mrb[0].mxu0
        %1238 = vdwg.mxu0
        %v1239 = vsel %vm1192, %v1234, -inf
        %1240 = vmax.xlane.f32.xlu0 %v1239
        %v1241 = vpop.xlane.xlu0 %1240
        %v1242 = vsub.f32 %v1234, %v1241
        %v1243 = vmul.f32 %v1242, 1.442695
        %v1244 = vpow.pop %v1243
        %v1245 = vsel %vm1192, %v1244, 0.0
        %1246 = vadd.xlane.f32.xlu0 %v1245
        %v1247 = vpop.xlane.xlu0 %1246
        %v1248 = vrcp.pop %v1247
        %v1249 = vmul.f32 %v1244, %v1248
        %v1250 = vpack.c.bf16 %v1249, %v1249
        %1251 = vrot.lane.b32.xlu0 %v1181, 64
        %v1252 = vpop.permute.xlu0 %1251
        %v1254 = vsel %vm1192, %v1250, 0
        %vm1256 = vcmask 1043456
        %v1258 = vsel %vm1256, %v1252, 0
        %1260 = vmatprep.subr.bf16.mxu0 0
        %1261 = vmatpush1.bf16.msra.mxu0 %v1258
        %1262 = vmatprep.subr.bf16.mxu0 0
        %1263 = vmatpush1.bf16.msra.mxu0 0
        %1264 = vmatprep.subr.bf16.mxu0 0
        %1265 = vmatpush1.bf16.msra.mxu0 0
        %1266 = vmatprep.subr.bf16.mxu0 0
        %1267 = vmatpush1.bf16.msra.mxu0 0
        %1268 = vmatprep.subr.bf16.mxu0 0
        %1269 = vmatpush1.bf16.msra.mxu0 0
        %1270 = vmatprep.subr.bf16.mxu0 0
        %1271 = vmatpush1.bf16.msra.mxu0 0
        %1272 = vmatprep.subr.bf16.mxu0 0
        %1273 = vmatpush1.bf16.msra.mxu0 0
        %1274 = vmatprep.subr.bf16.mxu0 0
        %1275 = vmatpush1.bf16.msra.mxu0 0
        %1276 = vmatprep.subr.bf16.mxu0 0
        %1277 = vmatpush1.bf16.msra.mxu0 0
        %1278 = vmatprep.subr.bf16.mxu0 0
        %1279 = vmatpush1.bf16.msra.mxu0 0
        %1280 = vmatprep.subr.bf16.mxu0 0
        %1281 = vmatpush1.bf16.msra.mxu0 0
        %1282 = vmatprep.subr.bf16.mxu0 0
        %1283 = vmatpush1.bf16.msra.mxu0 0
        %1284 = vmatprep.subr.bf16.mxu0 0
        %1285 = vmatpush1.bf16.msra.mxu0 0
        %1286 = vmatprep.subr.bf16.mxu0 0
        %1287 = vmatpush1.bf16.msra.mxu0 0
        %1288 = vmatprep.subr.bf16.mxu0 0
        %1289 = vmatpush1.bf16.msra.mxu0 0
        %1290 = vmatprep.subr.bf16.mxu0 0
        %1291 = vmatpush1.bf16.msra.mxu0 0
        %1292 = vmatprep.mubr.bf16.mxu0 0
        %1293 = vmatmul.mubr.bf16.gmra.mrb[0].mxu0 %v1254
        %v1294 = vpop.f32.mrb[0].mxu0
        %v1295 = vadd.f32 0.0, %v1294
        %v1296 = vpop.f32.mrb[0].mxu0
        %v1297 = vpop.f32.mrb[0].mxu0
        %v1298 = vpop.f32.mrb[0].mxu0
        %1299 = vdwg.mxu0
        %1300 = vrot.lane.b32.xlu0 %v1181, 120
        %v1301 = vpop.permute.xlu0 %1300
        %1302 = vrot.lane.b32.xlu0 %v1181, 88
        %v1303 = vpop.permute.xlu0 %1302
        %v1305 = vsel %vm1192, %v1301, 0
        %v1308 = vsel %vm1192, %v1303, 0
        %1310 = vmatprep.subr.bf16.mxu0 0
        %1311 = vmatpush1.bf16.xpose.msra.mxu0 %v1308
        %1312 = vmatprep.subr.bf16.mxu0 0
        %1313 = vmatpush1.bf16.xpose.msra.mxu0 0
        %1314 = vmatprep.subr.bf16.mxu0 0
        %1315 = vmatpush1.bf16.xpose.msra.mxu0 0
        %1316 = vmatprep.subr.bf16.mxu0 0
        %1317 = vmatpush1.bf16.xpose.msra.mxu0 0
        %1318 = vmatprep.subr.bf16.mxu0 0
        %1319 = vmatpush1.bf16.xpose.msra.mxu0 0
        %1320 = vmatprep.subr.bf16.mxu0 0
        %1321 = vmatpush1.bf16.xpose.msra.mxu0 0
        %1322 = vmatprep.subr.bf16.mxu0 0
        %1323 = vmatpush1.bf16.xpose.msra.mxu0 0
        %1324 = vmatprep.subr.bf16.mxu0 0
        %1325 = vmatpush1.bf16.xpose.msra.mxu0 0
        %1326 = vmatprep.subr.bf16.mxu0 0
        %1327 = vmatpush1.bf16.xpose.msra.mxu0 0
        %1328 = vmatprep.subr.bf16.mxu0 0
        %1329 = vmatpush1.bf16.xpose.msra.mxu0 0
        %1330 = vmatprep.subr.bf16.mxu0 0
        %1331 = vmatpush1.bf16.xpose.msra.mxu0 0
        %1332 = vmatprep.subr.bf16.mxu0 0
        %1333 = vmatpush1.bf16.xpose.msra.mxu0 0
        %1334 = vmatprep.subr.bf16.mxu0 0
        %1335 = vmatpush1.bf16.xpose.msra.mxu0 0
        %1336 = vmatprep.subr.bf16.mxu0 0
        %1337 = vmatpush1.bf16.xpose.msra.mxu0 0
        %1338 = vmatprep.subr.bf16.mxu0 0
        %1339 = vmatpush1.bf16.xpose.msra.mxu0 0
        %1340 = vmatprep.subr.bf16.mxu0 0
        %1341 = vmatpush1.bf16.xpose.msra.mxu0 0
        %1342 = vmatprep.mubr.bf16.mxu0 0
        %1343 = vmatmul.mubr.bf16.gmra.mrb[0].mxu0 %v1305
        %v1344 = vpop.f32.mrb[0].mxu0
        %v1345 = vadd.f32 %v1187, %v1344
        %v1346 = vpop.f32.mrb[0].mxu0
        %v1347 = vpop.f32.mrb[0].mxu0
        %v1348 = vpop.f32.mrb[0].mxu0
        %1349 = vdwg.mxu0
        %v1350 = vsel %vm1192, %v1345, -inf
        %1351 = vmax.xlane.f32.xlu0 %v1350
        %v1352 = vpop.xlane.xlu0 %1351
        %v1353 = vsub.f32 %v1345, %v1352
        %v1354 = vmul.f32 %v1353, 1.442695
        %v1355 = vpow.pop %v1354
        %v1356 = vsel %vm1192, %v1355, 0.0
        %1357 = vadd.xlane.f32.xlu0 %v1356
        %v1358 = vpop.xlane.xlu0 %1357
        %v1359 = vrcp.pop %v1358
        %v1360 = vmul.f32 %v1355, %v1359
        %v1361 = vpack.c.bf16 %v1360, %v1360
        %1362 = vrot.lane.b32.xlu0 %v1181, 56
        %v1363 = vpop.permute.xlu0 %1362
        %v1365 = vsel %vm1192, %v1361, 0
        %v1368 = vsel %vm1256, %v1363, 0
        %1370 = vmatprep.subr.bf16.mxu0 0
        %1371 = vmatpush1.bf16.msra.mxu0 %v1368
        %1372 = vmatprep.subr.bf16.mxu0 0
        %1373 = vmatpush1.bf16.msra.mxu0 0
        %1374 = vmatprep.subr.bf16.mxu0 0
        %1375 = vmatpush1.bf16.msra.mxu0 0
        %1376 = vmatprep.subr.bf16.mxu0 0
        %1377 = vmatpush1.bf16.msra.mxu0 0
        %1378 = vmatprep.subr.bf16.mxu0 0
        %1379 = vmatpush1.bf16.msra.mxu0 0
        %1380 = vmatprep.subr.bf16.mxu0 0
        %1381 = vmatpush1.bf16.msra.mxu0 0
        %1382 = vmatprep.subr.bf16.mxu0 0
        %1383 = vmatpush1.bf16.msra.mxu0 0
        %1384 = vmatprep.subr.bf16.mxu0 0
        %1385 = vmatpush1.bf16.msra.mxu0 0
        %1386 = vmatprep.subr.bf16.mxu0 0
        %1387 = vmatpush1.bf16.msra.mxu0 0
        %1388 = vmatprep.subr.bf16.mxu0 0
        %1389 = vmatpush1.bf16.msra.mxu0 0
        %1390 = vmatprep.subr.bf16.mxu0 0
        %1391 = vmatpush1.bf16.msra.mxu0 0
        %1392 = vmatprep.subr.bf16.mxu0 0
        %1393 = vmatpush1.bf16.msra.mxu0 0
        %1394 = vmatprep.subr.bf16.mxu0 0
        %1395 = vmatpush1.bf16.msra.mxu0 0
        %1396 = vmatprep.subr.bf16.mxu0 0
        %1397 = vmatpush1.bf16.msra.mxu0 0
        %1398 = vmatprep.subr.bf16.mxu0 0
        %1399 = vmatpush1.bf16.msra.mxu0 0
        %1400 = vmatprep.subr.bf16.mxu0 0
        %1401 = vmatpush1.bf16.msra.mxu0 0
        %1402 = vmatprep.mubr.bf16.mxu0 0
        %1403 = vmatmul.mubr.bf16.gmra.mrb[0].mxu0 %v1365
        %v1404 = vpop.f32.mrb[0].mxu0
        %v1405 = vadd.f32 0.0, %v1404
        %v1406 = vpop.f32.mrb[0].mxu0
        %v1407 = vpop.f32.mrb[0].mxu0
        %v1408 = vpop.f32.mrb[0].mxu0
        %1409 = vdwg.mxu0
        %1410 = vrot.lane.b32.xlu0 %v1181, 112
        %v1411 = vpop.permute.xlu0 %1410
        %1412 = vrot.lane.b32.xlu0 %v1181, 80
        %v1413 = vpop.permute.xlu0 %1412
        %v1415 = vsel %vm1192, %v1411, 0
        %v1418 = vsel %vm1192, %v1413, 0
        %1420 = vmatprep.subr.bf16.mxu0 0
        %1421 = vmatpush1.bf16.xpose.msra.mxu0 %v1418
        %1422 = vmatprep.subr.bf16.mxu0 0
        %1423 = vmatpush1.bf16.xpose.msra.mxu0 0
        %1424 = vmatprep.subr.bf16.mxu0 0
        %1425 = vmatpush1.bf16.xpose.msra.mxu0 0
        %1426 = vmatprep.subr.bf16.mxu0 0
        %1427 = vmatpush1.bf16.xpose.msra.mxu0 0
        %1428 = vmatprep.subr.bf16.mxu0 0
        %1429 = vmatpush1.bf16.xpose.msra.mxu0 0
        %1430 = vmatprep.subr.bf16.mxu0 0
        %1431 = vmatpush1.bf16.xpose.msra.mxu0 0
        %1432 = vmatprep.subr.bf16.mxu0 0
        %1433 = vmatpush1.bf16.xpose.msra.mxu0 0
        %1434 = vmatprep.subr.bf16.mxu0 0
        %1435 = vmatpush1.bf16.xpose.msra.mxu0 0
        %1436 = vmatprep.subr.bf16.mxu0 0
        %1437 = vmatpush1.bf16.xpose.msra.mxu0 0
        %1438 = vmatprep.subr.bf16.mxu0 0
        %1439 = vmatpush1.bf16.xpose.msra.mxu0 0
        %1440 = vmatprep.subr.bf16.mxu0 0
        %1441 = vmatpush1.bf16.xpose.msra.mxu0 0
        %1442 = vmatprep.subr.bf16.mxu0 0
        %1443 = vmatpush1.bf16.xpose.msra.mxu0 0
        %1444 = vmatprep.subr.bf16.mxu0 0
        %1445 = vmatpush1.bf16.xpose.msra.mxu0 0
        %1446 = vmatprep.subr.bf16.mxu0 0
        %1447 = vmatpush1.bf16.xpose.msra.mxu0 0
        %1448 = vmatprep.subr.bf16.mxu0 0
        %1449 = vmatpush1.bf16.xpose.msra.mxu0 0
        %1450 = vmatprep.subr.bf16.mxu0 0
        %1451 = vmatpush1.bf16.xpose.msra.mxu0 0
        %1452 = vmatprep.mubr.bf16.mxu0 0
        %1453 = vmatmul.mubr.bf16.gmra.mrb[0].mxu0 %v1415
        %v1454 = vpop.f32.mrb[0].mxu0
        %v1455 = vadd.f32 %v1187, %v1454
        %v1456 = vpop.f32.mrb[0].mxu0
        %v1457 = vpop.f32.mrb[0].mxu0
        %v1458 = vpop.f32.mrb[0].mxu0
        %1459 = vdwg.mxu0
        %v1460 = vsel %vm1192, %v1455, -inf
        %1461 = vmax.xlane.f32.xlu0 %v1460
        %v1462 = vpop.xlane.xlu0 %1461
        %v1463 = vsub.f32 %v1455, %v1462
        %v1464 = vmul.f32 %v1463, 1.442695
        %v1465 = vpow.pop %v1464
        %v1466 = vsel %vm1192, %v1465, 0.0
        %1467 = vadd.xlane.f32.xlu0 %v1466
        %v1468 = vpop.xlane.xlu0 %1467
        %v1469 = vrcp.pop %v1468
        %v1470 = vmul.f32 %v1465, %v1469
        %v1471 = vpack.c.bf16 %v1470, %v1470
        %1472 = vrot.lane.b32.xlu0 %v1181, 48
        %v1473 = vpop.permute.xlu0 %1472
        %v1475 = vsel %vm1192, %v1471, 0
        %v1478 = vsel %vm1256, %v1473, 0
        %1480 = vmatprep.subr.bf16.mxu0 0
        %1481 = vmatpush1.bf16.msra.mxu0 %v1478
        %1482 = vmatprep.subr.bf16.mxu0 0
        %1483 = vmatpush1.bf16.msra.mxu0 0
        %1484 = vmatprep.subr.bf16.mxu0 0
        %1485 = vmatpush1.bf16.msra.mxu0 0
        %1486 = vmatprep.subr.bf16.mxu0 0
        %1487 = vmatpush1.bf16.msra.mxu0 0
        %1488 = vmatprep.subr.bf16.mxu0 0
        %1489 = vmatpush1.bf16.msra.mxu0 0
        %1490 = vmatprep.subr.bf16.mxu0 0
        %1491 = vmatpush1.bf16.msra.mxu0 0
        %1492 = vmatprep.subr.bf16.mxu0 0
        %1493 = vmatpush1.bf16.msra.mxu0 0
        %1494 = vmatprep.subr.bf16.mxu0 0
        %1495 = vmatpush1.bf16.msra.mxu0 0
        %1496 = vmatprep.subr.bf16.mxu0 0
        %1497 = vmatpush1.bf16.msra.mxu0 0
        %1498 = vmatprep.subr.bf16.mxu0 0
        %1499 = vmatpush1.bf16.msra.mxu0 0
        %1500 = vmatprep.subr.bf16.mxu0 0
        %1501 = vmatpush1.bf16.msra.mxu0 0
        %1502 = vmatprep.subr.bf16.mxu0 0
        %1503 = vmatpush1.bf16.msra.mxu0 0
        %1504 = vmatprep.subr.bf16.mxu0 0
        %1505 = vmatpush1.bf16.msra.mxu0 0
        %1506 = vmatprep.subr.bf16.mxu0 0
        %1507 = vmatpush1.bf16.msra.mxu0 0
        %1508 = vmatprep.subr.bf16.mxu0 0
        %1509 = vmatpush1.bf16.msra.mxu0 0
        %1510 = vmatprep.subr.bf16.mxu0 0
        %1511 = vmatpush1.bf16.msra.mxu0 0
        %1512 = vmatprep.mubr.bf16.mxu0 0
        %1513 = vmatmul.mubr.bf16.gmra.mrb[0].mxu0 %v1475
        %v1514 = vpop.f32.mrb[0].mxu0
        %v1515 = vadd.f32 0.0, %v1514
        %v1516 = vpop.f32.mrb[0].mxu0
        %v1517 = vpop.f32.mrb[0].mxu0
        %v1518 = vpop.f32.mrb[0].mxu0
        %1519 = vdwg.mxu0
        %1520 = vrot.lane.b32.xlu0 %v1181, 104
        %v1521 = vpop.permute.xlu0 %1520
        %1522 = vrot.lane.b32.xlu0 %v1181, 72
        %v1523 = vpop.permute.xlu0 %1522
        %v1525 = vsel %vm1192, %v1521, 0
        %v1528 = vsel %vm1192, %v1523, 0
        %1530 = vmatprep.subr.bf16.mxu0 0
        %1531 = vmatpush1.bf16.xpose.msra.mxu0 %v1528
        %1532 = vmatprep.subr.bf16.mxu0 0
        %1533 = vmatpush1.bf16.xpose.msra.mxu0 0
        %1534 = vmatprep.subr.bf16.mxu0 0
        %1535 = vmatpush1.bf16.xpose.msra.mxu0 0
        %1536 = vmatprep.subr.bf16.mxu0 0
        %1537 = vmatpush1.bf16.xpose.msra.mxu0 0
        %1538 = vmatprep.subr.bf16.mxu0 0
        %1539 = vmatpush1.bf16.xpose.msra.mxu0 0
        %1540 = vmatprep.subr.bf16.mxu0 0
        %1541 = vmatpush1.bf16.xpose.msra.mxu0 0
        %1542 = vmatprep.subr.bf16.mxu0 0
        %1543 = vmatpush1.bf16.xpose.msra.mxu0 0
        %1544 = vmatprep.subr.bf16.mxu0 0
        %1545 = vmatpush1.bf16.xpose.msra.mxu0 0
        %1546 = vmatprep.subr.bf16.mxu0 0
        %1547 = vmatpush1.bf16.xpose.msra.mxu0 0
        %1548 = vmatprep.subr.bf16.mxu0 0
        %1549 = vmatpush1.bf16.xpose.msra.mxu0 0
        %1550 = vmatprep.subr.bf16.mxu0 0
        %1551 = vmatpush1.bf16.xpose.msra.mxu0 0
        %1552 = vmatprep.subr.bf16.mxu0 0
        %1553 = vmatpush1.bf16.xpose.msra.mxu0 0
        %1554 = vmatprep.subr.bf16.mxu0 0
        %1555 = vmatpush1.bf16.xpose.msra.mxu0 0
        %1556 = vmatprep.subr.bf16.mxu0 0
        %1557 = vmatpush1.bf16.xpose.msra.mxu0 0
        %1558 = vmatprep.subr.bf16.mxu0 0
        %1559 = vmatpush1.bf16.xpose.msra.mxu0 0
        %1560 = vmatprep.subr.bf16.mxu0 0
        %1561 = vmatpush1.bf16.xpose.msra.mxu0 0
        %1562 = vmatprep.mubr.bf16.mxu0 0
        %1563 = vmatmul.mubr.bf16.gmra.mrb[0].mxu0 %v1525
        %v1564 = vpop.f32.mrb[0].mxu0
        %v1565 = vadd.f32 %v1187, %v1564
        %v1566 = vpop.f32.mrb[0].mxu0
        %v1567 = vpop.f32.mrb[0].mxu0
        %v1568 = vpop.f32.mrb[0].mxu0
        %1569 = vdwg.mxu0
        %v1570 = vsel %vm1192, %v1565, -inf
        %1571 = vmax.xlane.f32.xlu0 %v1570
        %v1572 = vpop.xlane.xlu0 %1571
        %v1573 = vsub.f32 %v1565, %v1572
        %v1574 = vmul.f32 %v1573, 1.442695
        %v1575 = vpow.pop %v1574
        %v1576 = vsel %vm1192, %v1575, 0.0
        %1577 = vadd.xlane.f32.xlu0 %v1576
        %v1578 = vpop.xlane.xlu0 %1577
        %v1579 = vrcp.pop %v1578
        %v1580 = vmul.f32 %v1575, %v1579
        %v1581 = vpack.c.bf16 %v1580, %v1580
        %1582 = vrot.lane.b32.xlu0 %v1181, 40
        %v1583 = vpop.permute.xlu0 %1582
        %v1585 = vsel %vm1192, %v1581, 0
        %v1588 = vsel %vm1256, %v1583, 0
        %1590 = vmatprep.subr.bf16.mxu0 0
        %1591 = vmatpush1.bf16.msra.mxu0 %v1588
        %1592 = vmatprep.subr.bf16.mxu0 0
        %1593 = vmatpush1.bf16.msra.mxu0 0
        %1594 = vmatprep.subr.bf16.mxu0 0
        %1595 = vmatpush1.bf16.msra.mxu0 0
        %1596 = vmatprep.subr.bf16.mxu0 0
        %1597 = vmatpush1.bf16.msra.mxu0 0
        %1598 = vmatprep.subr.bf16.mxu0 0
        %1599 = vmatpush1.bf16.msra.mxu0 0
        %1600 = vmatprep.subr.bf16.mxu0 0
        %1601 = vmatpush1.bf16.msra.mxu0 0
        %1602 = vmatprep.subr.bf16.mxu0 0
        %1603 = vmatpush1.bf16.msra.mxu0 0
        %1604 = vmatprep.subr.bf16.mxu0 0
        %1605 = vmatpush1.bf16.msra.mxu0 0
        %1606 = vmatprep.subr.bf16.mxu0 0
        %1607 = vmatpush1.bf16.msra.mxu0 0
        %1608 = vmatprep.subr.bf16.mxu0 0
        %1609 = vmatpush1.bf16.msra.mxu0 0
        %1610 = vmatprep.subr.bf16.mxu0 0
        %1611 = vmatpush1.bf16.msra.mxu0 0
        %1612 = vmatprep.subr.bf16.mxu0 0
        %1613 = vmatpush1.bf16.msra.mxu0 0
        %1614 = vmatprep.subr.bf16.mxu0 0
        %1615 = vmatpush1.bf16.msra.mxu0 0
        %1616 = vmatprep.subr.bf16.mxu0 0
        %1617 = vmatpush1.bf16.msra.mxu0 0
        %1618 = vmatprep.subr.bf16.mxu0 0
        %1619 = vmatpush1.bf16.msra.mxu0 0
        %1620 = vmatprep.subr.bf16.mxu0 0
        %1621 = vmatpush1.bf16.msra.mxu0 0
        %1622 = vmatprep.mubr.bf16.mxu0 0
        %1623 = vmatmul.mubr.bf16.gmra.mrb[0].mxu0 %v1585
        %v1624 = vpop.f32.mrb[0].mxu0
        %v1625 = vadd.f32 0.0, %v1624
        %v1626 = vpop.f32.mrb[0].mxu0
        %v1627 = vpop.f32.mrb[0].mxu0
        %v1628 = vpop.f32.mrb[0].mxu0
        %1629 = vdwg.mxu0
        %1631 = vrot.lane.b32.xlu0 %v1405, 8
        %v1632 = vpop.permute.xlu0 %1631
        %1635 = vrot.lane.b32.xlu0 %v1515, 16
        %v1636 = vpop.permute.xlu0 %1635
        %1639 = vrot.lane.b32.xlu0 %v1625, 24
        %v1640 = vpop.permute.xlu0 %1639
        %v1642 = vsel %vm1192, %v1295, %v1632
        %vm1643 = vcmask 130048
        %v1644 = vsel %vm1643, %v1642, %v1636
        %vm1645 = vcmask 195584
        %v1646 = vsel %vm1645, %v1644, %v1640
        %v1647 = vpack.c.bf16 %v1178, %v1178
        %s1648 = scalar_lea.vmem [#allocation6], 1
        %v1649 = vld [vmem:[%s1648] sm:$0x1]
        %v1651 = vlaneseq
        %v1652 = vshrl.u32 %v1651, 7
        %v1653 = vsub.s32 0, %v1652
        %v1654 = vrot.slane %v1649, %v1653
        %1657 = vrot.lane.b32.xlu0 %v1647, 96
        %v1658 = vpop.permute.xlu0 %1657
        %v1660 = vsel %vm1192, %v1647, 0
        %v1663 = vsel %vm1192, %v1658, 0
        %1665 = vmatprep.subr.bf16.mxu0 0
        %1666 = vmatpush1.bf16.xpose.msra.mxu0 %v1663
        %1667 = vmatprep.subr.bf16.mxu0 0
        %1668 = vmatpush1.bf16.xpose.msra.mxu0 0
        %1669 = vmatprep.subr.bf16.mxu0 0
        %1670 = vmatpush1.bf16.xpose.msra.mxu0 0
        %1671 = vmatprep.subr.bf16.mxu0 0
        %1672 = vmatpush1.bf16.xpose.msra.mxu0 0
        %1673 = vmatprep.subr.bf16.mxu0 0
        %1674 = vmatpush1.bf16.xpose.msra.mxu0 0
        %1675 = vmatprep.subr.bf16.mxu0 0
        %1676 = vmatpush1.bf16.xpose.msra.mxu0 0
        %1677 = vmatprep.subr.bf16.mxu0 0
        %1678 = vmatpush1.bf16.xpose.msra.mxu0 0
        %1679 = vmatprep.subr.bf16.mxu0 0
        %1680 = vmatpush1.bf16.xpose.msra.mxu0 0
        %1681 = vmatprep.subr.bf16.mxu0 0
        %1682 = vmatpush1.bf16.xpose.msra.mxu0 0
        %1683 = vmatprep.subr.bf16.mxu0 0
        %1684 = vmatpush1.bf16.xpose.msra.mxu0 0
        %1685 = vmatprep.subr.bf16.mxu0 0
        %1686 = vmatpush1.bf16.xpose.msra.mxu0 0
        %1687 = vmatprep.subr.bf16.mxu0 0
        %1688 = vmatpush1.bf16.xpose.msra.mxu0 0
        %1689 = vmatprep.subr.bf16.mxu0 0
        %1690 = vmatpush1.bf16.xpose.msra.mxu0 0
        %1691 = vmatprep.subr.bf16.mxu0 0
        %1692 = vmatpush1.bf16.xpose.msra.mxu0 0
        %1693 = vmatprep.subr.bf16.mxu0 0
        %1694 = vmatpush1.bf16.xpose.msra.mxu0 0
        %1695 = vmatprep.subr.bf16.mxu0 0
        %1696 = vmatpush1.bf16.xpose.msra.mxu0 0
        %1697 = vmatprep.mubr.bf16.mxu0 0
        %1698 = vmatmul.mubr.bf16.gmra.mrb[0].mxu0 %v1660
        %v1699 = vpop.f32.mrb[0].mxu0
        %v1700 = vadd.f32 %v1654, %v1699
        %v1701 = vpop.f32.mrb[0].mxu0
        %v1702 = vpop.f32.mrb[0].mxu0
        %v1703 = vpop.f32.mrb[0].mxu0
        %1704 = vdwg.mxu0
        %v1705 = vsel %vm1192, %v1700, -inf
        %1706 = vmax.xlane.f32.xlu0 %v1705
        %v1707 = vpop.xlane.xlu0 %1706
        %v1708 = vsub.f32 %v1700, %v1707
        %v1709 = vmul.f32 %v1708, 1.442695
        %v1710 = vpow.pop %v1709
        %v1711 = vsel %vm1192, %v1710, 0.0
        %1712 = vadd.xlane.f32.xlu0 %v1711
        %v1713 = vpop.xlane.xlu0 %1712
        %v1714 = vrcp.pop %v1713
        %v1715 = vmul.f32 %v1710, %v1714
        %v1716 = vpack.c.bf16 %v1715, %v1715
        %1717 = vrot.lane.b32.xlu0 %v1647, 64
        %v1718 = vpop.permute.xlu0 %1717
        %v1720 = vsel %vm1192, %v1716, 0
        %v1723 = vsel %vm1256, %v1718, 0
        %1725 = vmatprep.subr.bf16.mxu0 0
        %1726 = vmatpush1.bf16.msra.mxu0 %v1723
        %1727 = vmatprep.subr.bf16.mxu0 0
        %1728 = vmatpush1.bf16.msra.mxu0 0
        %1729 = vmatprep.subr.bf16.mxu0 0
        %1730 = vmatpush1.bf16.msra.mxu0 0
        %1731 = vmatprep.subr.bf16.mxu0 0
        %1732 = vmatpush1.bf16.msra.mxu0 0
        %1733 = vmatprep.subr.bf16.mxu0 0
        %1734 = vmatpush1.bf16.msra.mxu0 0
        %1735 = vmatprep.subr.bf16.mxu0 0
        %1736 = vmatpush1.bf16.msra.mxu0 0
        %1737 = vmatprep.subr.bf16.mxu0 0
        %1738 = vmatpush1.bf16.msra.mxu0 0
        %1739 = vmatprep.subr.bf16.mxu0 0
        %1740 = vmatpush1.bf16.msra.mxu0 0
        %1741 = vmatprep.subr.bf16.mxu0 0
        %1742 = vmatpush1.bf16.msra.mxu0 0
        %1743 = vmatprep.subr.bf16.mxu0 0
        %1744 = vmatpush1.bf16.msra.mxu0 0
        %1745 = vmatprep.subr.bf16.mxu0 0
        %1746 = vmatpush1.bf16.msra.mxu0 0
        %1747 = vmatprep.subr.bf16.mxu0 0
        %1748 = vmatpush1.bf16.msra.mxu0 0
        %1749 = vmatprep.subr.bf16.mxu0 0
        %1750 = vmatpush1.bf16.msra.mxu0 0
        %1751 = vmatprep.subr.bf16.mxu0 0
        %1752 = vmatpush1.bf16.msra.mxu0 0
        %1753 = vmatprep.subr.bf16.mxu0 0
        %1754 = vmatpush1.bf16.msra.mxu0 0
        %1755 = vmatprep.subr.bf16.mxu0 0
        %1756 = vmatpush1.bf16.msra.mxu0 0
        %1757 = vmatprep.mubr.bf16.mxu0 0
        %1758 = vmatmul.mubr.bf16.gmra.mrb[0].mxu0 %v1720
        %v1759 = vpop.f32.mrb[0].mxu0
        %v1760 = vadd.f32 0.0, %v1759
        %v1761 = vpop.f32.mrb[0].mxu0
        %v1762 = vpop.f32.mrb[0].mxu0
        %v1763 = vpop.f32.mrb[0].mxu0
        %1764 = vdwg.mxu0
        %1765 = vrot.lane.b32.xlu0 %v1647, 120
        %v1766 = vpop.permute.xlu0 %1765
        %1767 = vrot.lane.b32.xlu0 %v1647, 88
        %v1768 = vpop.permute.xlu0 %1767
        %v1770 = vsel %vm1192, %v1766, 0
        %v1773 = vsel %vm1192, %v1768, 0
        %1775 = vmatprep.subr.bf16.mxu0 0
        %1776 = vmatpush1.bf16.xpose.msra.mxu0 %v1773
        %1777 = vmatprep.subr.bf16.mxu0 0
        %1778 = vmatpush1.bf16.xpose.msra.mxu0 0
        %1779 = vmatprep.subr.bf16.mxu0 0
        %1780 = vmatpush1.bf16.xpose.msra.mxu0 0
        %1781 = vmatprep.subr.bf16.mxu0 0
        %1782 = vmatpush1.bf16.xpose.msra.mxu0 0
        %1783 = vmatprep.subr.bf16.mxu0 0
        %1784 = vmatpush1.bf16.xpose.msra.mxu0 0
        %1785 = vmatprep.subr.bf16.mxu0 0
        %1786 = vmatpush1.bf16.xpose.msra.mxu0 0
        %1787 = vmatprep.subr.bf16.mxu0 0
        %1788 = vmatpush1.bf16.xpose.msra.mxu0 0
        %1789 = vmatprep.subr.bf16.mxu0 0
        %1790 = vmatpush1.bf16.xpose.msra.mxu0 0
        %1791 = vmatprep.subr.bf16.mxu0 0
        %1792 = vmatpush1.bf16.xpose.msra.mxu0 0
        %1793 = vmatprep.subr.bf16.mxu0 0
        %1794 = vmatpush1.bf16.xpose.msra.mxu0 0
        %1795 = vmatprep.subr.bf16.mxu0 0
        %1796 = vmatpush1.bf16.xpose.msra.mxu0 0
        %1797 = vmatprep.subr.bf16.mxu0 0
        %1798 = vmatpush1.bf16.xpose.msra.mxu0 0
        %1799 = vmatprep.subr.bf16.mxu0 0
        %1800 = vmatpush1.bf16.xpose.msra.mxu0 0
        %1801 = vmatprep.subr.bf16.mxu0 0
        %1802 = vmatpush1.bf16.xpose.msra.mxu0 0
        %1803 = vmatprep.subr.bf16.mxu0 0
        %1804 = vmatpush1.bf16.xpose.msra.mxu0 0
        %1805 = vmatprep.subr.bf16.mxu0 0
        %1806 = vmatpush1.bf16.xpose.msra.mxu0 0
        %1807 = vmatprep.mubr.bf16.mxu0 0
        %1808 = vmatmul.mubr.bf16.gmra.mrb[0].mxu0 %v1770
        %v1809 = vpop.f32.mrb[0].mxu0
        %v1810 = vadd.f32 %v1654, %v1809
        %v1811 = vpop.f32.mrb[0].mxu0
        %v1812 = vpop.f32.mrb[0].mxu0
        %v1813 = vpop.f32.mrb[0].mxu0
        %1814 = vdwg.mxu0
        %v1815 = vsel %vm1192, %v1810, -inf
        %1816 = vmax.xlane.f32.xlu0 %v1815
        %v1817 = vpop.xlane.xlu0 %1816
        %v1818 = vsub.f32 %v1810, %v1817
        %v1819 = vmul.f32 %v1818, 1.442695
        %v1820 = vpow.pop %v1819
        %v1821 = vsel %vm1192, %v1820, 0.0
        %1822 = vadd.xlane.f32.xlu0 %v1821
        %v1823 = vpop.xlane.xlu0 %1822
        %v1824 = vrcp.pop %v1823
        %v1825 = vmul.f32 %v1820, %v1824
        %v1826 = vpack.c.bf16 %v1825, %v1825
        %1827 = vrot.lane.b32.xlu0 %v1647, 56
        %v1828 = vpop.permute.xlu0 %1827
        %v1830 = vsel %vm1192, %v1826, 0
        %v1833 = vsel %vm1256, %v1828, 0
        %1835 = vmatprep.subr.bf16.mxu0 0
        %1836 = vmatpush1.bf16.msra.mxu0 %v1833
        %1837 = vmatprep.subr.bf16.mxu0 0
        %1838 = vmatpush1.bf16.msra.mxu0 0
        %1839 = vmatprep.subr.bf16.mxu0 0
        %1840 = vmatpush1.bf16.msra.mxu0 0
        %1841 = vmatprep.subr.bf16.mxu0 0
        %1842 = vmatpush1.bf16.msra.mxu0 0
        %1843 = vmatprep.subr.bf16.mxu0 0
        %1844 = vmatpush1.bf16.msra.mxu0 0
        %1845 = vmatprep.subr.bf16.mxu0 0
        %1846 = vmatpush1.bf16.msra.mxu0 0
        %1847 = vmatprep.subr.bf16.mxu0 0
        %1848 = vmatpush1.bf16.msra.mxu0 0
        %1849 = vmatprep.subr.bf16.mxu0 0
        %1850 = vmatpush1.bf16.msra.mxu0 0
        %1851 = vmatprep.subr.bf16.mxu0 0
        %1852 = vmatpush1.bf16.msra.mxu0 0
        %1853 = vmatprep.subr.bf16.mxu0 0
        %1854 = vmatpush1.bf16.msra.mxu0 0
        %1855 = vmatprep.subr.bf16.mxu0 0
        %1856 = vmatpush1.bf16.msra.mxu0 0
        %1857 = vmatprep.subr.bf16.mxu0 0
        %1858 = vmatpush1.bf16.msra.mxu0 0
        %1859 = vmatprep.subr.bf16.mxu0 0
        %1860 = vmatpush1.bf16.msra.mxu0 0
        %1861 = vmatprep.subr.bf16.mxu0 0
        %1862 = vmatpush1.bf16.msra.mxu0 0
        %1863 = vmatprep.subr.bf16.mxu0 0
        %1864 = vmatpush1.bf16.msra.mxu0 0
        %1865 = vmatprep.subr.bf16.mxu0 0
        %1866 = vmatpush1.bf16.msra.mxu0 0
        %1867 = vmatprep.mubr.bf16.mxu0 0
        %1868 = vmatmul.mubr.bf16.gmra.mrb[0].mxu0 %v1830
        %v1869 = vpop.f32.mrb[0].mxu0
        %v1870 = vadd.f32 0.0, %v1869
        %v1871 = vpop.f32.mrb[0].mxu0
        %v1872 = vpop.f32.mrb[0].mxu0
        %v1873 = vpop.f32.mrb[0].mxu0
        %1874 = vdwg.mxu0
        %1875 = vrot.lane.b32.xlu0 %v1647, 112
        %v1876 = vpop.permute.xlu0 %1875
        %1877 = vrot.lane.b32.xlu0 %v1647, 80
        %v1878 = vpop.permute.xlu0 %1877
        %v1880 = vsel %vm1192, %v1876, 0
        %v1883 = vsel %vm1192, %v1878, 0
        %1885 = vmatprep.subr.bf16.mxu0 0
        %1886 = vmatpush1.bf16.xpose.msra.mxu0 %v1883
        %1887 = vmatprep.subr.bf16.mxu0 0
        %1888 = vmatpush1.bf16.xpose.msra.mxu0 0
        %1889 = vmatprep.subr.bf16.mxu0 0
        %1890 = vmatpush1.bf16.xpose.msra.mxu0 0
        %1891 = vmatprep.subr.bf16.mxu0 0
        %1892 = vmatpush1.bf16.xpose.msra.mxu0 0
        %1893 = vmatprep.subr.bf16.mxu0 0
        %1894 = vmatpush1.bf16.xpose.msra.mxu0 0
        %1895 = vmatprep.subr.bf16.mxu0 0
        %1896 = vmatpush1.bf16.xpose.msra.mxu0 0
        %1897 = vmatprep.subr.bf16.mxu0 0
        %1898 = vmatpush1.bf16.xpose.msra.mxu0 0
        %1899 = vmatprep.subr.bf16.mxu0 0
        %1900 = vmatpush1.bf16.xpose.msra.mxu0 0
        %1901 = vmatprep.subr.bf16.mxu0 0
        %1902 = vmatpush1.bf16.xpose.msra.mxu0 0
        %1903 = vmatprep.subr.bf16.mxu0 0
        %1904 = vmatpush1.bf16.xpose.msra.mxu0 0
        %1905 = vmatprep.subr.bf16.mxu0 0
        %1906 = vmatpush1.bf16.xpose.msra.mxu0 0
        %1907 = vmatprep.subr.bf16.mxu0 0
        %1908 = vmatpush1.bf16.xpose.msra.mxu0 0
        %1909 = vmatprep.subr.bf16.mxu0 0
        %1910 = vmatpush1.bf16.xpose.msra.mxu0 0
        %1911 = vmatprep.subr.bf16.mxu0 0
        %1912 = vmatpush1.bf16.xpose.msra.mxu0 0
        %1913 = vmatprep.subr.bf16.mxu0 0
        %1914 = vmatpush1.bf16.xpose.msra.mxu0 0
        %1915 = vmatprep.subr.bf16.mxu0 0
        %1916 = vmatpush1.bf16.xpose.msra.mxu0 0
        %1917 = vmatprep.mubr.bf16.mxu0 0
        %1918 = vmatmul.mubr.bf16.gmra.mrb[0].mxu0 %v1880
        %v1919 = vpop.f32.mrb[0].mxu0
        %v1920 = vadd.f32 %v1654, %v1919
        %v1921 = vpop.f32.mrb[0].mxu0
        %v1922 = vpop.f32.mrb[0].mxu0
        %v1923 = vpop.f32.mrb[0].mxu0
        %1924 = vdwg.mxu0
        %v1925 = vsel %vm1192, %v1920, -inf
        %1926 = vmax.xlane.f32.xlu0 %v1925
        %v1927 = vpop.xlane.xlu0 %1926
        %v1928 = vsub.f32 %v1920, %v1927
        %v1929 = vmul.f32 %v1928, 1.442695
        %v1930 = vpow.pop %v1929
        %v1931 = vsel %vm1192, %v1930, 0.0
        %1932 = vadd.xlane.f32.xlu0 %v1931
        %v1933 = vpop.xlane.xlu0 %1932
        %v1934 = vrcp.pop %v1933
        %v1935 = vmul.f32 %v1930, %v1934
        %v1936 = vpack.c.bf16 %v1935, %v1935
        %1937 = vrot.lane.b32.xlu0 %v1647, 48
        %v1938 = vpop.permute.xlu0 %1937
        %v1940 = vsel %vm1192, %v1936, 0
        %v1943 = vsel %vm1256, %v1938, 0
        %1945 = vmatprep.subr.bf16.mxu0 0
        %1946 = vmatpush1.bf16.msra.mxu0 %v1943
        %1947 = vmatprep.subr.bf16.mxu0 0
        %1948 = vmatpush1.bf16.msra.mxu0 0
        %1949 = vmatprep.subr.bf16.mxu0 0
        %1950 = vmatpush1.bf16.msra.mxu0 0
        %1951 = vmatprep.subr.bf16.mxu0 0
        %1952 = vmatpush1.bf16.msra.mxu0 0
        %1953 = vmatprep.subr.bf16.mxu0 0
        %1954 = vmatpush1.bf16.msra.mxu0 0
        %1955 = vmatprep.subr.bf16.mxu0 0
        %1956 = vmatpush1.bf16.msra.mxu0 0
        %1957 = vmatprep.subr.bf16.mxu0 0
        %1958 = vmatpush1.bf16.msra.mxu0 0
        %1959 = vmatprep.subr.bf16.mxu0 0
        %1960 = vmatpush1.bf16.msra.mxu0 0
        %1961 = vmatprep.subr.bf16.mxu0 0
        %1962 = vmatpush1.bf16.msra.mxu0 0
        %1963 = vmatprep.subr.bf16.mxu0 0
        %1964 = vmatpush1.bf16.msra.mxu0 0
        %1965 = vmatprep.subr.bf16.mxu0 0
        %1966 = vmatpush1.bf16.msra.mxu0 0
        %1967 = vmatprep.subr.bf16.mxu0 0
        %1968 = vmatpush1.bf16.msra.mxu0 0
        %1969 = vmatprep.subr.bf16.mxu0 0
        %1970 = vmatpush1.bf16.msra.mxu0 0
        %1971 = vmatprep.subr.bf16.mxu0 0
        %1972 = vmatpush1.bf16.msra.mxu0 0
        %1973 = vmatprep.subr.bf16.mxu0 0
        %1974 = vmatpush1.bf16.msra.mxu0 0
        %1975 = vmatprep.subr.bf16.mxu0 0
        %1976 = vmatpush1.bf16.msra.mxu0 0
        %1977 = vmatprep.mubr.bf16.mxu0 0
        %1978 = vmatmul.mubr.bf16.gmra.mrb[0].mxu0 %v1940
        %v1979 = vpop.f32.mrb[0].mxu0
        %v1980 = vadd.f32 0.0, %v1979
        %v1981 = vpop.f32.mrb[0].mxu0
        %v1982 = vpop.f32.mrb[0].mxu0
        %v1983 = vpop.f32.mrb[0].mxu0
        %1984 = vdwg.mxu0
        %1985 = vrot.lane.b32.xlu0 %v1647, 104
        %v1986 = vpop.permute.xlu0 %1985
        %1987 = vrot.lane.b32.xlu0 %v1647, 72
        %v1988 = vpop.permute.xlu0 %1987
        %v1990 = vsel %vm1192, %v1986, 0
        %v1993 = vsel %vm1192, %v1988, 0
        %1995 = vmatprep.subr.bf16.mxu0 0
        %1996 = vmatpush1.bf16.xpose.msra.mxu0 %v1993
        %1997 = vmatprep.subr.bf16.mxu0 0
        %1998 = vmatpush1.bf16.xpose.msra.mxu0 0
        %1999 = vmatprep.subr.bf16.mxu0 0
        %2000 = vmatpush1.bf16.xpose.msra.mxu0 0
        %2001 = vmatprep.subr.bf16.mxu0 0
        %2002 = vmatpush1.bf16.xpose.msra.mxu0 0
        %2003 = vmatprep.subr.bf16.mxu0 0
        %2004 = vmatpush1.bf16.xpose.msra.mxu0 0
        %2005 = vmatprep.subr.bf16.mxu0 0
        %2006 = vmatpush1.bf16.xpose.msra.mxu0 0
        %2007 = vmatprep.subr.bf16.mxu0 0
        %2008 = vmatpush1.bf16.xpose.msra.mxu0 0
        %2009 = vmatprep.subr.bf16.mxu0 0
        %2010 = vmatpush1.bf16.xpose.msra.mxu0 0
        %2011 = vmatprep.subr.bf16.mxu0 0
        %2012 = vmatpush1.bf16.xpose.msra.mxu0 0
        %2013 = vmatprep.subr.bf16.mxu0 0
        %2014 = vmatpush1.bf16.xpose.msra.mxu0 0
        %2015 = vmatprep.subr.bf16.mxu0 0
        %2016 = vmatpush1.bf16.xpose.msra.mxu0 0
        %2017 = vmatprep.subr.bf16.mxu0 0
        %2018 = vmatpush1.bf16.xpose.msra.mxu0 0
        %2019 = vmatprep.subr.bf16.mxu0 0
        %2020 = vmatpush1.bf16.xpose.msra.mxu0 0
        %2021 = vmatprep.subr.bf16.mxu0 0
        %2022 = vmatpush1.bf16.xpose.msra.mxu0 0
        %2023 = vmatprep.subr.bf16.mxu0 0
        %2024 = vmatpush1.bf16.xpose.msra.mxu0 0
        %2025 = vmatprep.subr.bf16.mxu0 0
        %2026 = vmatpush1.bf16.xpose.msra.mxu0 0
        %2027 = vmatprep.mubr.bf16.mxu0 0
        %2028 = vmatmul.mubr.bf16.gmra.mrb[0].mxu0 %v1990
        %v2029 = vpop.f32.mrb[0].mxu0
        %v2030 = vadd.f32 %v1654, %v2029
        %v2031 = vpop.f32.mrb[0].mxu0
        %v2032 = vpop.f32.mrb[0].mxu0
        %v2033 = vpop.f32.mrb[0].mxu0
        %2034 = vdwg.mxu0
        %v2035 = vsel %vm1192, %v2030, -inf
        %2036 = vmax.xlane.f32.xlu0 %v2035
        %v2037 = vpop.xlane.xlu0 %2036
        %v2038 = vsub.f32 %v2030, %v2037
        %v2039 = vmul.f32 %v2038, 1.442695
        %v2040 = vpow.pop %v2039
        %v2041 = vsel %vm1192, %v2040, 0.0
        %2042 = vadd.xlane.f32.xlu0 %v2041
        %v2043 = vpop.xlane.xlu0 %2042
        %v2044 = vrcp.pop %v2043
        %v2045 = vmul.f32 %v2040, %v2044
        %v2046 = vpack.c.bf16 %v2045, %v2045
        %2047 = vrot.lane.b32.xlu0 %v1647, 40
        %v2048 = vpop.permute.xlu0 %2047
        %v2050 = vsel %vm1192, %v2046, 0
        %v2053 = vsel %vm1256, %v2048, 0
        %2055 = vmatprep.subr.bf16.mxu0 0
        %2056 = vmatpush1.bf16.msra.mxu0 %v2053
        %2057 = vmatprep.subr.bf16.mxu0 0
        %2058 = vmatpush1.bf16.msra.mxu0 0
        %2059 = vmatprep.subr.bf16.mxu0 0
        %2060 = vmatpush1.bf16.msra.mxu0 0
        %2061 = vmatprep.subr.bf16.mxu0 0
        %2062 = vmatpush1.bf16.msra.mxu0 0
        %2063 = vmatprep.subr.bf16.mxu0 0
        %2064 = vmatpush1.bf16.msra.mxu0 0
        %2065 = vmatprep.subr.bf16.mxu0 0
        %2066 = vmatpush1.bf16.msra.mxu0 0
        %2067 = vmatprep.subr.bf16.mxu0 0
        %2068 = vmatpush1.bf16.msra.mxu0 0
        %2069 = vmatprep.subr.bf16.mxu0 0
        %2070 = vmatpush1.bf16.msra.mxu0 0
        %2071 = vmatprep.subr.bf16.mxu0 0
        %2072 = vmatpush1.bf16.msra.mxu0 0
        %2073 = vmatprep.subr.bf16.mxu0 0
        %2074 = vmatpush1.bf16.msra.mxu0 0
        %2075 = vmatprep.subr.bf16.mxu0 0
        %2076 = vmatpush1.bf16.msra.mxu0 0
        %2077 = vmatprep.subr.bf16.mxu0 0
        %2078 = vmatpush1.bf16.msra.mxu0 0
        %2079 = vmatprep.subr.bf16.mxu0 0
        %2080 = vmatpush1.bf16.msra.mxu0 0
        %2081 = vmatprep.subr.bf16.mxu0 0
        %2082 = vmatpush1.bf16.msra.mxu0 0
        %2083 = vmatprep.subr.bf16.mxu0 0
        %2084 = vmatpush1.bf16.msra.mxu0 0
        %2085 = vmatprep.subr.bf16.mxu0 0
        %2086 = vmatpush1.bf16.msra.mxu0 0
        %2087 = vmatprep.mubr.bf16.mxu0 0
        %2088 = vmatmul.mubr.bf16.gmra.mrb[0].mxu0 %v2050
        %v2089 = vpop.f32.mrb[0].mxu0
        %v2090 = vadd.f32 0.0, %v2089
        %v2091 = vpop.f32.mrb[0].mxu0
        %v2092 = vpop.f32.mrb[0].mxu0
        %v2093 = vpop.f32.mrb[0].mxu0
        %2094 = vdwg.mxu0
        %2096 = vrot.lane.b32.xlu0 %v1870, 8
        %v2097 = vpop.permute.xlu0 %2096
        %2100 = vrot.lane.b32.xlu0 %v1980, 16
        %v2101 = vpop.permute.xlu0 %2100
        %2104 = vrot.lane.b32.xlu0 %v2090, 24
        %v2105 = vpop.permute.xlu0 %2104
        %v2107 = vsel %vm1192, %v1760, %v2097
        %v2108 = vsel %vm1643, %v2107, %v2101
        %v2109 = vsel %vm1645, %v2108, %v2105
        %v2110 = vpack.c.bf16 %v2109, %v1646
        %v2111 = vld [vmem:[%s875] sm:$0xf]
        %v2112 = vld [vmem:[%s875 + $0x4] sm:$0xf]
        %v2113 = vld [vmem:[%s875 + $0x8] sm:$0xf]
        %v2114 = vld [vmem:[%s875 + $0xc] sm:$0xf]
        %v2115 = vld [vmem:[%s883] sm:$0x1]
        %v2117 = vlaneseq
        %v2118 = vshrl.u32 %v2117, 7
        %v2119 = vsub.s32 0, %v2118
        %v2120 = vrot.slane %v2115, %v2119
        %v2126 = vunpack.c.l.b16 %v2111
        %v2127 = vunpack.c.l.b16 %v2112
        %v2128 = vunpack.c.l.b16 %v2113
        %v2129 = vunpack.c.l.b16 %v2114
        %v2130 = vpack.c.b16 %v2127, %v2126
        %v2131 = vpack.c.b16 %v2129, %v2128
        %v2135 = vsel %vm1136, %v2110, 0
        %2137 = vmatprep.subr.bf16.mxu0 0
        %2138 = vmatpush1.bf16.msra.mxu0 %v2130
        %2139 = vmatprep.subr.bf16.mxu0 0
        %2140 = vmatpush1.bf16.msra.mxu0 %v2131
        %2141 = vmatprep.subr.bf16.mxu0 0
        %2142 = vmatpush1.bf16.msra.mxu0 0
        %2143 = vmatprep.subr.bf16.mxu0 0
        %2144 = vmatpush1.bf16.msra.mxu0 0
        %2145 = vmatprep.subr.bf16.mxu0 0
        %2146 = vmatpush1.bf16.msra.mxu0 0
        %2147 = vmatprep.subr.bf16.mxu0 0
        %2148 = vmatpush1.bf16.msra.mxu0 0
        %2149 = vmatprep.subr.bf16.mxu0 0
        %2150 = vmatpush1.bf16.msra.mxu0 0
        %2151 = vmatprep.subr.bf16.mxu0 0
        %2152 = vmatpush1.bf16.msra.mxu0 0
        %2153 = vmatprep.subr.bf16.mxu0 0
        %2154 = vmatpush1.bf16.msra.mxu0 0
        %2155 = vmatprep.subr.bf16.mxu0 0
        %2156 = vmatpush1.bf16.msra.mxu0 0
        %2157 = vmatprep.subr.bf16.mxu0 0
        %2158 = vmatpush1.bf16.msra.mxu0 0
        %2159 = vmatprep.subr.bf16.mxu0 0
        %2160 = vmatpush1.bf16.msra.mxu0 0
        %2161 = vmatprep.subr.bf16.mxu0 0
        %2162 = vmatpush1.bf16.msra.mxu0 0
        %2163 = vmatprep.subr.bf16.mxu0 0
        %2164 = vmatpush1.bf16.msra.mxu0 0
        %2165 = vmatprep.subr.bf16.mxu0 0
        %2166 = vmatpush1.bf16.msra.mxu0 0
        %2167 = vmatprep.subr.bf16.mxu0 0
        %2168 = vmatpush1.bf16.msra.mxu0 0
        %2169 = vmatprep.mubr.bf16.mxu0 0
        %2170 = vmatmul.mubr.bf16.gmra.mrb[0].mxu0 %v2135
        %v2171 = vpop.f32.mrb[0].mxu0
        %v2172 = vadd.f32 %v2120, %v2171
        %v2173 = vpop.f32.mrb[0].mxu0
        %v2174 = vpop.f32.mrb[0].mxu0
        %v2175 = vadd.f32 %v2120, %v2174
        %v2176 = vpop.f32.mrb[0].mxu0
        %2177 = vdwg.mxu0
        %v2178 = vadd.f32 %v1110, %v2172
        %v2179 = vadd.f32 %v1111, %v2175
        %v2180 = vld [vmem:[%s891] sm:$0x1]
        %v2181 = vld [vmem:[%s899] sm:$0x1]
        %v2182 = vsel %vm1136, %v2178, 0.0
        %2183 = vadd.xlane.f32.xlu0 %v2182
        %v2184 = vpop.xlane.xlu0 %2183
        %v2185 = vsel %vm1136, %v2179, 0.0
        %2186 = vadd.xlane.f32.xlu0 %v2185
        %v2187 = vpop.xlane.xlu0 %2186
        %v2188 = vrcp.pop 32.0
        %v2189 = vmul.f32 %v2184, %v2188
        %v2190 = vmul.f32 %v2187, %v2188
        %v2191 = vsub.f32 %v2178, %v2189
        %v2192 = vsub.f32 %v2179, %v2190
        %v2193 = vmul.f32 %v2191, %v2191
        %v2194 = vmul.f32 %v2192, %v2192
        %v2195 = vsel %vm1136, %v2193, 0.0
        %2196 = vadd.xlane.f32.xlu0 %v2195
        %v2197 = vpop.xlane.xlu0 %2196
        %v2198 = vsel %vm1136, %v2194, 0.0
        %2199 = vadd.xlane.f32.xlu0 %v2198
        %v2200 = vpop.xlane.xlu0 %2199
        %v2201 = vmul.f32 %v2197, %v2188
        %v2202 = vmul.f32 %v2200, %v2188
        %v2203 = vadd.f32 %v2201, 1e-05
        %v2204 = vadd.f32 %v2202, 1e-05
        %v2205 = vrsqrt.pop %v2203
        %v2206 = vrsqrt.pop %v2204
        %v2207 = vmul.f32 %v2191, %v2205
        %v2208 = vmul.f32 %v2192, %v2206
        %v2210 = vlaneseq
        %v2211 = vshrl.u32 %v2210, 7
        %v2212 = vsub.s32 0, %v2211
        %v2213 = vrot.slane %v2180, %v2212
        %v2215 = vmul.f32 %v2207, %v2213
        %v2216 = vmul.f32 %v2208, %v2213
        %v2218 = vlaneseq
        %v2219 = vshrl.u32 %v2218, 7
        %v2220 = vsub.s32 0, %v2219
        %v2221 = vrot.slane %v2181, %v2220
        %v2223 = vadd.f32 %v2215, %v2221
        %v2224 = vadd.f32 %v2216, %v2221
        %v2225 = vpack.c.bf16 %v2224, %v2223
        %v2226 = vld [vmem:[%s908] sm:$0xf]
        %v2227 = vld [vmem:[%s908 + $0x4] sm:$0xf]
        %v2228 = vld [vmem:[%s908 + $0x8] sm:$0xf]
        %v2229 = vld [vmem:[%s908 + $0xc] sm:$0xf]
        %v2230 = vld [vmem:[%s916] sm:$0x1]
        %v2232 = vlaneseq
        %v2233 = vshrl.u32 %v2232, 7
        %v2234 = vsub.s32 0, %v2233
        %v2235 = vrot.slane %v2230, %v2234
        %v2241 = vunpack.c.l.b16 %v2226
        %v2242 = vunpack.c.l.b16 %v2227
        %v2243 = vunpack.c.l.b16 %v2228
        %v2244 = vunpack.c.l.b16 %v2229
        %v2245 = vpack.c.b16 %v2242, %v2241
        %v2246 = vpack.c.b16 %v2244, %v2243
        %v2250 = vsel %vm1136, %v2225, 0
        %2252 = vmatprep.subr.bf16.mxu0 0
        %2253 = vmatpush1.bf16.msra.mxu0 %v2245
        %2254 = vmatprep.subr.bf16.mxu0 0
        %2255 = vmatpush1.bf16.msra.mxu0 %v2246
        %2256 = vmatprep.subr.bf16.mxu0 0
        %2257 = vmatpush1.bf16.msra.mxu0 0
        %2258 = vmatprep.subr.bf16.mxu0 0
        %2259 = vmatpush1.bf16.msra.mxu0 0
        %2260 = vmatprep.subr.bf16.mxu0 0
        %2261 = vmatpush1.bf16.msra.mxu0 0
        %2262 = vmatprep.subr.bf16.mxu0 0
        %2263 = vmatpush1.bf16.msra.mxu0 0
        %2264 = vmatprep.subr.bf16.mxu0 0
        %2265 = vmatpush1.bf16.msra.mxu0 0
        %2266 = vmatprep.subr.bf16.mxu0 0
        %2267 = vmatpush1.bf16.msra.mxu0 0
        %2268 = vmatprep.subr.bf16.mxu0 0
        %2269 = vmatpush1.bf16.msra.mxu0 0
        %2270 = vmatprep.subr.bf16.mxu0 0
        %2271 = vmatpush1.bf16.msra.mxu0 0
        %2272 = vmatprep.subr.bf16.mxu0 0
        %2273 = vmatpush1.bf16.msra.mxu0 0
        %2274 = vmatprep.subr.bf16.mxu0 0
        %2275 = vmatpush1.bf16.msra.mxu0 0
        %2276 = vmatprep.subr.bf16.mxu0 0
        %2277 = vmatpush1.bf16.msra.mxu0 0
        %2278 = vmatprep.subr.bf16.mxu0 0
        %2279 = vmatpush1.bf16.msra.mxu0 0
        %2280 = vmatprep.subr.bf16.mxu0 0
        %2281 = vmatpush1.bf16.msra.mxu0 0
        %2282 = vmatprep.subr.bf16.mxu0 0
        %2283 = vmatpush1.bf16.msra.mxu0 0
        %2284 = vmatprep.mubr.bf16.mxu0 0
        %2285 = vmatmul.mubr.bf16.gmra.mrb[0].mxu0 %v2250
        %v2286 = vpop.f32.mrb[0].mxu0
        %v2287 = vadd.f32 %v2235, %v2286
        %v2288 = vpop.f32.mrb[0].mxu0
        %v2289 = vpop.f32.mrb[0].mxu0
        %v2290 = vadd.f32 %v2235, %v2289
        %v2291 = vpop.f32.mrb[0].mxu0
        %2292 = vdwg.mxu0
        %v2293 = vmul.f32 %v2287, %v2287
        %v2294 = vmul.f32 %v2290, %v2290
        %v2295 = vmul.f32 %v2287, %v2293
        %v2296 = vmul.f32 %v2290, %v2294
        %v2297 = vmul.f32 %v2295, 0.044715
        %v2298 = vmul.f32 %v2296, 0.044715
        %v2299 = vadd.f32 %v2287, %v2297
        %v2300 = vadd.f32 %v2290, %v2298
        %v2301 = vmul.f32 %v2299, 0.7978846
        %v2302 = vmul.f32 %v2300, 0.7978846
        %v2303 = vtanh.pop %v2301
        %v2304 = vtanh.pop %v2302
        %v2305 = vadd.f32 %v2303, 1.0
        %v2306 = vadd.f32 %v2304, 1.0
        %v2307 = vmul.f32 %v2305, 0.5
        %v2308 = vmul.f32 %v2306, 0.5
        %v2309 = vmul.f32 %v2287, %v2307
        %v2310 = vmul.f32 %v2290, %v2308
        %v2311 = vpack.c.bf16 %v2310, %v2309
        %v2312 = vld [vmem:[%s925] sm:$0xf]
        %v2313 = vld [vmem:[%s925 + $0x4] sm:$0xf]
        %v2314 = vld [vmem:[%s925 + $0x8] sm:$0xf]
        %v2315 = vld [vmem:[%s925 + $0xc] sm:$0xf]
        %v2316 = vld [vmem:[%s925 + $0x10] sm:$0xf]
        %v2317 = vld [vmem:[%s925 + $0x14] sm:$0xf]
        %v2318 = vld [vmem:[%s925 + $0x18] sm:$0xf]
        %v2319 = vld [vmem:[%s925 + $0x1c] sm:$0xf]
        %v2320 = vld [vmem:[%s933] sm:$0x1]
        %v2322 = vlaneseq
        %v2323 = vshrl.u32 %v2322, 7
        %v2324 = vsub.s32 0, %v2323
        %v2325 = vrot.slane %v2320, %v2324
        %v2335 = vunpack.c.l.b16 %v2312
        %v2336 = vunpack.c.l.b16 %v2313
        %v2337 = vunpack.c.l.b16 %v2314
        %v2338 = vunpack.c.l.b16 %v2315
        %v2339 = vunpack.c.l.b16 %v2316
        %v2340 = vunpack.c.l.b16 %v2317
        %v2341 = vunpack.c.l.b16 %v2318
        %v2342 = vunpack.c.l.b16 %v2319
        %v2343 = vpack.c.b16 %v2336, %v2335
        %v2344 = vpack.c.b16 %v2338, %v2337
        %v2345 = vpack.c.b16 %v2340, %v2339
        %v2346 = vpack.c.b16 %v2342, %v2341
        %vm2351 = vcmask 523264
        %v2353 = vsel %vm2351, %v2311, 0
        %2355 = vmatprep.subr.bf16.mxu0 0
        %2356 = vmatpush1.bf16.msra.mxu0 %v2343
        %2357 = vmatprep.subr.bf16.mxu0 0
        %2358 = vmatpush1.bf16.msra.mxu0 %v2344
        %2359 = vmatprep.subr.bf16.mxu0 0
        %2360 = vmatpush1.bf16.msra.mxu0 %v2345
        %2361 = vmatprep.subr.bf16.mxu0 0
        %2362 = vmatpush1.bf16.msra.mxu0 %v2346
        %2363 = vmatprep.subr.bf16.mxu0 0
        %2364 = vmatpush1.bf16.msra.mxu0 0
        %2365 = vmatprep.subr.bf16.mxu0 0
        %2366 = vmatpush1.bf16.msra.mxu0 0
        %2367 = vmatprep.subr.bf16.mxu0 0
        %2368 = vmatpush1.bf16.msra.mxu0 0
        %2369 = vmatprep.subr.bf16.mxu0 0
        %2370 = vmatpush1.bf16.msra.mxu0 0
        %2371 = vmatprep.subr.bf16.mxu0 0
        %2372 = vmatpush1.bf16.msra.mxu0 0
        %2373 = vmatprep.subr.bf16.mxu0 0
        %2374 = vmatpush1.bf16.msra.mxu0 0
        %2375 = vmatprep.subr.bf16.mxu0 0
        %2376 = vmatpush1.bf16.msra.mxu0 0
        %2377 = vmatprep.subr.bf16.mxu0 0
        %2378 = vmatpush1.bf16.msra.mxu0 0
        %2379 = vmatprep.subr.bf16.mxu0 0
        %2380 = vmatpush1.bf16.msra.mxu0 0
        %2381 = vmatprep.subr.bf16.mxu0 0
        %2382 = vmatpush1.bf16.msra.mxu0 0
        %2383 = vmatprep.subr.bf16.mxu0 0
        %2384 = vmatpush1.bf16.msra.mxu0 0
        %2385 = vmatprep.subr.bf16.mxu0 0
        %2386 = vmatpush1.bf16.msra.mxu0 0
        %2387 = vmatprep.mubr.bf16.mxu0 0
        %2388 = vmatmul.mubr.bf16.gmra.mrb[0].mxu0 %v2353
        %v2389 = vpop.f32.mrb[0].mxu0
        %v2390 = vadd.f32 %v2325, %v2389
        %v2391 = vpop.f32.mrb[0].mxu0
        %v2392 = vpop.f32.mrb[0].mxu0
        %v2393 = vadd.f32 %v2325, %v2392
        %v2394 = vpop.f32.mrb[0].mxu0
        %2395 = vdwg.mxu0
        %v2396 = vadd.f32 %v2223, %v2390
        %v2397 = vadd.f32 %v2224, %v2393
        %v2398 = vld [vmem:[%s941] sm:$0x1]
        %v2399 = vld [vmem:[%s949] sm:$0x1]
        %v2400 = vsel %vm1136, %v2396, 0.0
        %2401 = vadd.xlane.f32.xlu0 %v2400
        %v2402 = vpop.xlane.xlu0 %2401
        %v2403 = vsel %vm1136, %v2397, 0.0
        %2404 = vadd.xlane.f32.xlu0 %v2403
        %v2405 = vpop.xlane.xlu0 %2404
        %v2406 = vmul.f32 %v2402, %v2188
        %v2407 = vmul.f32 %v2405, %v2188
        %v2408 = vsub.f32 %v2396, %v2406
        %v2409 = vsub.f32 %v2397, %v2407
        %v2410 = vmul.f32 %v2408, %v2408
        %v2411 = vmul.f32 %v2409, %v2409
        %v2412 = vsel %vm1136, %v2410, 0.0
        %2413 = vadd.xlane.f32.xlu0 %v2412
        %v2414 = vpop.xlane.xlu0 %2413
        %v2415 = vsel %vm1136, %v2411, 0.0
        %2416 = vadd.xlane.f32.xlu0 %v2415
        %v2417 = vpop.xlane.xlu0 %2416
        %v2418 = vmul.f32 %v2414, %v2188
        %v2419 = vmul.f32 %v2417, %v2188
        %v2420 = vadd.f32 %v2418, 1e-05
        %v2421 = vadd.f32 %v2419, 1e-05
        %v2422 = vrsqrt.pop %v2420
        %v2423 = vrsqrt.pop %v2421
        %v2424 = vmul.f32 %v2408, %v2422
        %v2425 = vmul.f32 %v2409, %v2423
        %v2427 = vlaneseq
        %v2428 = vshrl.u32 %v2427, 7
        %v2429 = vsub.s32 0, %v2428
        %v2430 = vrot.slane %v2398, %v2429
        %v2432 = vmul.f32 %v2424, %v2430
        %v2433 = vmul.f32 %v2425, %v2430
        %v2435 = vlaneseq
        %v2436 = vshrl.u32 %v2435, 7
        %v2437 = vsub.s32 0, %v2436
        %v2438 = vrot.slane %v2399, %v2437
        %v2440 = vadd.f32 %v2432, %v2438
        %v2441 = vadd.f32 %v2433, %v2438
        %2442 = vst.msk [vmem:[#allocation2] sm:$0xff] %vm1136, %v2440
        %2443 = vst.msk [vmem:[#allocation2 + $0x8] sm:$0xff] %vm1136, %v2441
        %p2444 = scmp.eq.s32.totalorder %s38, 1
        // Predicated region
        $region169: #{tpu_custom_call.1} parent=91 // pred_check
          %p2445 = pneg %p2444
        $region170: #{tpu_custom_call.1} parent=91 // pred_check_branch
          %2447 = sbr.rel (%p2445) target = $region172
        $region171: #{tpu_custom_call.1} parent=91 // pred_region
          %v2448 = vpack.c.bf16 %v2441, %v2440
          %v2449 = vld [vmem:[#allocation23] sm:$0xf]
          %v2450 = vld [vmem:[#allocation23 + $0x4] sm:$0xf]
          %v2451 = vld [vmem:[#allocation23 + $0x8] sm:$0xf]
          %v2452 = vld [vmem:[#allocation23 + $0xc] sm:$0xf]
          %v2453 = vld [vmem:[#allocation24] sm:$0x1]
          %v2455 = vlaneseq
          %v2456 = vshrl.u32 %v2455, 7
          %v2457 = vsub.s32 0, %v2456
          %v2458 = vrot.slane %v2453, %v2457
          %v2464 = vunpack.c.l.b16 %v2449
          %v2465 = vunpack.c.l.b16 %v2450
          %v2466 = vunpack.c.l.b16 %v2451
          %v2467 = vunpack.c.l.b16 %v2452
          %v2468 = vpack.c.b16 %v2465, %v2464
          %v2469 = vpack.c.b16 %v2467, %v2466
          %v2473 = vsel %vm1136, %v2448, 0
          %2475 = vmatprep.subr.bf16.mxu0 0
          %2476 = vmatpush1.bf16.msra.mxu0 %v2468
          %2477 = vmatprep.subr.bf16.mxu0 0
          %2478 = vmatpush1.bf16.msra.mxu0 %v2469
          %2479 = vmatprep.subr.bf16.mxu0 0
          %2480 = vmatpush1.bf16.msra.mxu0 0
          %2481 = vmatprep.subr.bf16.mxu0 0
          %2482 = vmatpush1.bf16.msra.mxu0 0
          %2483 = vmatprep.subr.bf16.mxu0 0
          %2484 = vmatpush1.bf16.msra.mxu0 0
          %2485 = vmatprep.subr.bf16.mxu0 0
          %2486 = vmatpush1.bf16.msra.mxu0 0
          %2487 = vmatprep.subr.bf16.mxu0 0
          %2488 = vmatpush1.bf16.msra.mxu0 0
          %2489 = vmatprep.subr.bf16.mxu0 0
          %2490 = vmatpush1.bf16.msra.mxu0 0
          %2491 = vmatprep.subr.bf16.mxu0 0
          %2492 = vmatpush1.bf16.msra.mxu0 0
          %2493 = vmatprep.subr.bf16.mxu0 0
          %2494 = vmatpush1.bf16.msra.mxu0 0
          %2495 = vmatprep.subr.bf16.mxu0 0
          %2496 = vmatpush1.bf16.msra.mxu0 0
          %2497 = vmatprep.subr.bf16.mxu0 0
          %2498 = vmatpush1.bf16.msra.mxu0 0
          %2499 = vmatprep.subr.bf16.mxu0 0
          %2500 = vmatpush1.bf16.msra.mxu0 0
          %2501 = vmatprep.subr.bf16.mxu0 0
          %2502 = vmatpush1.bf16.msra.mxu0 0
          %2503 = vmatprep.subr.bf16.mxu0 0
          %2504 = vmatpush1.bf16.msra.mxu0 0
          %2505 = vmatprep.subr.bf16.mxu0 0
          %2506 = vmatpush1.bf16.msra.mxu0 0
          %2507 = vmatprep.mubr.bf16.mxu0 0
          %2508 = vmatmul.mubr.bf16.gmra.mrb[0].mxu0 %v2473
          %v2509 = vpop.f32.mrb[0].mxu0
          %v2510 = vadd.f32 %v2458, %v2509
          %v2511 = vpop.f32.mrb[0].mxu0
          %v2512 = vpop.f32.mrb[0].mxu0
          %v2513 = vadd.f32 %v2458, %v2512
          %v2514 = vpop.f32.mrb[0].mxu0
          %2515 = vdwg.mxu0
          %2516 = vst [vmem:[#allocation25] sm:$0xff] %v2510
          %2517 = vst [vmem:[#allocation25 + $0x8] sm:$0xff] %v2513
        $region172: #{tpu_custom_call.1} parent=91 // pred_fallthru
          _
        // Predicated region
        $region173: #{tpu_custom_call.1} parent=91 // pred_check
          %p2518 = pneg %p511
        $region174: #{tpu_custom_call.1} parent=91 // pred_check_branch
          %2520 = sbr.rel (%p2518) target = $region176
        $region175: #{tpu_custom_call.1} parent=91 // pred_region
          %s2521 = smul.u32 2, %s37
          %s2523 = ssub.s32 256, 256
          %2524 = vsyncadd [#allocation5], %s2523
          %s2525 = smul.addr %s2521, 128
          %s2526 = scalar_lea.hbm %s18, %s2525
          %s2527 = sshll.u32 [#allocation25], 4
          %s2528 = int_to_ptr.vmem [resolvable:$true] %s2527
          %2533 = dma.vmem_to_hbm [thread:$0]  %s2528, 256, %s2526, [#allocation5], 128, 128, 8
        $region176: #{tpu_custom_call.1} parent=91 // pred_fallthru
          _
        // Predicated region
        $region177: #{tpu_custom_call.1} parent=91 // pred_check
          %p2534 = pneg %p511
        $region178: #{tpu_custom_call.1} parent=91 // pred_check_branch
          %2536 = sbr.rel (%p2534) target = $region180
        $region179: #{tpu_custom_call.1} parent=91 // pred_region
          %2537 = dma.done [#allocation5], 256
        $region180: #{tpu_custom_call.1} parent=91 // pred_fallthru
          _
      $region92: #{tpu_custom_call.1} parent=5 // pred_fallthru
        _
      %p2538 = scmp.le.s32.totalorder 2, %s28
      // Predicated region
      $region181: #{tpu_custom_call.1} parent=5 // pred_check
        %p2539 = pneg %p2538
      $region182: #{tpu_custom_call.1} parent=5 // pred_check_branch
        %2541 = sbr.rel (%p2539) target = $region184
      $region183: #{tpu_custom_call.1} parent=5 // pred_region
        %s2542 = ssub.s32 %s28, 2
      $region184: #{tpu_custom_call.1} parent=5 // pred_fallthru
        _
    $region6: #{tpu_custom_call.1} parent=1 // loop_footer
      %s32 = sadd.s32 1, %s28
    $region7: #{tpu_custom_call.1} parent=1 // loop_footer_branch
      %27 = sbr.rel target = $region3
    $region8: #{tpu_custom_call.1} parent=1 // loop_exit
      _
    %2543 = vsyncpa [#allocation4], 1
    %s2544 = scalar_lea.sflag [#allocation4], 1
    %2545 = vsyncpa %s2544, 1
    %2546 = vsyncpa [#allocation7], 1
    %2547 = vsyncpa [#allocation10], 1
    %2548 = vsyncpa [#allocation5], 1
    %s2549 = scalar_lea.sflag [#allocation5], 1
    %2550 = vsyncpa %s2549, 1

</llo_original>
